<compile_context>
chip_gen: v5e
topology: v5e:2x2
jax: 0.10.0
libtpu: 0.0.40
codegen_flags: <defaults>
</compile_context>

<pallas_src>
import math
import functools

import jax
import jax.numpy as jnp
from jax import lax
from jax.experimental import pallas as pl
from jax.experimental.pallas import tpu as pltpu

# ----------------------------- model config ---------------------------------
B = 2            # batch
C_IN = 4         # latent channels
F, H, W = 2, 4, 4
T = F * H * W    # tokens after patchify (patch_size = (1,1,1))  -> 32
C_OUT = C_IN     # out_channels = C // prod(patch_size)
L_CTX = 8        # context sequence length
D_CTX = 32       # context embedding dim
HIDDEN = 32      # transformer inner dim
N_HEADS = 2
HEAD_DIM = HIDDEN // N_HEADS
FF_DIM = 4 * HIDDEN
FREQ_DIM = 32    # sinusoidal timestep feature dim
N_POS_FREQ = 4   # frequencies per spatial axis for positional features
POS_DIM = 3 * 2 * N_POS_FREQ   # 24

BT = B * T       # 64 tokens total
BL = B * L_CTX   # 16 context rows total

NEG = -1e9
ATTN_SCALE = 1.0 / math.sqrt(HEAD_DIM)

assert T & (T - 1) == 0 and L_CTX & (L_CTX - 1) == 0   # shift-based batch ids
_SHIFT_T = int(math.log2(T))
_SHIFT_L = int(math.log2(L_CTX))


# ----------------------- packed parameter blob layout ------------------------
def _round8(n):
    return (n + 7) // 8 * 8


W_LANES = 6 * HIDDEN          # 192 — widest weight (AdaLN)

_W_SHAPES = (
    ("proj_pos", (C_IN + POS_DIM, HIDDEN)),     # fused proj_in + positional
    ("t1",       (FREQ_DIM, HIDDEN)),
    ("t2",       (HIDDEN, HIDDEN)),
    ("ada",      (HIDDEN, 6 * HIDDEN)),
    ("qkv1",     (HIDDEN, 3 * HIDDEN)),         # fused q/k/v (self)
    ("o1",       (HIDDEN, HIDDEN)),
    ("q2",       (HIDDEN, HIDDEN)),
    ("kv2",      (D_CTX, 2 * HIDDEN)),          # fused k/v (cross)
    ("o2",       (HIDDEN, HIDDEN)),
    ("ff1",      (HIDDEN, FF_DIM)),
    ("ff2",      (FF_DIM, HIDDEN)),
    ("proj_out", (HIDDEN, C_OUT)),
)
_W_OFF = {}
_row = 0
for _name, (_r, _c) in _W_SHAPES:
    _W_OFF[_name] = (_row, _r, _c)
    _row += _round8(_r)
W_ROWS = _row                                    # 480

_B_ORDER = (
    ("proj_pos", HIDDEN), ("t1", HIDDEN), ("t2", HIDDEN), ("ada", 6 * HIDDEN),
    ("qkv1", 3 * HIDDEN), ("o1", HIDDEN), ("q2", HIDDEN), ("kv2", 2 * HIDDEN),
    ("o2", HIDDEN), ("ff1", FF_DIM), ("ff2", HIDDEN), ("proj_out", C_OUT),
    ("sst_shift", HIDDEN), ("sst_scale", HIDDEN),
)
_B_ROW = {name: W_ROWS + i for i, (name, _) in enumerate(_B_ORDER)}
_B_COLS = dict(_B_ORDER)
PARAM_ROWS = W_ROWS + _round8(len(_B_ORDER))     # 496

# ----------------------- packed activation slab layout -----------------------
XIN_DIM = C_IN + POS_DIM      # 28 : latent(4) | positional feats(24)
A_XIN   = 0
A_NOISE = XIN_DIM             # 28 : noise(4)  | zeros(24)   (same width as XIN)
A_CMASK = 2 * XIN_DIM         # 56
A_NCOEF = A_CMASK + 1         # 57
A_TFREQ = A_NCOEF + 1         # 58
A_PADKB = A_TFREQ + FREQ_DIM  # 90 : ctx key-padding bias row (broadcast to BT)
A_WIDTH = A_PADKB + BL        # 106


# --------------------------- fused Pallas kernel ------------------------------
def _layernorm(x, eps=1e-6):
    mu = jnp.mean(x, axis=-1, keepdims=True)
    var = jnp.mean((x - mu) ** 2, axis=-1, keepdims=True)
    return (x - mu) * lax.rsqrt(var + eps)


def _fused_block_kernel(act_ref, ctx_ref, prm_ref, out_ref):
    f32 = jnp.float32

    def Wv(name):                       # weight view (static ref slice)
        r0, rows, cols = _W_OFF[name]
        return prm_ref[r0:r0 + rows, 0:cols]

    def Bv(name):                       # bias row [1, cols]
        r = _B_ROW[name]
        return prm_ref[r:r + 1, 0:_B_COLS[name]]

    # ---- unpack packed activation slab (static lane windows) -----------------
    xin   = act_ref[:, A_XIN:A_XIN + XIN_DIM]        # latent(4) | pos(24)
    nslab = act_ref[:, A_NOISE:A_NOISE + XIN_DIM]    # noise(4)  | zeros(24)
    cmask = act_ref[:, A_CMASK:A_CMASK + 1]
    ncoef = act_ref[:, A_NCOEF:A_NCOEF + 1]
    tfreq = act_ref[:, A_TFREQ:A_TFREQ + FREQ_DIM]
    padkb = act_ref[:, A_PADKB:A_PADKB + BL]
    ctx   = ctx_ref[...]

    # ---- noise mixing: (x + s*t^2*n)*m + x*(1-m) == x + m*s*t^2*n -------------
    xin = xin + cmask * ncoef * nslab                # pos columns untouched (n=0)

    # ---- fused proj_in + positional projection (one 28-wide matmul) -----------
    h = jnp.dot(xin, Wv("proj_pos"), preferred_element_type=f32) + Bv("proj_pos")

    # ---- per-token timestep embedding (SiLU MLP) ------------------------------
    temb = jnp.dot(tfreq, Wv("t1"), preferred_element_type=f32) + Bv("t1")
    temb = temb * jax.nn.sigmoid(temb)
    temb = jnp.dot(temb, Wv("t2"), preferred_element_type=f32) + Bv("t2")
    temb_act = temb * jax.nn.sigmoid(temb)

    # ---- AdaLN: ONE 192-wide matmul, six static lane chunks -------------------
    ada = jnp.dot(temb_act, Wv("ada"), preferred_element_type=f32) + Bv("ada")
    shift_msa = ada[:, 0 * HIDDEN:1 * HIDDEN]
    scale_msa = ada[:, 1 * HIDDEN:2 * HIDDEN]
    gate_msa  = ada[:, 2 * HIDDEN:3 * HIDDEN]
    shift_mlp = ada[:, 3 * HIDDEN:4 * HIDDEN]
    scale_mlp = ada[:, 4 * HIDDEN:5 * HIDDEN]
    gate_mlp  = ada[:, 5 * HIDDEN:6 * HIDDEN]

    # ---- attention biases built in-kernel (iota batch ids; VPU, idle slot) ----
    row_b = jnp.right_shift(lax.broadcasted_iota(jnp.int32, (BT, BT), 0), _SHIFT_T)
    col_b = jnp.right_shift(lax.broadcasted_iota(jnp.int32, (BT, BT), 1), _SHIFT_T)
    self_bias = jnp.where(row_b == col_b, 0.0, NEG).astype(f32)

    crow_b = jnp.right_shift(lax.broadcasted_iota(jnp.int32, (BT, BL), 0), _SHIFT_T)
    ccol_b = jnp.right_shift(lax.broadcasted_iota(jnp.int32, (BT, BL), 1), _SHIFT_L)
    cross_bias = jnp.where(crow_b == ccol_b, 0.0, NEG).astype(f32) + padkb

    # ---- per-head lane masks + multi-head attention ---------------------------
    lane = lax.broadcasted_iota(jnp.int32, (1, HIDDEN), 1)
    head_masks = [
        ((lane >= hh * HEAD_DIM) & (lane < (hh + 1) * HEAD_DIM)).astype(f32)
        for hh in range(N_HEADS)
    ]

    def mha(q, k, v, bias_mat):
        out = jnp.zeros_like(q)
        for hm in head_masks:
            s = lax.dot_general(q * hm, k, (((1,), (1,)), ((), ())),
                                preferred_element_type=f32) * ATTN_SCALE + bias_mat
            p = jnp.exp(s - jnp.max(s, axis=-1, keepdims=True))
            inv = pl.reciprocal(jnp.sum(p, axis=-1, keepdims=True), approx=True)
            out = out + jnp.dot(p, v * hm, preferred_element_type=f32) * inv
        return out

    # ---- self-attention (fused QKV: one 96-wide matmul) -----------------------
    hmod = _layernorm(h) * (1.0 + scale_msa) + shift_msa
    qkv = jnp.dot(hmod, Wv("qkv1"), preferred_element_type=f32) + Bv("qkv1")
    attn1 = mha(qkv[:, 0:HIDDEN], qkv[:, HIDDEN:2 * HIDDEN],
                qkv[:, 2 * HIDDEN:3 * HIDDEN], self_bias)
    h = h + gate_msa * (jnp.dot(attn1, Wv("o1"), preferred_element_type=f32)
                        + Bv("o1"))

    # ---- cross-attention (fused KV: one 64-wide matmul on context) ------------
    hn2 = _layernorm(h)
    q2 = jnp.dot(hn2, Wv("q2"), preferred_element_type=f32) + Bv("q2")
    kv2 = jnp.dot(ctx, Wv("kv2"), preferred_element_type=f32) + Bv("kv2")
    attn2 = mha(q2, kv2[:, 0:HIDDEN], kv2[:, HIDDEN:2 * HIDDEN], cross_bias)
    h = h + jnp.dot(attn2, Wv("o2"), preferred_element_type=f32) + Bv("o2")

    # ---- feed-forward ----------------------------------------------------------
    hmod3 = _layernorm(h) * (1.0 + scale_mlp) + shift_mlp
    ff = jnp.dot(hmod3, Wv("ff1"), preferred_element_type=f32) + Bv("ff1")
    ff = jax.nn.gelu(ff)                         # tanh-approx GELU (EUP)
    ff = jnp.dot(ff, Wv("ff2"), preferred_element_type=f32) + Bv("ff2")
    h = h + gate_mlp * ff

    # ---- final modulated norm + proj_out ---------------------------------------
    hout = (_layernorm(h) * (1.0 + (Bv("sst_scale") + temb))
            + (Bv("sst_shift") + temb))
    out = jnp.dot(hout, Wv("proj_out"), preferred_element_type=f32) + Bv("proj_out")
    out_ref[...] = out.astype(out_ref.dtype)


# ------------------------------ JAX glue --------------------------------------
def patchify(x):
    b, c, f, h, w = x.shape
    return x.transpose(0, 2, 3, 4, 1).reshape(b, f * h * w, c)


def unpatchify(tokens, f, h, w):
    b, t, c = tokens.shape
    return tokens.reshape(b, f, h, w, c).transpose(0, 4, 1, 2, 3)


def _sinusoidal_embedding(t, dim):
    half = dim // 2
    freqs = jnp.exp(-math.log(10000.0) * jnp.arange(half, dtype=jnp.float32) / half)
    args = t[:, None] * freqs[None, :]
    return jnp.concatenate([jnp.cos(args), jnp.sin(args)], axis=-1)


def _pos_features(indices_grid):
    b, _, t = indices_grid.shape
    freqs = jnp.exp(-math.log(10000.0) *
                    jnp.arange(N_POS_FREQ, dtype=jnp.float32) / N_POS_FREQ)
    args = indices_grid[..., None] * freqs
    feat = jnp.concatenate([jnp.sin(args), jnp.cos(args)], axis=-1)   # [B,3,T,2n]
    return feat.transpose(0, 2, 1, 3).reshape(b, t, POS_DIM)


# ------------ one-time (hoisted out of per-call path) preparation -------------
def pack_params(p):
    """Pack all weights+biases into a single f32 [PARAM_ROWS, 192] VMEM blob."""
    fused_w = {
        "proj_pos": jnp.concatenate([p["proj_in_w"], p["pos_w"]], axis=0),
        "t1": p["t_w1"], "t2": p["t_w2"], "ada": p["ada_w"],
        "qkv1": jnp.concatenate([p["q1_w"], p["k1_w"], p["v1_w"]], axis=1),
        "o1": p["o1_w"], "q2": p["q2_w"],
        "kv2": jnp.concatenate([p["k2_w"], p["v2_w"]], axis=1),
        "o2": p["o2_w"], "ff1": p["ff1_w"], "ff2": p["ff2_w"],
        "proj_out": p["proj_out_w"],
    }
    fused_b = {
        "proj_pos": p["proj_in_b"] + p["pos_b"],
        "t1": p["t_b1"], "t2": p["t_b2"], "ada": p["ada_b"],
        "qkv1": jnp.concatenate([p["q1_b"], p["k1_b"], p["v1_b"]]),
        "o1": p["o1_b"], "q2": p["q2_b"],
        "kv2": jnp.concatenate([p["k2_b"], p["v2_b"]]),
        "o2": p["o2_b"], "ff1": p["ff1_b"], "ff2": p["ff2_b"],
        "proj_out": p["proj_out_b"],
        "sst_shift": p["scale_shift_table"][0],
        "sst_scale": p["scale_shift_table"][1],
    }
    blob = jnp.zeros((PARAM_ROWS, W_LANES), jnp.float32)
    for name, (r0, rows, cols) in _W_OFF.items():
        assert fused_w[name].shape == (rows, cols), name
        blob = blob.at[r0:r0 + rows, 0:cols].set(fused_w[name].astype(jnp.float32))
    for name, cols in _B_ORDER:
        assert fused_b[name].shape == (cols,), name
        blob = blob.at[_B_ROW[name], 0:cols].set(fused_b[name].astype(jnp.float32))
    return blob


def precompute_static(conditioning_mask, indices_grid):
    """conditioning mask tokens + positional features are call-invariant."""
    cmask_tok = patchify(conditioning_mask)[..., 0]              # [B, T]
    pos_feat = _pos_features(indices_grid).reshape(BT, POS_DIM)  # [BT, 24]
    return cmask_tok, pos_feat


# ------------------------- LTXVTransformer3DWrapper --------------------------
def ltxv_wrapper_forward(prm_blob, cmask_tok, pos_feat, x, timesteps, context,
                         noise_key, noise_scale=0.15):
    f32 = jnp.float32
    # deterministic noise
    # TODO(synk): torch.Generator(manual_seed(42)) Philox stream not bit-reproduced.
    noise = jax.random.normal(noise_key, x.shape, dtype=x.dtype)

    # tokens: rearrange "b c f h w -> b (f h w) c"  (patch_size = (1,1,1))
    x_tok = patchify(x).reshape(BT, C_IN)
    noise_tok = patchify(noise).reshape(BT, C_IN)

    cmask_col = cmask_tok.reshape(BT, 1)
    ncoef_col = jnp.repeat(noise_scale * timesteps ** 2, T).reshape(BT, 1)
    t_masked = (timesteps[:, None] * (1.0 - cmask_tok)).reshape(BT)
    tfreq = _sinusoidal_embedding(t_masked * 1000.0, FREQ_DIM)          # [BT, 32]

    ctx2d = context.reshape(BL, D_CTX)
    ctx_mask = (context != 0).any(axis=2).astype(f32)                   # [B, L]
    padkb = jnp.broadcast_to(((1.0 - ctx_mask) * NEG).reshape(1, BL), (BT, BL))

    # single packed activation slab — one DMA for all small activations
    act = jnp.concatenate(
        [x_tok, pos_feat,                               # lanes [0, 28)
         noise_tok, jnp.zeros((BT, POS_DIM), f32),      # lanes [28, 56)
         cmask_col, ncoef_col, tfreq, padkb],           # lanes [56, 106)
        axis=-1).astype(f32)

    # TODO(synk): Transformer3DModel applies fractional RoPE from indices_grid;
    # approximated by an additive sinusoidal positional projection.
    vmem = pl.BlockSpec(memory_space=pltpu.MemorySpace.VMEM)
    out2d = pl.pallas_call(
        _fused_block_kernel,
        out_shape=jax.ShapeDtypeStruct((BT, C_OUT), x.dtype),
        in_specs=[vmem, vmem, vmem],
        out_specs=vmem,
    )(act, ctx2d, prm_blob)

    return unpatchify(out2d.reshape(B, T, C_OUT), F, H, W)


# ------------------------------ parameters ------------------------------------
def init_params(key):
    specs = [
        ("proj_in_w", (C_IN, HIDDEN)), ("proj_in_b", (HIDDEN,)),
        ("pos_w", (POS_DIM, HIDDEN)), ("pos_b", (HIDDEN,)),
        ("t_w1", (FREQ_DIM, HIDDEN)), ("t_b1", (HIDDEN,)),
        ("t_w2", (HIDDEN, HIDDEN)), ("t_b2", (HIDDEN,)),
        ("ada_w", (HIDDEN, 6 * HIDDEN)), ("ada_b", (6 * HIDDEN,)),
        ("q1_w", (HIDDEN, HIDDEN)), ("q1_b", (HIDDEN,)),
        ("k1_w", (HIDDEN, HIDDEN)), ("k1_b", (HIDDEN,)),
        ("v1_w", (HIDDEN, HIDDEN)), ("v1_b", (HIDDEN,)),
        ("o1_w", (HIDDEN, HIDDEN)), ("o1_b", (HIDDEN,)),
        ("q2_w", (HIDDEN, HIDDEN)), ("q2_b", (HIDDEN,)),
        ("k2_w", (D_CTX, HIDDEN)), ("k2_b", (HIDDEN,)),
        ("v2_w", (D_CTX, HIDDEN)), ("v2_b", (HIDDEN,)),
        ("o2_w", (HIDDEN, HIDDEN)), ("o2_b", (HIDDEN,)),
        ("ff1_w", (HIDDEN, FF_DIM)), ("ff1_b", (FF_DIM,)),
        ("ff2_w", (FF_DIM, HIDDEN)), ("ff2_b", (HIDDEN,)),
        ("scale_shift_table", (2, HIDDEN)),
        ("proj_out_w", (HIDDEN, C_OUT)), ("proj_out_b", (C_OUT,)),
    ]
    keys = jax.random.split(key, len(specs))
    params = {}
    for (name, shape), k in zip(specs, keys):
        if name.endswith("_b"):
            params[name] = jnp.zeros(shape, jnp.float32)
        else:
            params[name] = 0.02 * jax.random.normal(k, shape, dtype=jnp.float32)
    return params


# --------------------------------- main ---------------------------------------
if __name__ == "__main__":
    key = jax.random.PRNGKey(0)
    kx, kt, kc = jax.random.split(key, 3)

    x = jax.random.normal(kx, (B, C_IN, F, H, W), jnp.float32)
    timesteps = jax.random.uniform(kt, (B,), jnp.float32)
    context = jax.random.normal(kc, (B, L_CTX, D_CTX), jnp.float32)
    context = context.at[:, L_CTX - 2:, :].set(0.0)     # padded tokens -> mask 0

    # conditioning mask: first frame is conditioning
    conditioning_mask = jnp.zeros((B, 1, F, H, W), jnp.float32).at[:, :, 0].set(1.0)

    f_idx, h_idx, w_idx = jnp.meshgrid(
        jnp.arange(F, dtype=jnp.float32),
        jnp.arange(H, dtype=jnp.float32),
        jnp.arange(W, dtype=jnp.float32), indexing="ij")
    grid3 = jnp.stack([f_idx, h_idx, w_idx], axis=0).reshape(3, T)
    indices_grid = jnp.broadcast_to(grid3[None], (B, 3, T))

    params = init_params(jax.random.PRNGKey(1))
    # hoisted one-time packing (not in the per-call path)
    prm_blob = jax.block_until_ready(pack_params(params))
    cmask_tok, pos_feat = precompute_static(conditioning_mask, indices_grid)

    noise_key = jax.random.PRNGKey(42)   # mirrors torch.Generator().manual_seed(42)

    fwd = jax.jit(functools.partial(ltxv_wrapper_forward, noise_scale=0.15))
    out = fwd(prm_blob, cmask_tok, pos_feat, x, timesteps, context, noise_key)
    out = jax.block_until_ready(out)

    assert out.shape == (B, C_OUT, F, H, W), out.shape
    assert bool(jnp.all(jnp.isfinite(out)))
    print("KERNEL_OK")
</pallas_src>

<mosaic_0001>
module attributes {stable_mosaic.version = 11 : i64} {
  func.func @_fused_block_kernel(%arg0: memref<64x106xf32, #tpu.memory_space<vmem>>, %arg1: memref<16x32xf32, #tpu.memory_space<vmem>>, %arg2: memref<496x192xf32, #tpu.memory_space<vmem>>, %arg3: memref<64x4xf32, #tpu.memory_space<vmem>>) attributes {dimension_semantics = [], scalar_prefetch = 0 : i64, scratch_operands = 0 : i64, tpu.core_type = #tpu.core_type<tc>} {
    %c0 = arith.constant 0 : index
    %c0_0 = arith.constant 0 : index
    %0 = vector.load %arg0[%c0, %c0_0] : memref<64x106xf32, #tpu.memory_space<vmem>>, vector<64x28xf32>
    %c0_1 = arith.constant 0 : index
    %c28 = arith.constant 28 : index
    %1 = vector.load %arg0[%c0_1, %c28] : memref<64x106xf32, #tpu.memory_space<vmem>>, vector<64x28xf32>
    %c0_2 = arith.constant 0 : index
    %c56 = arith.constant 56 : index
    %2 = vector.load %arg0[%c0_2, %c56] : memref<64x106xf32, #tpu.memory_space<vmem>>, vector<64x1xf32>
    %c0_3 = arith.constant 0 : index
    %c57 = arith.constant 57 : index
    %3 = vector.load %arg0[%c0_3, %c57] : memref<64x106xf32, #tpu.memory_space<vmem>>, vector<64x1xf32>
    %c0_4 = arith.constant 0 : index
    %c58 = arith.constant 58 : index
    %4 = vector.load %arg0[%c0_4, %c58] : memref<64x106xf32, #tpu.memory_space<vmem>>, vector<64x32xf32>
    %c0_5 = arith.constant 0 : index
    %c90 = arith.constant 90 : index
    %5 = vector.load %arg0[%c0_5, %c90] : memref<64x106xf32, #tpu.memory_space<vmem>>, vector<64x16xf32>
    %c0_6 = arith.constant 0 : index
    %c0_7 = arith.constant 0 : index
    %6 = vector.load %arg1[%c0_6, %c0_7] : memref<16x32xf32, #tpu.memory_space<vmem>>, vector<16x32xf32>
    %7 = arith.mulf %2, %3 : vector<64x1xf32>
    %8 = vector.broadcast %7 : vector<64x1xf32> to vector<64x28xf32>
    %9 = arith.mulf %8, %1 : vector<64x28xf32>
    %10 = arith.addf %0, %9 : vector<64x28xf32>
    %c0_8 = arith.constant 0 : index
    %c0_9 = arith.constant 0 : index
    %11 = vector.load %arg2[%c0_8, %c0_9] : memref<496x192xf32, #tpu.memory_space<vmem>>, vector<28x32xf32>
    %cst = arith.constant dense<0.000000e+00> : vector<64x32xf32>
    %12 = tpu.matmul %10, %11, %cst {dimension_numbers = #tpu.dot_dimension_numbers<[1], [0], [0], [1], [0, 0, 1, 1], [], []>} : vector<64x28xf32>, vector<28x32xf32>, vector<64x32xf32> -> vector<64x32xf32>
    %c480 = arith.constant 480 : index
    %c0_10 = arith.constant 0 : index
    %13 = vector.load %arg2[%c480, %c0_10] : memref<496x192xf32, #tpu.memory_space<vmem>>, vector<1x32xf32>
    %14 = vector.broadcast %13 : vector<1x32xf32> to vector<64x32xf32>
    %15 = arith.addf %12, %14 : vector<64x32xf32>
    %c32 = arith.constant 32 : index
    %c0_11 = arith.constant 0 : index
    %16 = vector.load %arg2[%c32, %c0_11] : memref<496x192xf32, #tpu.memory_space<vmem>>, vector<32x32xf32>
    %cst_12 = arith.constant dense<0.000000e+00> : vector<64x32xf32>
    %17 = tpu.matmul %4, %16, %cst_12 {dimension_numbers = #tpu.dot_dimension_numbers<[1], [0], [0], [1], [0, 0, 1, 1], [], []>} : vector<64x32xf32>, vector<32x32xf32>, vector<64x32xf32> -> vector<64x32xf32>
    %c481 = arith.constant 481 : index
    %c0_13 = arith.constant 0 : index
    %18 = vector.load %arg2[%c481, %c0_13] : memref<496x192xf32, #tpu.memory_space<vmem>>, vector<1x32xf32>
    %19 = vector.broadcast %18 : vector<1x32xf32> to vector<64x32xf32>
    %20 = arith.addf %17, %19 : vector<64x32xf32>
    %21 = arith.negf %20 : vector<64x32xf32>
    %22 = math.exp %21 : vector<64x32xf32>
    %cst_14 = arith.constant 1.000000e+00 : f32
    %23 = vector.broadcast %cst_14 : f32 to vector<64x32xf32>
    %24 = arith.addf %23, %22 : vector<64x32xf32>
    %25 = arith.divf %23, %24 : vector<64x32xf32>
    %26 = arith.mulf %20, %25 : vector<64x32xf32>
    %c64 = arith.constant 64 : index
    %c0_15 = arith.constant 0 : index
    %27 = vector.load %arg2[%c64, %c0_15] : memref<496x192xf32, #tpu.memory_space<vmem>>, vector<32x32xf32>
    %cst_16 = arith.constant dense<0.000000e+00> : vector<64x32xf32>
    %28 = tpu.matmul %26, %27, %cst_16 {dimension_numbers = #tpu.dot_dimension_numbers<[1], [0], [0], [1], [0, 0, 1, 1], [], []>} : vector<64x32xf32>, vector<32x32xf32>, vector<64x32xf32> -> vector<64x32xf32>
    %c482 = arith.constant 482 : index
    %c0_17 = arith.constant 0 : index
    %29 = vector.load %arg2[%c482, %c0_17] : memref<496x192xf32, #tpu.memory_space<vmem>>, vector<1x32xf32>
    %30 = vector.broadcast %29 : vector<1x32xf32> to vector<64x32xf32>
    %31 = arith.addf %28, %30 : vector<64x32xf32>
    %32 = arith.negf %31 : vector<64x32xf32>
    %33 = math.exp %32 : vector<64x32xf32>
    %cst_18 = arith.constant 1.000000e+00 : f32
    %34 = vector.broadcast %cst_18 : f32 to vector<64x32xf32>
    %35 = arith.addf %34, %33 : vector<64x32xf32>
    %36 = arith.divf %34, %35 : vector<64x32xf32>
    %37 = arith.mulf %31, %36 : vector<64x32xf32>
    %c96 = arith.constant 96 : index
    %c0_19 = arith.constant 0 : index
    %38 = vector.load %arg2[%c96, %c0_19] : memref<496x192xf32, #tpu.memory_space<vmem>>, vector<32x192xf32>
    %cst_20 = arith.constant dense<0.000000e+00> : vector<64x192xf32>
    %39 = tpu.matmul %37, %38, %cst_20 {dimension_numbers = #tpu.dot_dimension_numbers<[1], [0], [0], [1], [0, 0, 1, 1], [], []>} : vector<64x32xf32>, vector<32x192xf32>, vector<64x192xf32> -> vector<64x192xf32>
    %c483 = arith.constant 483 : index
    %c0_21 = arith.constant 0 : index
    %40 = vector.load %arg2[%c483, %c0_21] : memref<496x192xf32, #tpu.memory_space<vmem>>, vector<1x192xf32>
    %41 = vector.broadcast %40 : vector<1x192xf32> to vector<64x192xf32>
    %42 = arith.addf %39, %41 : vector<64x192xf32>
    %43 = vector.extract_strided_slice %42 {offsets = [0, 0], sizes = [64, 32], strides = [1, 1]} : vector<64x192xf32> to vector<64x32xf32>
    %44 = vector.extract_strided_slice %42 {offsets = [0, 32], sizes = [64, 32], strides = [1, 1]} : vector<64x192xf32> to vector<64x32xf32>
    %45 = vector.extract_strided_slice %42 {offsets = [0, 64], sizes = [64, 32], strides = [1, 1]} : vector<64x192xf32> to vector<64x32xf32>
    %46 = vector.extract_strided_slice %42 {offsets = [0, 96], sizes = [64, 32], strides = [1, 1]} : vector<64x192xf32> to vector<64x32xf32>
    %47 = vector.extract_strided_slice %42 {offsets = [0, 128], sizes = [64, 32], strides = [1, 1]} : vector<64x192xf32> to vector<64x32xf32>
    %48 = vector.extract_strided_slice %42 {offsets = [0, 160], sizes = [64, 32], strides = [1, 1]} : vector<64x192xf32> to vector<64x32xf32>
    %49 = tpu.iota {dimensions = array<i32: 0>} : vector<64x64xi32>
    %c5_i32 = arith.constant 5 : i32
    %50 = vector.broadcast %c5_i32 : i32 to vector<64x64xi32>
    %51 = arith.shrsi %49, %50 : vector<64x64xi32>
    %52 = tpu.iota {dimensions = array<i32: 1>} : vector<64x64xi32>
    %c5_i32_22 = arith.constant 5 : i32
    %53 = vector.broadcast %c5_i32_22 : i32 to vector<64x64xi32>
    %54 = arith.shrsi %52, %53 : vector<64x64xi32>
    %55 = arith.cmpi eq, %51, %54 : vector<64x64xi32>
    %cst_23 = arith.constant 0.000000e+00 : f32
    %cst_24 = arith.constant -1.000000e+09 : f32
    %56 = vector.broadcast %cst_23 : f32 to vector<64x64xf32>
    %57 = vector.broadcast %cst_24 : f32 to vector<64x64xf32>
    %58 = arith.select %55, %56, %57 : vector<64x64xi1>, vector<64x64xf32>
    %59 = tpu.iota {dimensions = array<i32: 0>} : vector<64x16xi32>
    %c5_i32_25 = arith.constant 5 : i32
    %60 = vector.broadcast %c5_i32_25 : i32 to vector<64x16xi32>
    %61 = arith.shrsi %59, %60 : vector<64x16xi32>
    %62 = tpu.iota {dimensions = array<i32: 1>} : vector<64x16xi32>
    %c3_i32 = arith.constant 3 : i32
    %63 = vector.broadcast %c3_i32 : i32 to vector<64x16xi32>
    %64 = arith.shrsi %62, %63 : vector<64x16xi32>
    %65 = arith.cmpi eq, %61, %64 : vector<64x16xi32>
    %cst_26 = arith.constant 0.000000e+00 : f32
    %cst_27 = arith.constant -1.000000e+09 : f32
    %66 = vector.broadcast %cst_26 : f32 to vector<64x16xf32>
    %67 = vector.broadcast %cst_27 : f32 to vector<64x16xf32>
    %68 = arith.select %65, %66, %67 : vector<64x16xi1>, vector<64x16xf32>
    %69 = arith.addf %68, %5 : vector<64x16xf32>
    %70 = tpu.iota {dimensions = array<i32: 1>} : vector<1x32xi32>
    %c0_i32 = arith.constant 0 : i32
    %71 = vector.broadcast %c0_i32 : i32 to vector<1x32xi32>
    %72 = arith.cmpi sge, %70, %71 : vector<1x32xi32>
    %c16_i32 = arith.constant 16 : i32
    %73 = vector.broadcast %c16_i32 : i32 to vector<1x32xi32>
    %74 = arith.cmpi slt, %70, %73 : vector<1x32xi32>
    %75 = arith.andi %72, %74 : vector<1x32xi1>
    %76 = arith.extui %75 : vector<1x32xi1> to vector<1x32xi32>
    %77 = arith.sitofp %76 : vector<1x32xi32> to vector<1x32xf32>
    %c16_i32_28 = arith.constant 16 : i32
    %78 = vector.broadcast %c16_i32_28 : i32 to vector<1x32xi32>
    %79 = arith.cmpi sge, %70, %78 : vector<1x32xi32>
    %c32_i32 = arith.constant 32 : i32
    %80 = vector.broadcast %c32_i32 : i32 to vector<1x32xi32>
    %81 = arith.cmpi slt, %70, %80 : vector<1x32xi32>
    %82 = arith.andi %79, %81 : vector<1x32xi1>
    %83 = arith.extui %82 : vector<1x32xi1> to vector<1x32xi32>
    %84 = arith.sitofp %83 : vector<1x32xi32> to vector<1x32xf32>
    %cst_29 = arith.constant dense<0.000000e+00> : vector<64xf32>
    %85 = vector.multi_reduction <add>, %15, %cst_29 [1] : vector<64x32xf32> to vector<64xf32>
    %86 = vector.shape_cast %85 : vector<64xf32> to vector<64x1xf32>
    %cst_30 = arith.constant 3.200000e+01 : f32
    %87 = vector.broadcast %cst_30 : f32 to vector<64x1xf32>
    %88 = arith.divf %86, %87 : vector<64x1xf32>
    %89 = vector.broadcast %88 : vector<64x1xf32> to vector<64x32xf32>
    %90 = arith.subf %15, %89 : vector<64x32xf32>
    %91 = arith.mulf %90, %90 : vector<64x32xf32>
    %cst_31 = arith.constant dense<0.000000e+00> : vector<64xf32>
    %92 = vector.multi_reduction <add>, %91, %cst_31 [1] : vector<64x32xf32> to vector<64xf32>
    %93 = vector.shape_cast %92 : vector<64xf32> to vector<64x1xf32>
    %cst_32 = arith.constant 3.200000e+01 : f32
    %94 = vector.broadcast %cst_32 : f32 to vector<64x1xf32>
    %95 = arith.divf %93, %94 : vector<64x1xf32>
    %96 = vector.broadcast %88 : vector<64x1xf32> to vector<64x32xf32>
    %97 = arith.subf %15, %96 : vector<64x32xf32>
    %cst_33 = arith.constant 9.99999997E-7 : f32
    %98 = vector.broadcast %cst_33 : f32 to vector<64x1xf32>
    %99 = arith.addf %95, %98 : vector<64x1xf32>
    %100 = math.rsqrt %99 : vector<64x1xf32>
    %101 = vector.broadcast %100 : vector<64x1xf32> to vector<64x32xf32>
    %102 = arith.mulf %97, %101 : vector<64x32xf32>
    %cst_34 = arith.constant 1.000000e+00 : f32
    %103 = vector.broadcast %cst_34 : f32 to vector<64x32xf32>
    %104 = arith.addf %103, %44 : vector<64x32xf32>
    %105 = arith.mulf %102, %104 : vector<64x32xf32>
    %106 = arith.addf %105, %43 : vector<64x32xf32>
    %c128 = arith.constant 128 : index
    %c0_35 = arith.constant 0 : index
    %107 = vector.load %arg2[%c128, %c0_35] : memref<496x192xf32, #tpu.memory_space<vmem>>, vector<32x96xf32>
    %cst_36 = arith.constant dense<0.000000e+00> : vector<64x96xf32>
    %108 = tpu.matmul %106, %107, %cst_36 {dimension_numbers = #tpu.dot_dimension_numbers<[1], [0], [0], [1], [0, 0, 1, 1], [], []>} : vector<64x32xf32>, vector<32x96xf32>, vector<64x96xf32> -> vector<64x96xf32>
    %c484 = arith.constant 484 : index
    %c0_37 = arith.constant 0 : index
    %109 = vector.load %arg2[%c484, %c0_37] : memref<496x192xf32, #tpu.memory_space<vmem>>, vector<1x96xf32>
    %110 = vector.broadcast %109 : vector<1x96xf32> to vector<64x96xf32>
    %111 = arith.addf %108, %110 : vector<64x96xf32>
    %112 = vector.extract_strided_slice %111 {offsets = [0, 0], sizes = [64, 32], strides = [1, 1]} : vector<64x96xf32> to vector<64x32xf32>
    %113 = vector.extract_strided_slice %111 {offsets = [0, 32], sizes = [64, 32], strides = [1, 1]} : vector<64x96xf32> to vector<64x32xf32>
    %114 = vector.extract_strided_slice %111 {offsets = [0, 64], sizes = [64, 32], strides = [1, 1]} : vector<64x96xf32> to vector<64x32xf32>
    %cst_38 = arith.constant 0.000000e+00 : f32
    %115 = vector.broadcast %cst_38 : f32 to vector<64x32xf32>
    %116 = vector.broadcast %77 : vector<1x32xf32> to vector<64x32xf32>
    %117 = arith.mulf %112, %116 : vector<64x32xf32>
    %cst_39 = arith.constant dense<0.000000e+00> : vector<64x64xf32>
    %118 = tpu.matmul %117, %113, %cst_39 {dimension_numbers = #tpu.dot_dimension_numbers<[1], [1], [0], [0], [0, 0, 1, 0], [], []>} : vector<64x32xf32>, vector<64x32xf32>, vector<64x64xf32> -> vector<64x64xf32>
    %cst_40 = arith.constant 2.500000e-01 : f32
    %119 = vector.broadcast %cst_40 : f32 to vector<64x64xf32>
    %120 = arith.mulf %118, %119 : vector<64x64xf32>
    %121 = arith.addf %120, %58 : vector<64x64xf32>
    %cst_41 = arith.constant dense<0xFF800000> : vector<64xf32>
    %122 = vector.multi_reduction <maximumf>, %121, %cst_41 [1] : vector<64x64xf32> to vector<64xf32>
    %123 = vector.shape_cast %122 : vector<64xf32> to vector<64x1xf32>
    %124 = vector.broadcast %123 : vector<64x1xf32> to vector<64x64xf32>
    %125 = arith.subf %121, %124 : vector<64x64xf32>
    %126 = math.exp %125 : vector<64x64xf32>
    %cst_42 = arith.constant dense<0.000000e+00> : vector<64xf32>
    %127 = vector.multi_reduction <add>, %126, %cst_42 [1] : vector<64x64xf32> to vector<64xf32>
    %128 = vector.shape_cast %127 : vector<64xf32> to vector<64x1xf32>
    %129 = tpu.reciprocal %128 {approx = true} : vector<64x1xf32> -> vector<64x1xf32>
    %130 = vector.broadcast %77 : vector<1x32xf32> to vector<64x32xf32>
    %131 = arith.mulf %114, %130 : vector<64x32xf32>
    %cst_43 = arith.constant dense<0.000000e+00> : vector<64x32xf32>
    %132 = tpu.matmul %126, %131, %cst_43 {dimension_numbers = #tpu.dot_dimension_numbers<[1], [0], [0], [1], [0, 0, 1, 1], [], []>} : vector<64x64xf32>, vector<64x32xf32>, vector<64x32xf32> -> vector<64x32xf32>
    %133 = vector.broadcast %129 : vector<64x1xf32> to vector<64x32xf32>
    %134 = arith.mulf %132, %133 : vector<64x32xf32>
    %135 = arith.addf %115, %134 : vector<64x32xf32>
    %136 = vector.broadcast %84 : vector<1x32xf32> to vector<64x32xf32>
    %137 = arith.mulf %112, %136 : vector<64x32xf32>
    %cst_44 = arith.constant dense<0.000000e+00> : vector<64x64xf32>
    %138 = tpu.matmul %137, %113, %cst_44 {dimension_numbers = #tpu.dot_dimension_numbers<[1], [1], [0], [0], [0, 0, 1, 0], [], []>} : vector<64x32xf32>, vector<64x32xf32>, vector<64x64xf32> -> vector<64x64xf32>
    %cst_45 = arith.constant 2.500000e-01 : f32
    %139 = vector.broadcast %cst_45 : f32 to vector<64x64xf32>
    %140 = arith.mulf %138, %139 : vector<64x64xf32>
    %141 = arith.addf %140, %58 : vector<64x64xf32>
    %cst_46 = arith.constant dense<0xFF800000> : vector<64xf32>
    %142 = vector.multi_reduction <maximumf>, %141, %cst_46 [1] : vector<64x64xf32> to vector<64xf32>
    %143 = vector.shape_cast %142 : vector<64xf32> to vector<64x1xf32>
    %144 = vector.broadcast %143 : vector<64x1xf32> to vector<64x64xf32>
    %145 = arith.subf %141, %144 : vector<64x64xf32>
    %146 = math.exp %145 : vector<64x64xf32>
    %cst_47 = arith.constant dense<0.000000e+00> : vector<64xf32>
    %147 = vector.multi_reduction <add>, %146, %cst_47 [1] : vector<64x64xf32> to vector<64xf32>
    %148 = vector.shape_cast %147 : vector<64xf32> to vector<64x1xf32>
    %149 = tpu.reciprocal %148 {approx = true} : vector<64x1xf32> -> vector<64x1xf32>
    %150 = vector.broadcast %84 : vector<1x32xf32> to vector<64x32xf32>
    %151 = arith.mulf %114, %150 : vector<64x32xf32>
    %cst_48 = arith.constant dense<0.000000e+00> : vector<64x32xf32>
    %152 = tpu.matmul %146, %151, %cst_48 {dimension_numbers = #tpu.dot_dimension_numbers<[1], [0], [0], [1], [0, 0, 1, 1], [], []>} : vector<64x64xf32>, vector<64x32xf32>, vector<64x32xf32> -> vector<64x32xf32>
    %153 = vector.broadcast %149 : vector<64x1xf32> to vector<64x32xf32>
    %154 = arith.mulf %152, %153 : vector<64x32xf32>
    %155 = arith.addf %135, %154 : vector<64x32xf32>
    %c160 = arith.constant 160 : index
    %c0_49 = arith.constant 0 : index
    %156 = vector.load %arg2[%c160, %c0_49] : memref<496x192xf32, #tpu.memory_space<vmem>>, vector<32x32xf32>
    %cst_50 = arith.constant dense<0.000000e+00> : vector<64x32xf32>
    %157 = tpu.matmul %155, %156, %cst_50 {dimension_numbers = #tpu.dot_dimension_numbers<[1], [0], [0], [1], [0, 0, 1, 1], [], []>} : vector<64x32xf32>, vector<32x32xf32>, vector<64x32xf32> -> vector<64x32xf32>
    %c485 = arith.constant 485 : index
    %c0_51 = arith.constant 0 : index
    %158 = vector.load %arg2[%c485, %c0_51] : memref<496x192xf32, #tpu.memory_space<vmem>>, vector<1x32xf32>
    %159 = vector.broadcast %158 : vector<1x32xf32> to vector<64x32xf32>
    %160 = arith.addf %157, %159 : vector<64x32xf32>
    %161 = arith.mulf %45, %160 : vector<64x32xf32>
    %162 = arith.addf %15, %161 : vector<64x32xf32>
    %cst_52 = arith.constant dense<0.000000e+00> : vector<64xf32>
    %163 = vector.multi_reduction <add>, %162, %cst_52 [1] : vector<64x32xf32> to vector<64xf32>
    %164 = vector.shape_cast %163 : vector<64xf32> to vector<64x1xf32>
    %cst_53 = arith.constant 3.200000e+01 : f32
    %165 = vector.broadcast %cst_53 : f32 to vector<64x1xf32>
    %166 = arith.divf %164, %165 : vector<64x1xf32>
    %167 = vector.broadcast %166 : vector<64x1xf32> to vector<64x32xf32>
    %168 = arith.subf %162, %167 : vector<64x32xf32>
    %169 = arith.mulf %168, %168 : vector<64x32xf32>
    %cst_54 = arith.constant dense<0.000000e+00> : vector<64xf32>
    %170 = vector.multi_reduction <add>, %169, %cst_54 [1] : vector<64x32xf32> to vector<64xf32>
    %171 = vector.shape_cast %170 : vector<64xf32> to vector<64x1xf32>
    %cst_55 = arith.constant 3.200000e+01 : f32
    %172 = vector.broadcast %cst_55 : f32 to vector<64x1xf32>
    %173 = arith.divf %171, %172 : vector<64x1xf32>
    %174 = vector.broadcast %166 : vector<64x1xf32> to vector<64x32xf32>
    %175 = arith.subf %162, %174 : vector<64x32xf32>
    %cst_56 = arith.constant 9.99999997E-7 : f32
    %176 = vector.broadcast %cst_56 : f32 to vector<64x1xf32>
    %177 = arith.addf %173, %176 : vector<64x1xf32>
    %178 = math.rsqrt %177 : vector<64x1xf32>
    %179 = vector.broadcast %178 : vector<64x1xf32> to vector<64x32xf32>
    %180 = arith.mulf %175, %179 : vector<64x32xf32>
    %c192 = arith.constant 192 : index
    %c0_57 = arith.constant 0 : index
    %181 = vector.load %arg2[%c192, %c0_57] : memref<496x192xf32, #tpu.memory_space<vmem>>, vector<32x32xf32>
    %cst_58 = arith.constant dense<0.000000e+00> : vector<64x32xf32>
    %182 = tpu.matmul %180, %181, %cst_58 {dimension_numbers = #tpu.dot_dimension_numbers<[1], [0], [0], [1], [0, 0, 1, 1], [], []>} : vector<64x32xf32>, vector<32x32xf32>, vector<64x32xf32> -> vector<64x32xf32>
    %c486 = arith.constant 486 : index
    %c0_59 = arith.constant 0 : index
    %183 = vector.load %arg2[%c486, %c0_59] : memref<496x192xf32, #tpu.memory_space<vmem>>, vector<1x32xf32>
    %184 = vector.broadcast %183 : vector<1x32xf32> to vector<64x32xf32>
    %185 = arith.addf %182, %184 : vector<64x32xf32>
    %c224 = arith.constant 224 : index
    %c0_60 = arith.constant 0 : index
    %186 = vector.load %arg2[%c224, %c0_60] : memref<496x192xf32, #tpu.memory_space<vmem>>, vector<32x64xf32>
    %cst_61 = arith.constant dense<0.000000e+00> : vector<16x64xf32>
    %187 = tpu.matmul %6, %186, %cst_61 {dimension_numbers = #tpu.dot_dimension_numbers<[1], [0], [0], [1], [0, 0, 1, 1], [], []>} : vector<16x32xf32>, vector<32x64xf32>, vector<16x64xf32> -> vector<16x64xf32>
    %c487 = arith.constant 487 : index
    %c0_62 = arith.constant 0 : index
    %188 = vector.load %arg2[%c487, %c0_62] : memref<496x192xf32, #tpu.memory_space<vmem>>, vector<1x64xf32>
    %189 = vector.broadcast %188 : vector<1x64xf32> to vector<16x64xf32>
    %190 = arith.addf %187, %189 : vector<16x64xf32>
    %191 = vector.extract_strided_slice %190 {offsets = [0, 0], sizes = [16, 32], strides = [1, 1]} : vector<16x64xf32> to vector<16x32xf32>
    %192 = vector.extract_strided_slice %190 {offsets = [0, 32], sizes = [16, 32], strides = [1, 1]} : vector<16x64xf32> to vector<16x32xf32>
    %cst_63 = arith.constant 0.000000e+00 : f32
    %193 = vector.broadcast %cst_63 : f32 to vector<64x32xf32>
    %194 = vector.broadcast %77 : vector<1x32xf32> to vector<64x32xf32>
    %195 = arith.mulf %185, %194 : vector<64x32xf32>
    %cst_64 = arith.constant dense<0.000000e+00> : vector<64x16xf32>
    %196 = tpu.matmul %195, %191, %cst_64 {dimension_numbers = #tpu.dot_dimension_numbers<[1], [1], [0], [0], [0, 0, 1, 0], [], []>} : vector<64x32xf32>, vector<16x32xf32>, vector<64x16xf32> -> vector<64x16xf32>
    %cst_65 = arith.constant 2.500000e-01 : f32
    %197 = vector.broadcast %cst_65 : f32 to vector<64x16xf32>
    %198 = arith.mulf %196, %197 : vector<64x16xf32>
    %199 = arith.addf %198, %69 : vector<64x16xf32>
    %cst_66 = arith.constant dense<0xFF800000> : vector<64xf32>
    %200 = vector.multi_reduction <maximumf>, %199, %cst_66 [1] : vector<64x16xf32> to vector<64xf32>
    %201 = vector.shape_cast %200 : vector<64xf32> to vector<64x1xf32>
    %202 = vector.broadcast %201 : vector<64x1xf32> to vector<64x16xf32>
    %203 = arith.subf %199, %202 : vector<64x16xf32>
    %204 = math.exp %203 : vector<64x16xf32>
    %cst_67 = arith.constant dense<0.000000e+00> : vector<64xf32>
    %205 = vector.multi_reduction <add>, %204, %cst_67 [1] : vector<64x16xf32> to vector<64xf32>
    %206 = vector.shape_cast %205 : vector<64xf32> to vector<64x1xf32>
    %207 = tpu.reciprocal %206 {approx = true} : vector<64x1xf32> -> vector<64x1xf32>
    %208 = vector.broadcast %77 : vector<1x32xf32> to vector<16x32xf32>
    %209 = arith.mulf %192, %208 : vector<16x32xf32>
    %cst_68 = arith.constant dense<0.000000e+00> : vector<64x32xf32>
    %210 = tpu.matmul %204, %209, %cst_68 {dimension_numbers = #tpu.dot_dimension_numbers<[1], [0], [0], [1], [0, 0, 1, 1], [], []>} : vector<64x16xf32>, vector<16x32xf32>, vector<64x32xf32> -> vector<64x32xf32>
    %211 = vector.broadcast %207 : vector<64x1xf32> to vector<64x32xf32>
    %212 = arith.mulf %210, %211 : vector<64x32xf32>
    %213 = arith.addf %193, %212 : vector<64x32xf32>
    %214 = vector.broadcast %84 : vector<1x32xf32> to vector<64x32xf32>
    %215 = arith.mulf %185, %214 : vector<64x32xf32>
    %cst_69 = arith.constant dense<0.000000e+00> : vector<64x16xf32>
    %216 = tpu.matmul %215, %191, %cst_69 {dimension_numbers = #tpu.dot_dimension_numbers<[1], [1], [0], [0], [0, 0, 1, 0], [], []>} : vector<64x32xf32>, vector<16x32xf32>, vector<64x16xf32> -> vector<64x16xf32>
    %cst_70 = arith.constant 2.500000e-01 : f32
    %217 = vector.broadcast %cst_70 : f32 to vector<64x16xf32>
    %218 = arith.mulf %216, %217 : vector<64x16xf32>
    %219 = arith.addf %218, %69 : vector<64x16xf32>
    %cst_71 = arith.constant dense<0xFF800000> : vector<64xf32>
    %220 = vector.multi_reduction <maximumf>, %219, %cst_71 [1] : vector<64x16xf32> to vector<64xf32>
    %221 = vector.shape_cast %220 : vector<64xf32> to vector<64x1xf32>
    %222 = vector.broadcast %221 : vector<64x1xf32> to vector<64x16xf32>
    %223 = arith.subf %219, %222 : vector<64x16xf32>
    %224 = math.exp %223 : vector<64x16xf32>
    %cst_72 = arith.constant dense<0.000000e+00> : vector<64xf32>
    %225 = vector.multi_reduction <add>, %224, %cst_72 [1] : vector<64x16xf32> to vector<64xf32>
    %226 = vector.shape_cast %225 : vector<64xf32> to vector<64x1xf32>
    %227 = tpu.reciprocal %226 {approx = true} : vector<64x1xf32> -> vector<64x1xf32>
    %228 = vector.broadcast %84 : vector<1x32xf32> to vector<16x32xf32>
    %229 = arith.mulf %192, %228 : vector<16x32xf32>
    %cst_73 = arith.constant dense<0.000000e+00> : vector<64x32xf32>
    %230 = tpu.matmul %224, %229, %cst_73 {dimension_numbers = #tpu.dot_dimension_numbers<[1], [0], [0], [1], [0, 0, 1, 1], [], []>} : vector<64x16xf32>, vector<16x32xf32>, vector<64x32xf32> -> vector<64x32xf32>
    %231 = vector.broadcast %227 : vector<64x1xf32> to vector<64x32xf32>
    %232 = arith.mulf %230, %231 : vector<64x32xf32>
    %233 = arith.addf %213, %232 : vector<64x32xf32>
    %c256 = arith.constant 256 : index
    %c0_74 = arith.constant 0 : index
    %234 = vector.load %arg2[%c256, %c0_74] : memref<496x192xf32, #tpu.memory_space<vmem>>, vector<32x32xf32>
    %cst_75 = arith.constant dense<0.000000e+00> : vector<64x32xf32>
    %235 = tpu.matmul %233, %234, %cst_75 {dimension_numbers = #tpu.dot_dimension_numbers<[1], [0], [0], [1], [0, 0, 1, 1], [], []>} : vector<64x32xf32>, vector<32x32xf32>, vector<64x32xf32> -> vector<64x32xf32>
    %236 = arith.addf %162, %235 : vector<64x32xf32>
    %c488 = arith.constant 488 : index
    %c0_76 = arith.constant 0 : index
    %237 = vector.load %arg2[%c488, %c0_76] : memref<496x192xf32, #tpu.memory_space<vmem>>, vector<1x32xf32>
    %238 = vector.broadcast %237 : vector<1x32xf32> to vector<64x32xf32>
    %239 = arith.addf %236, %238 : vector<64x32xf32>
    %cst_77 = arith.constant dense<0.000000e+00> : vector<64xf32>
    %240 = vector.multi_reduction <add>, %239, %cst_77 [1] : vector<64x32xf32> to vector<64xf32>
    %241 = vector.shape_cast %240 : vector<64xf32> to vector<64x1xf32>
    %cst_78 = arith.constant 3.200000e+01 : f32
    %242 = vector.broadcast %cst_78 : f32 to vector<64x1xf32>
    %243 = arith.divf %241, %242 : vector<64x1xf32>
    %244 = vector.broadcast %243 : vector<64x1xf32> to vector<64x32xf32>
    %245 = arith.subf %239, %244 : vector<64x32xf32>
    %246 = arith.mulf %245, %245 : vector<64x32xf32>
    %cst_79 = arith.constant dense<0.000000e+00> : vector<64xf32>
    %247 = vector.multi_reduction <add>, %246, %cst_79 [1] : vector<64x32xf32> to vector<64xf32>
    %248 = vector.shape_cast %247 : vector<64xf32> to vector<64x1xf32>
    %cst_80 = arith.constant 3.200000e+01 : f32
    %249 = vector.broadcast %cst_80 : f32 to vector<64x1xf32>
    %250 = arith.divf %248, %249 : vector<64x1xf32>
    %251 = vector.broadcast %243 : vector<64x1xf32> to vector<64x32xf32>
    %252 = arith.subf %239, %251 : vector<64x32xf32>
    %cst_81 = arith.constant 9.99999997E-7 : f32
    %253 = vector.broadcast %cst_81 : f32 to vector<64x1xf32>
    %254 = arith.addf %250, %253 : vector<64x1xf32>
    %255 = math.rsqrt %254 : vector<64x1xf32>
    %256 = vector.broadcast %255 : vector<64x1xf32> to vector<64x32xf32>
    %257 = arith.mulf %252, %256 : vector<64x32xf32>
    %cst_82 = arith.constant 1.000000e+00 : f32
    %258 = vector.broadcast %cst_82 : f32 to vector<64x32xf32>
    %259 = arith.addf %258, %47 : vector<64x32xf32>
    %260 = arith.mulf %257, %259 : vector<64x32xf32>
    %261 = arith.addf %260, %46 : vector<64x32xf32>
    %c288 = arith.constant 288 : index
    %c0_83 = arith.constant 0 : index
    %262 = vector.load %arg2[%c288, %c0_83] : memref<496x192xf32, #tpu.memory_space<vmem>>, vector<32x128xf32>
    %cst_84 = arith.constant dense<0.000000e+00> : vector<64x128xf32>
    %263 = tpu.matmul %261, %262, %cst_84 {dimension_numbers = #tpu.dot_dimension_numbers<[1], [0], [0], [1], [0, 0, 1, 1], [], []>} : vector<64x32xf32>, vector<32x128xf32>, vector<64x128xf32> -> vector<64x128xf32>
    %c489 = arith.constant 489 : index
    %c0_85 = arith.constant 0 : index
    %264 = vector.load %arg2[%c489, %c0_85] : memref<496x192xf32, #tpu.memory_space<vmem>>, vector<1x128xf32>
    %265 = vector.broadcast %264 : vector<1x128xf32> to vector<64x128xf32>
    %266 = arith.addf %263, %265 : vector<64x128xf32>
    %267 = arith.mulf %266, %266 : vector<64x128xf32>
    %268 = arith.mulf %266, %267 : vector<64x128xf32>
    %cst_86 = arith.constant 4.471500e-02 : f32
    %269 = vector.broadcast %cst_86 : f32 to vector<64x128xf32>
    %270 = arith.mulf %269, %268 : vector<64x128xf32>
    %271 = arith.addf %266, %270 : vector<64x128xf32>
    %cst_87 = arith.constant 0.797884583 : f32
    %272 = vector.broadcast %cst_87 : f32 to vector<64x128xf32>
    %273 = arith.mulf %272, %271 : vector<64x128xf32>
    %274 = math.tanh %273 : vector<64x128xf32>
    %cst_88 = arith.constant 1.000000e+00 : f32
    %275 = vector.broadcast %cst_88 : f32 to vector<64x128xf32>
    %276 = arith.addf %275, %274 : vector<64x128xf32>
    %cst_89 = arith.constant 5.000000e-01 : f32
    %277 = vector.broadcast %cst_89 : f32 to vector<64x128xf32>
    %278 = arith.mulf %277, %276 : vector<64x128xf32>
    %279 = arith.mulf %266, %278 : vector<64x128xf32>
    %c320 = arith.constant 320 : index
    %c0_90 = arith.constant 0 : index
    %280 = vector.load %arg2[%c320, %c0_90] : memref<496x192xf32, #tpu.memory_space<vmem>>, vector<128x32xf32>
    %cst_91 = arith.constant dense<0.000000e+00> : vector<64x32xf32>
    %281 = tpu.matmul %279, %280, %cst_91 {dimension_numbers = #tpu.dot_dimension_numbers<[1], [0], [0], [1], [0, 0, 1, 1], [], []>} : vector<64x128xf32>, vector<128x32xf32>, vector<64x32xf32> -> vector<64x32xf32>
    %c490 = arith.constant 490 : index
    %c0_92 = arith.constant 0 : index
    %282 = vector.load %arg2[%c490, %c0_92] : memref<496x192xf32, #tpu.memory_space<vmem>>, vector<1x32xf32>
    %283 = vector.broadcast %282 : vector<1x32xf32> to vector<64x32xf32>
    %284 = arith.addf %281, %283 : vector<64x32xf32>
    %285 = arith.mulf %48, %284 : vector<64x32xf32>
    %286 = arith.addf %239, %285 : vector<64x32xf32>
    %cst_93 = arith.constant dense<0.000000e+00> : vector<64xf32>
    %287 = vector.multi_reduction <add>, %286, %cst_93 [1] : vector<64x32xf32> to vector<64xf32>
    %288 = vector.shape_cast %287 : vector<64xf32> to vector<64x1xf32>
    %cst_94 = arith.constant 3.200000e+01 : f32
    %289 = vector.broadcast %cst_94 : f32 to vector<64x1xf32>
    %290 = arith.divf %288, %289 : vector<64x1xf32>
    %291 = vector.broadcast %290 : vector<64x1xf32> to vector<64x32xf32>
    %292 = arith.subf %286, %291 : vector<64x32xf32>
    %293 = arith.mulf %292, %292 : vector<64x32xf32>
    %cst_95 = arith.constant dense<0.000000e+00> : vector<64xf32>
    %294 = vector.multi_reduction <add>, %293, %cst_95 [1] : vector<64x32xf32> to vector<64xf32>
    %295 = vector.shape_cast %294 : vector<64xf32> to vector<64x1xf32>
    %cst_96 = arith.constant 3.200000e+01 : f32
    %296 = vector.broadcast %cst_96 : f32 to vector<64x1xf32>
    %297 = arith.divf %295, %296 : vector<64x1xf32>
    %298 = vector.broadcast %290 : vector<64x1xf32> to vector<64x32xf32>
    %299 = arith.subf %286, %298 : vector<64x32xf32>
    %cst_97 = arith.constant 9.99999997E-7 : f32
    %300 = vector.broadcast %cst_97 : f32 to vector<64x1xf32>
    %301 = arith.addf %297, %300 : vector<64x1xf32>
    %302 = math.rsqrt %301 : vector<64x1xf32>
    %303 = vector.broadcast %302 : vector<64x1xf32> to vector<64x32xf32>
    %304 = arith.mulf %299, %303 : vector<64x32xf32>
    %c493 = arith.constant 493 : index
    %c0_98 = arith.constant 0 : index
    %305 = vector.load %arg2[%c493, %c0_98] : memref<496x192xf32, #tpu.memory_space<vmem>>, vector<1x32xf32>
    %306 = vector.broadcast %305 : vector<1x32xf32> to vector<64x32xf32>
    %307 = arith.addf %306, %31 : vector<64x32xf32>
    %cst_99 = arith.constant 1.000000e+00 : f32
    %308 = vector.broadcast %cst_99 : f32 to vector<64x32xf32>
    %309 = arith.addf %308, %307 : vector<64x32xf32>
    %310 = arith.mulf %304, %309 : vector<64x32xf32>
    %c492 = arith.constant 492 : index
    %c0_100 = arith.constant 0 : index
    %311 = vector.load %arg2[%c492, %c0_100] : memref<496x192xf32, #tpu.memory_space<vmem>>, vector<1x32xf32>
    %312 = vector.broadcast %311 : vector<1x32xf32> to vector<64x32xf32>
    %313 = arith.addf %312, %31 : vector<64x32xf32>
    %314 = arith.addf %310, %313 : vector<64x32xf32>
    %c448 = arith.constant 448 : index
    %c0_101 = arith.constant 0 : index
    %315 = vector.load %arg2[%c448, %c0_101] : memref<496x192xf32, #tpu.memory_space<vmem>>, vector<32x4xf32>
    %cst_102 = arith.constant dense<0.000000e+00> : vector<64x4xf32>
    %316 = tpu.matmul %314, %315, %cst_102 {dimension_numbers = #tpu.dot_dimension_numbers<[1], [0], [0], [1], [0, 0, 1, 1], [], []>} : vector<64x32xf32>, vector<32x4xf32>, vector<64x4xf32> -> vector<64x4xf32>
    %c491 = arith.constant 491 : index
    %c0_103 = arith.constant 0 : index
    %317 = vector.load %arg2[%c491, %c0_103] : memref<496x192xf32, #tpu.memory_space<vmem>>, vector<1x4xf32>
    %318 = vector.broadcast %317 : vector<1x4xf32> to vector<64x4xf32>
    %319 = arith.addf %316, %318 : vector<64x4xf32>
    %c0_104 = arith.constant 0 : index
    %c0_105 = arith.constant 0 : index
    %320 = vector.load %arg3[%c0_104, %c0_105] : memref<64x4xf32, #tpu.memory_space<vmem>>, vector<64x4xf32>
    tpu.vector_store %arg3[%c0_104, %c0_105], %319 {strides = array<i32>} : memref<64x4xf32, #tpu.memory_space<vmem>>, vector<64x4xf32>,
    return
  }
}

</mosaic_0001>

<llo_original>
// kernel: ltxv_wrapper_forward.1
$region0: #{ltxv_wrapper_forward.1}
  #allocation0 [shape = 'u32[]', space=smem, size = 0x4, offset = 0x4, fixed_abs, tag = 'smem constant byte address 0x4 - core index']
  #allocation1 [shape = 'u32[72,128]{1,0:T(1,128)}', space=vmem, size = 0x9000, scoped, tag = 'internal scratch']
  %s0 = inlined_call_operand.vmem [shape: f32[64,106], index: 0, kind: input, shape index: {}]
  %s1 = inlined_call_operand.vmem [shape: f32[16,32], index: 1, kind: input, shape index: {}]
  %s2 = inlined_call_operand.vmem [shape: f32[496,192], index: 2, kind: input, shape index: {}]
  %s3 = inlined_call_operand.vmem [shape: f32[64,4], index: 3, kind: output, shape index: {}]
  %s4 = sld [smem:[#allocation0]]
  $region22: #{ltxv_wrapper_forward.1} parent=0
    _
  %s6 = ssub.s32 1, %s4
  %s7 = scalar_select 0, %s6, %s4
  // Predicated region
  $region2: #{ltxv_wrapper_forward.1} parent=0 // pred_check
    _
  $region3: #{ltxv_wrapper_forward.1} parent=0 // pred_check_branch
    %9 = sbr.rel (0) target = $region5
  $region4: #{ltxv_wrapper_forward.1} parent=0 // pred_region
    _
  $region5: #{ltxv_wrapper_forward.1} parent=0 // pred_fallthru
    _
  // Predicated region
  $region6: #{ltxv_wrapper_forward.1} parent=0 // pred_check
    _
  $region7: #{ltxv_wrapper_forward.1} parent=0 // pred_check_branch
    %11 = sbr.rel (0) target = $region9
  $region8: #{ltxv_wrapper_forward.1} parent=0 // pred_region
    _
  $region9: #{ltxv_wrapper_forward.1} parent=0 // pred_fallthru
    _
  // Predicated region
  $region10: #{ltxv_wrapper_forward.1} parent=0 // pred_check
    _
  $region11: #{ltxv_wrapper_forward.1} parent=0 // pred_check_branch
    %13 = sbr.rel (0) target = $region13
  $region12: #{ltxv_wrapper_forward.1} parent=0 // pred_region
    _
  $region13: #{ltxv_wrapper_forward.1} parent=0 // pred_fallthru
    _
  %v14 = vld [vmem:[%s0] sm:$0xff]
  %v15 = vld [vmem:[%s0 + $0x8] sm:$0xff]
  %v16 = vld [vmem:[%s0 + $0x10] sm:$0xff]
  %v17 = vld [vmem:[%s0 + $0x18] sm:$0xff]
  %v18 = vld [vmem:[%s0 + $0x20] sm:$0xff]
  %v19 = vld [vmem:[%s0 + $0x28] sm:$0xff]
  %v20 = vld [vmem:[%s0 + $0x30] sm:$0xff]
  %v21 = vld [vmem:[%s0 + $0x38] sm:$0xff]
  %v22 = vld [vmem:[%s1] sm:$0xff]
  %v23 = vld [vmem:[%s1 + $0x8] sm:$0xff]
  %32 = vrot.lane.b32.xlu0 %v14, 127
  %v33 = vpop.permute.xlu0 %32
  %34 = vrot.lane.b32.xlu0 %v15, 127
  %v35 = vpop.permute.xlu0 %34
  %36 = vrot.lane.b32.xlu0 %v16, 127
  %v37 = vpop.permute.xlu0 %36
  %38 = vrot.lane.b32.xlu0 %v17, 127
  %v39 = vpop.permute.xlu0 %38
  %40 = vrot.lane.b32.xlu0 %v18, 127
  %v41 = vpop.permute.xlu0 %40
  %42 = vrot.lane.b32.xlu0 %v19, 127
  %v43 = vpop.permute.xlu0 %42
  %44 = vrot.lane.b32.xlu0 %v20, 127
  %v45 = vpop.permute.xlu0 %44
  %46 = vrot.lane.b32.xlu0 %v21, 127
  %v47 = vpop.permute.xlu0 %46
  %v56 = vmul.f32 %v14, %v33
  %v57 = vmul.f32 %v15, %v35
  %v58 = vmul.f32 %v16, %v37
  %v59 = vmul.f32 %v17, %v39
  %v60 = vmul.f32 %v18, %v41
  %v61 = vmul.f32 %v19, %v43
  %v62 = vmul.f32 %v20, %v45
  %v63 = vmul.f32 %v21, %v47
  %65 = vset.pattern.permute.xlu0 56
  %66 = vperm.xlu0 %65, %v56
  %v67 = vpop.permute.xlu0 %66
  %70 = vset.pattern.permute.xlu0 56
  %71 = vperm.xlu0 %70, %v57
  %v72 = vpop.permute.xlu0 %71
  %75 = vset.pattern.permute.xlu0 56
  %76 = vperm.xlu0 %75, %v58
  %v77 = vpop.permute.xlu0 %76
  %80 = vset.pattern.permute.xlu0 56
  %81 = vperm.xlu0 %80, %v59
  %v82 = vpop.permute.xlu0 %81
  %85 = vset.pattern.permute.xlu0 56
  %86 = vperm.xlu0 %85, %v60
  %v87 = vpop.permute.xlu0 %86
  %90 = vset.pattern.permute.xlu0 56
  %91 = vperm.xlu0 %90, %v61
  %v92 = vpop.permute.xlu0 %91
  %95 = vset.pattern.permute.xlu0 56
  %96 = vperm.xlu0 %95, %v62
  %v97 = vpop.permute.xlu0 %96
  %100 = vset.pattern.permute.xlu0 56
  %101 = vperm.xlu0 %100, %v63
  %v102 = vpop.permute.xlu0 %101
  %v104 = vmul.f32 %v67, %v14
  %v105 = vmul.f32 %v72, %v15
  %v106 = vmul.f32 %v77, %v16
  %v107 = vmul.f32 %v82, %v17
  %v108 = vmul.f32 %v87, %v18
  %v109 = vmul.f32 %v92, %v19
  %v110 = vmul.f32 %v97, %v20
  %v111 = vmul.f32 %v102, %v21
  %120 = vrot.lane.b32.xlu0 %v104, 100
  %v121 = vpop.permute.xlu0 %120
  %122 = vrot.lane.b32.xlu0 %v105, 100
  %v123 = vpop.permute.xlu0 %122
  %124 = vrot.lane.b32.xlu0 %v106, 100
  %v125 = vpop.permute.xlu0 %124
  %126 = vrot.lane.b32.xlu0 %v107, 100
  %v127 = vpop.permute.xlu0 %126
  %128 = vrot.lane.b32.xlu0 %v108, 100
  %v129 = vpop.permute.xlu0 %128
  %130 = vrot.lane.b32.xlu0 %v109, 100
  %v131 = vpop.permute.xlu0 %130
  %132 = vrot.lane.b32.xlu0 %v110, 100
  %v133 = vpop.permute.xlu0 %132
  %134 = vrot.lane.b32.xlu0 %v111, 100
  %v135 = vpop.permute.xlu0 %134
  %v144 = vadd.f32 %v14, %v121
  %v145 = vadd.f32 %v15, %v123
  %v146 = vadd.f32 %v16, %v125
  %v147 = vadd.f32 %v17, %v127
  %v148 = vadd.f32 %v18, %v129
  %v149 = vadd.f32 %v19, %v131
  %v150 = vadd.f32 %v20, %v133
  %v151 = vadd.f32 %v21, %v135
  %v152 = vld [vmem:[%s2] sm:$0xff]
  %v153 = vld [vmem:[%s2 + $0x10] sm:$0xff]
  %v154 = vld [vmem:[%s2 + $0x20] sm:$0xff]
  %v155 = vld [vmem:[%s2 + $0x30] sm:$0xf]
  %v156 = vld [vmem:[%s2 + $0x3c0] ss:$0 sm:$0xff]
  %vm157 = vcmask 228352
  %v159 = vsel %vm157, %v144, 0
  %v162 = vsel %vm157, %v145, 0
  %v165 = vsel %vm157, %v146, 0
  %v168 = vsel %vm157, %v147, 0
  %v171 = vsel %vm157, %v148, 0
  %v174 = vsel %vm157, %v149, 0
  %v177 = vsel %vm157, %v150, 0
  %v180 = vsel %vm157, %v151, 0
  %vm182 = vcmask 1043456
  %v184 = vsel %vm182, %v155, 0
  %186 = vmatpush.msra.mxu0 0.0
  %187 = vmatpush.msra.mxu0 0.0
  %188 = vmatpush.msra.mxu0 0.0
  %189 = vmatpush.msra.mxu0 0.0
  %190 = vmatpush.msra.mxu0 0.0
  %191 = vmatpush.msra.mxu0 0.0
  %192 = vmatpush.msra.mxu0 0.0
  %193 = vmatpush.msra.mxu0 0.0
  %194 = vmatpush.msra.mxu0 0.0
  %195 = vmatpush.msra.mxu0 0.0
  %196 = vmatpush.msra.mxu0 0.0
  %197 = vmatpush.msra.mxu0 0.0
  %198 = vmatpush.msra.mxu0 %v184
  %199 = vmatpush.msra.mxu0 %v154
  %200 = vmatpush.msra.mxu0 %v153
  %201 = vmatpush.msra.mxu0 %v152
  %202 = vmatmul.f32.gmra.mxu0 %v159
  %v203 = vpop.f32.mrf.mxu0
  %v204 = vadd.f32 %v156, %v203
  %205 = vmatmul.f32.gmra.mxu0 %v162
  %v206 = vpop.f32.mrf.mxu0
  %v207 = vadd.f32 %v156, %v206
  %208 = vmatmul.f32.gmra.mxu0 %v165
  %v209 = vpop.f32.mrf.mxu0
  %v210 = vadd.f32 %v156, %v209
  %211 = vmatmul.f32.gmra.mxu0 %v168
  %v212 = vpop.f32.mrf.mxu0
  %v213 = vadd.f32 %v156, %v212
  %214 = vmatmul.f32.gmra.mxu0 %v171
  %v215 = vpop.f32.mrf.mxu0
  %v216 = vadd.f32 %v156, %v215
  %217 = vmatmul.f32.gmra.mxu0 %v174
  %v218 = vpop.f32.mrf.mxu0
  %v219 = vadd.f32 %v156, %v218
  %220 = vmatmul.f32.gmra.mxu0 %v177
  %v221 = vpop.f32.mrf.mxu0
  %v222 = vadd.f32 %v156, %v221
  %223 = vmatmul.f32.gmra.mxu0 %v180
  %v224 = vpop.f32.mrf.mxu0
  %v225 = vadd.f32 %v156, %v224
  %226 = vdwg.mxu0
  %v227 = vld [vmem:[%s2 + $0x40] sm:$0xff]
  %v228 = vld [vmem:[%s2 + $0x50] sm:$0xff]
  %v229 = vld [vmem:[%s2 + $0x60] sm:$0xff]
  %v230 = vld [vmem:[%s2 + $0x70] sm:$0xff]
  %v231 = vld [vmem:[%s2 + $0x3c1] ss:$0 sm:$0xff]
  %232 = vrot.lane.b32.xlu0 %v14, 70
  %v233 = vpop.permute.xlu0 %232
  %234 = vrot.lane.b32.xlu0 %v15, 70
  %v235 = vpop.permute.xlu0 %234
  %236 = vrot.lane.b32.xlu0 %v16, 70
  %v237 = vpop.permute.xlu0 %236
  %238 = vrot.lane.b32.xlu0 %v17, 70
  %v239 = vpop.permute.xlu0 %238
  %240 = vrot.lane.b32.xlu0 %v18, 70
  %v241 = vpop.permute.xlu0 %240
  %242 = vrot.lane.b32.xlu0 %v19, 70
  %v243 = vpop.permute.xlu0 %242
  %244 = vrot.lane.b32.xlu0 %v20, 70
  %v245 = vpop.permute.xlu0 %244
  %246 = vrot.lane.b32.xlu0 %v21, 70
  %v247 = vpop.permute.xlu0 %246
  %vm248 = vcmask 261120
  %v249 = vsel %vm248, %v233, 0
  %v251 = vsel %vm248, %v235, 0
  %v253 = vsel %vm248, %v237, 0
  %v255 = vsel %vm248, %v239, 0
  %v257 = vsel %vm248, %v241, 0
  %v259 = vsel %vm248, %v243, 0
  %v261 = vsel %vm248, %v245, 0
  %v263 = vsel %vm248, %v247, 0
  %265 = vmatpush.msra.mxu0 0.0
  %266 = vmatpush.msra.mxu0 0.0
  %267 = vmatpush.msra.mxu0 0.0
  %268 = vmatpush.msra.mxu0 0.0
  %269 = vmatpush.msra.mxu0 0.0
  %270 = vmatpush.msra.mxu0 0.0
  %271 = vmatpush.msra.mxu0 0.0
  %272 = vmatpush.msra.mxu0 0.0
  %273 = vmatpush.msra.mxu0 0.0
  %274 = vmatpush.msra.mxu0 0.0
  %275 = vmatpush.msra.mxu0 0.0
  %276 = vmatpush.msra.mxu0 0.0
  %277 = vmatpush.msra.mxu0 %v230
  %278 = vmatpush.msra.mxu0 %v229
  %279 = vmatpush.msra.mxu0 %v228
  %280 = vmatpush.msra.mxu0 %v227
  %281 = vmatmul.f32.gmra.mxu0 %v249
  %v282 = vpop.f32.mrf.mxu0
  %v283 = vadd.f32 %v231, %v282
  %284 = vmatmul.f32.gmra.mxu0 %v251
  %v285 = vpop.f32.mrf.mxu0
  %v286 = vadd.f32 %v231, %v285
  %287 = vmatmul.f32.gmra.mxu0 %v253
  %v288 = vpop.f32.mrf.mxu0
  %v289 = vadd.f32 %v231, %v288
  %290 = vmatmul.f32.gmra.mxu0 %v255
  %v291 = vpop.f32.mrf.mxu0
  %v292 = vadd.f32 %v231, %v291
  %293 = vmatmul.f32.gmra.mxu0 %v257
  %v294 = vpop.f32.mrf.mxu0
  %v295 = vadd.f32 %v231, %v294
  %296 = vmatmul.f32.gmra.mxu0 %v259
  %v297 = vpop.f32.mrf.mxu0
  %v298 = vadd.f32 %v231, %v297
  %299 = vmatmul.f32.gmra.mxu0 %v261
  %v300 = vpop.f32.mrf.mxu0
  %v301 = vadd.f32 %v231, %v300
  %302 = vmatmul.f32.gmra.mxu0 %v263
  %v303 = vpop.f32.mrf.mxu0
  %v304 = vadd.f32 %v231, %v303
  %305 = vdwg.mxu0
  %v306 = vxor.u32 %v283, 2147483648
  %v307 = vxor.u32 %v286, 2147483648
  %v308 = vxor.u32 %v289, 2147483648
  %v309 = vxor.u32 %v292, 2147483648
  %v310 = vxor.u32 %v295, 2147483648
  %v311 = vxor.u32 %v298, 2147483648
  %v312 = vxor.u32 %v301, 2147483648
  %v313 = vxor.u32 %v304, 2147483648
  %v314 = vmul.f32 %v306, 1.442695
  %v315 = vpow.pop %v314
  %v316 = vmul.f32 %v307, 1.442695
  %v317 = vpow.pop %v316
  %v318 = vmul.f32 %v308, 1.442695
  %v319 = vpow.pop %v318
  %v320 = vmul.f32 %v309, 1.442695
  %v321 = vpow.pop %v320
  %v322 = vmul.f32 %v310, 1.442695
  %v323 = vpow.pop %v322
  %v324 = vmul.f32 %v311, 1.442695
  %v325 = vpow.pop %v324
  %v326 = vmul.f32 %v312, 1.442695
  %v327 = vpow.pop %v326
  %v328 = vmul.f32 %v313, 1.442695
  %v329 = vpow.pop %v328
  %v330 = vadd.f32 %v315, 1.0
  %v331 = vadd.f32 %v317, 1.0
  %v332 = vadd.f32 %v319, 1.0
  %v333 = vadd.f32 %v321, 1.0
  %v334 = vadd.f32 %v323, 1.0
  %v335 = vadd.f32 %v325, 1.0
  %v336 = vadd.f32 %v327, 1.0
  %v337 = vadd.f32 %v329, 1.0
  %v338 = vrcp.pop %v330
  %v339 = vmul.f32 %v330, %v338
  %v340 = vsub.f32 1.0, %v339
  %v341 = vmul.f32 %v338, %v340
  %v342 = vadd.f32 %v338, %v341
  %vm343 = vweird.f32 %v330
  %vm344 = vweird.f32 %v338
  %vm345 = vmor %vm343, %vm344
  %v346 = vsel %vm345, %v338, %v342
  %v347 = vand.u32 2147483647, %v330
  %vm348 = vcmp.eq.f32.partialorder %v347, 8.507059e+37
  %v349 = vand.u32 %v330, 2147483648
  %v350 = vor.u32 1.1754944e-38, %v349
  %v351 = vsel %vm348, %v350, %v346
  %v352 = vmul.f32 1.0, %v351
  %v353 = vrcp.pop %v331
  %v354 = vmul.f32 %v331, %v353
  %v355 = vsub.f32 1.0, %v354
  %v356 = vmul.f32 %v353, %v355
  %v357 = vadd.f32 %v353, %v356
  %vm358 = vweird.f32 %v331
  %vm359 = vweird.f32 %v353
  %vm360 = vmor %vm358, %vm359
  %v361 = vsel %vm360, %v353, %v357
  %v362 = vand.u32 2147483647, %v331
  %vm363 = vcmp.eq.f32.partialorder %v362, 8.507059e+37
  %v364 = vand.u32 %v331, 2147483648
  %v365 = vor.u32 1.1754944e-38, %v364
  %v366 = vsel %vm363, %v365, %v361
  %v367 = vmul.f32 1.0, %v366
  %v368 = vrcp.pop %v332
  %v369 = vmul.f32 %v332, %v368
  %v370 = vsub.f32 1.0, %v369
  %v371 = vmul.f32 %v368, %v370
  %v372 = vadd.f32 %v368, %v371
  %vm373 = vweird.f32 %v332
  %vm374 = vweird.f32 %v368
  %vm375 = vmor %vm373, %vm374
  %v376 = vsel %vm375, %v368, %v372
  %v377 = vand.u32 2147483647, %v332
  %vm378 = vcmp.eq.f32.partialorder %v377, 8.507059e+37
  %v379 = vand.u32 %v332, 2147483648
  %v380 = vor.u32 1.1754944e-38, %v379
  %v381 = vsel %vm378, %v380, %v376
  %v382 = vmul.f32 1.0, %v381
  %v383 = vrcp.pop %v333
  %v384 = vmul.f32 %v333, %v383
  %v385 = vsub.f32 1.0, %v384
  %v386 = vmul.f32 %v383, %v385
  %v387 = vadd.f32 %v383, %v386
  %vm388 = vweird.f32 %v333
  %vm389 = vweird.f32 %v383
  %vm390 = vmor %vm388, %vm389
  %v391 = vsel %vm390, %v383, %v387
  %v392 = vand.u32 2147483647, %v333
  %vm393 = vcmp.eq.f32.partialorder %v392, 8.507059e+37
  %v394 = vand.u32 %v333, 2147483648
  %v395 = vor.u32 1.1754944e-38, %v394
  %v396 = vsel %vm393, %v395, %v391
  %v397 = vmul.f32 1.0, %v396
  %v398 = vrcp.pop %v334
  %v399 = vmul.f32 %v334, %v398
  %v400 = vsub.f32 1.0, %v399
  %v401 = vmul.f32 %v398, %v400
  %v402 = vadd.f32 %v398, %v401
  %vm403 = vweird.f32 %v334
  %vm404 = vweird.f32 %v398
  %vm405 = vmor %vm403, %vm404
  %v406 = vsel %vm405, %v398, %v402
  %v407 = vand.u32 2147483647, %v334
  %vm408 = vcmp.eq.f32.partialorder %v407, 8.507059e+37
  %v409 = vand.u32 %v334, 2147483648
  %v410 = vor.u32 1.1754944e-38, %v409
  %v411 = vsel %vm408, %v410, %v406
  %v412 = vmul.f32 1.0, %v411
  %v413 = vrcp.pop %v335
  %v414 = vmul.f32 %v335, %v413
  %v415 = vsub.f32 1.0, %v414
  %v416 = vmul.f32 %v413, %v415
  %v417 = vadd.f32 %v413, %v416
  %vm418 = vweird.f32 %v335
  %vm419 = vweird.f32 %v413
  %vm420 = vmor %vm418, %vm419
  %v421 = vsel %vm420, %v413, %v417
  %v422 = vand.u32 2147483647, %v335
  %vm423 = vcmp.eq.f32.partialorder %v422, 8.507059e+37
  %v424 = vand.u32 %v335, 2147483648
  %v425 = vor.u32 1.1754944e-38, %v424
  %v426 = vsel %vm423, %v425, %v421
  %v427 = vmul.f32 1.0, %v426
  %v428 = vrcp.pop %v336
  %v429 = vmul.f32 %v336, %v428
  %v430 = vsub.f32 1.0, %v429
  %v431 = vmul.f32 %v428, %v430
  %v432 = vadd.f32 %v428, %v431
  %vm433 = vweird.f32 %v336
  %vm434 = vweird.f32 %v428
  %vm435 = vmor %vm433, %vm434
  %v436 = vsel %vm435, %v428, %v432
  %v437 = vand.u32 2147483647, %v336
  %vm438 = vcmp.eq.f32.partialorder %v437, 8.507059e+37
  %v439 = vand.u32 %v336, 2147483648
  %v440 = vor.u32 1.1754944e-38, %v439
  %v441 = vsel %vm438, %v440, %v436
  %v442 = vmul.f32 1.0, %v441
  %v443 = vrcp.pop %v337
  %v444 = vmul.f32 %v337, %v443
  %v445 = vsub.f32 1.0, %v444
  %v446 = vmul.f32 %v443, %v445
  %v447 = vadd.f32 %v443, %v446
  %vm448 = vweird.f32 %v337
  %vm449 = vweird.f32 %v443
  %vm450 = vmor %vm448, %vm449
  %v451 = vsel %vm450, %v443, %v447
  %v452 = vand.u32 2147483647, %v337
  %vm453 = vcmp.eq.f32.partialorder %v452, 8.507059e+37
  %v454 = vand.u32 %v337, 2147483648
  %v455 = vor.u32 1.1754944e-38, %v454
  %v456 = vsel %vm453, %v455, %v451
  %v457 = vmul.f32 1.0, %v456
  %v458 = vmul.f32 %v283, %v352
  %v459 = vmul.f32 %v286, %v367
  %v460 = vmul.f32 %v289, %v382
  %v461 = vmul.f32 %v292, %v397
  %v462 = vmul.f32 %v295, %v412
  %v463 = vmul.f32 %v298, %v427
  %v464 = vmul.f32 %v301, %v442
  %v465 = vmul.f32 %v304, %v457
  %v466 = vld [vmem:[%s2 + $0x80] sm:$0xff]
  %v467 = vld [vmem:[%s2 + $0x90] sm:$0xff]
  %v468 = vld [vmem:[%s2 + $0xa0] sm:$0xff]
  %v469 = vld [vmem:[%s2 + $0xb0] sm:$0xff]
  %v470 = vld [vmem:[%s2 + $0x3c2] ss:$0 sm:$0xff]
  %v472 = vsel %vm248, %v458, 0
  %v475 = vsel %vm248, %v459, 0
  %v478 = vsel %vm248, %v460, 0
  %v481 = vsel %vm248, %v461, 0
  %v484 = vsel %vm248, %v462, 0
  %v487 = vsel %vm248, %v463, 0
  %v490 = vsel %vm248, %v464, 0
  %v493 = vsel %vm248, %v465, 0
  %495 = vmatpush.msra.mxu0 0.0
  %496 = vmatpush.msra.mxu0 0.0
  %497 = vmatpush.msra.mxu0 0.0
  %498 = vmatpush.msra.mxu0 0.0
  %499 = vmatpush.msra.mxu0 0.0
  %500 = vmatpush.msra.mxu0 0.0
  %501 = vmatpush.msra.mxu0 0.0
  %502 = vmatpush.msra.mxu0 0.0
  %503 = vmatpush.msra.mxu0 0.0
  %504 = vmatpush.msra.mxu0 0.0
  %505 = vmatpush.msra.mxu0 0.0
  %506 = vmatpush.msra.mxu0 0.0
  %507 = vmatpush.msra.mxu0 %v469
  %508 = vmatpush.msra.mxu0 %v468
  %509 = vmatpush.msra.mxu0 %v467
  %510 = vmatpush.msra.mxu0 %v466
  %511 = vmatmul.f32.gmra.mxu0 %v472
  %v512 = vpop.f32.mrf.mxu0
  %v513 = vadd.f32 %v470, %v512
  %514 = vmatmul.f32.gmra.mxu0 %v475
  %v515 = vpop.f32.mrf.mxu0
  %v516 = vadd.f32 %v470, %v515
  %517 = vmatmul.f32.gmra.mxu0 %v478
  %v518 = vpop.f32.mrf.mxu0
  %v519 = vadd.f32 %v470, %v518
  %520 = vmatmul.f32.gmra.mxu0 %v481
  %v521 = vpop.f32.mrf.mxu0
  %v522 = vadd.f32 %v470, %v521
  %523 = vmatmul.f32.gmra.mxu0 %v484
  %v524 = vpop.f32.mrf.mxu0
  %v525 = vadd.f32 %v470, %v524
  %526 = vmatmul.f32.gmra.mxu0 %v487
  %v527 = vpop.f32.mrf.mxu0
  %v528 = vadd.f32 %v470, %v527
  %529 = vmatmul.f32.gmra.mxu0 %v490
  %v530 = vpop.f32.mrf.mxu0
  %v531 = vadd.f32 %v470, %v530
  %532 = vmatmul.f32.gmra.mxu0 %v493
  %v533 = vpop.f32.mrf.mxu0
  %v534 = vadd.f32 %v470, %v533
  %535 = vdwg.mxu0
  %v536 = vxor.u32 %v513, 2147483648
  %v537 = vxor.u32 %v516, 2147483648
  %v538 = vxor.u32 %v519, 2147483648
  %v539 = vxor.u32 %v522, 2147483648
  %v540 = vxor.u32 %v525, 2147483648
  %v541 = vxor.u32 %v528, 2147483648
  %v542 = vxor.u32 %v531, 2147483648
  %v543 = vxor.u32 %v534, 2147483648
  %v544 = vmul.f32 %v536, 1.442695
  %v545 = vpow.pop %v544
  %v546 = vmul.f32 %v537, 1.442695
  %v547 = vpow.pop %v546
  %v548 = vmul.f32 %v538, 1.442695
  %v549 = vpow.pop %v548
  %v550 = vmul.f32 %v539, 1.442695
  %v551 = vpow.pop %v550
  %v552 = vmul.f32 %v540, 1.442695
  %v553 = vpow.pop %v552
  %v554 = vmul.f32 %v541, 1.442695
  %v555 = vpow.pop %v554
  %v556 = vmul.f32 %v542, 1.442695
  %v557 = vpow.pop %v556
  %v558 = vmul.f32 %v543, 1.442695
  %v559 = vpow.pop %v558
  %v560 = vadd.f32 %v545, 1.0
  %v561 = vadd.f32 %v547, 1.0
  %v562 = vadd.f32 %v549, 1.0
  %v563 = vadd.f32 %v551, 1.0
  %v564 = vadd.f32 %v553, 1.0
  %v565 = vadd.f32 %v555, 1.0
  %v566 = vadd.f32 %v557, 1.0
  %v567 = vadd.f32 %v559, 1.0
  %v568 = vrcp.pop %v560
  %v569 = vmul.f32 %v560, %v568
  %v570 = vsub.f32 1.0, %v569
  %v571 = vmul.f32 %v568, %v570
  %v572 = vadd.f32 %v568, %v571
  %vm573 = vweird.f32 %v560
  %vm574 = vweird.f32 %v568
  %vm575 = vmor %vm573, %vm574
  %v576 = vsel %vm575, %v568, %v572
  %v577 = vand.u32 2147483647, %v560
  %vm578 = vcmp.eq.f32.partialorder %v577, 8.507059e+37
  %v579 = vand.u32 %v560, 2147483648
  %v580 = vor.u32 1.1754944e-38, %v579
  %v581 = vsel %vm578, %v580, %v576
  %v582 = vmul.f32 1.0, %v581
  %v583 = vrcp.pop %v561
  %v584 = vmul.f32 %v561, %v583
  %v585 = vsub.f32 1.0, %v584
  %v586 = vmul.f32 %v583, %v585
  %v587 = vadd.f32 %v583, %v586
  %vm588 = vweird.f32 %v561
  %vm589 = vweird.f32 %v583
  %vm590 = vmor %vm588, %vm589
  %v591 = vsel %vm590, %v583, %v587
  %v592 = vand.u32 2147483647, %v561
  %vm593 = vcmp.eq.f32.partialorder %v592, 8.507059e+37
  %v594 = vand.u32 %v561, 2147483648
  %v595 = vor.u32 1.1754944e-38, %v594
  %v596 = vsel %vm593, %v595, %v591
  %v597 = vmul.f32 1.0, %v596
  %v598 = vrcp.pop %v562
  %v599 = vmul.f32 %v562, %v598
  %v600 = vsub.f32 1.0, %v599
  %v601 = vmul.f32 %v598, %v600
  %v602 = vadd.f32 %v598, %v601
  %vm603 = vweird.f32 %v562
  %vm604 = vweird.f32 %v598
  %vm605 = vmor %vm603, %vm604
  %v606 = vsel %vm605, %v598, %v602
  %v607 = vand.u32 2147483647, %v562
  %vm608 = vcmp.eq.f32.partialorder %v607, 8.507059e+37
  %v609 = vand.u32 %v562, 2147483648
  %v610 = vor.u32 1.1754944e-38, %v609
  %v611 = vsel %vm608, %v610, %v606
  %v612 = vmul.f32 1.0, %v611
  %v613 = vrcp.pop %v563
  %v614 = vmul.f32 %v563, %v613
  %v615 = vsub.f32 1.0, %v614
  %v616 = vmul.f32 %v613, %v615
  %v617 = vadd.f32 %v613, %v616
  %vm618 = vweird.f32 %v563
  %vm619 = vweird.f32 %v613
  %vm620 = vmor %vm618, %vm619
  %v621 = vsel %vm620, %v613, %v617
  %v622 = vand.u32 2147483647, %v563
  %vm623 = vcmp.eq.f32.partialorder %v622, 8.507059e+37
  %v624 = vand.u32 %v563, 2147483648
  %v625 = vor.u32 1.1754944e-38, %v624
  %v626 = vsel %vm623, %v625, %v621
  %v627 = vmul.f32 1.0, %v626
  %v628 = vrcp.pop %v564
  %v629 = vmul.f32 %v564, %v628
  %v630 = vsub.f32 1.0, %v629
  %v631 = vmul.f32 %v628, %v630
  %v632 = vadd.f32 %v628, %v631
  %vm633 = vweird.f32 %v564
  %vm634 = vweird.f32 %v628
  %vm635 = vmor %vm633, %vm634
  %v636 = vsel %vm635, %v628, %v632
  %v637 = vand.u32 2147483647, %v564
  %vm638 = vcmp.eq.f32.partialorder %v637, 8.507059e+37
  %v639 = vand.u32 %v564, 2147483648
  %v640 = vor.u32 1.1754944e-38, %v639
  %v641 = vsel %vm638, %v640, %v636
  %v642 = vmul.f32 1.0, %v641
  %v643 = vrcp.pop %v565
  %v644 = vmul.f32 %v565, %v643
  %v645 = vsub.f32 1.0, %v644
  %v646 = vmul.f32 %v643, %v645
  %v647 = vadd.f32 %v643, %v646
  %vm648 = vweird.f32 %v565
  %vm649 = vweird.f32 %v643
  %vm650 = vmor %vm648, %vm649
  %v651 = vsel %vm650, %v643, %v647
  %v652 = vand.u32 2147483647, %v565
  %vm653 = vcmp.eq.f32.partialorder %v652, 8.507059e+37
  %v654 = vand.u32 %v565, 2147483648
  %v655 = vor.u32 1.1754944e-38, %v654
  %v656 = vsel %vm653, %v655, %v651
  %v657 = vmul.f32 1.0, %v656
  %v658 = vrcp.pop %v566
  %v659 = vmul.f32 %v566, %v658
  %v660 = vsub.f32 1.0, %v659
  %v661 = vmul.f32 %v658, %v660
  %v662 = vadd.f32 %v658, %v661
  %vm663 = vweird.f32 %v566
  %vm664 = vweird.f32 %v658
  %vm665 = vmor %vm663, %vm664
  %v666 = vsel %vm665, %v658, %v662
  %v667 = vand.u32 2147483647, %v566
  %vm668 = vcmp.eq.f32.partialorder %v667, 8.507059e+37
  %v669 = vand.u32 %v566, 2147483648
  %v670 = vor.u32 1.1754944e-38, %v669
  %v671 = vsel %vm668, %v670, %v666
  %v672 = vmul.f32 1.0, %v671
  %v673 = vrcp.pop %v567
  %v674 = vmul.f32 %v567, %v673
  %v675 = vsub.f32 1.0, %v674
  %v676 = vmul.f32 %v673, %v675
  %v677 = vadd.f32 %v673, %v676
  %vm678 = vweird.f32 %v567
  %vm679 = vweird.f32 %v673
  %vm680 = vmor %vm678, %vm679
  %v681 = vsel %vm680, %v673, %v677
  %v682 = vand.u32 2147483647, %v567
  %vm683 = vcmp.eq.f32.partialorder %v682, 8.507059e+37
  %v684 = vand.u32 %v567, 2147483648
  %v685 = vor.u32 1.1754944e-38, %v684
  %v686 = vsel %vm683, %v685, %v681
  %v687 = vmul.f32 1.0, %v686
  %v688 = vmul.f32 %v513, %v582
  %v689 = vmul.f32 %v516, %v597
  %v690 = vmul.f32 %v519, %v612
  %v691 = vmul.f32 %v522, %v627
  %v692 = vmul.f32 %v525, %v642
  %v693 = vmul.f32 %v528, %v657
  %v694 = vmul.f32 %v531, %v672
  %v695 = vmul.f32 %v534, %v687
  %v696 = vld [vmem:[%s2 + $0xc0] sm:$0xff]
  %v697 = vld [vmem:[%s2 + $0xc8] sm:$0xff]
  %v698 = vld [vmem:[%s2 + $0xd0] sm:$0xff]
  %v699 = vld [vmem:[%s2 + $0xd8] sm:$0xff]
  %v700 = vld [vmem:[%s2 + $0xe0] sm:$0xff]
  %v701 = vld [vmem:[%s2 + $0xe8] sm:$0xff]
  %v702 = vld [vmem:[%s2 + $0xf0] sm:$0xff]
  %v703 = vld [vmem:[%s2 + $0xf8] sm:$0xff]
  %s704 = scalar_lea.vmem %s2, 963
  %v705 = vld [vmem:[%s704] ss:$8 sm:$0x3]
  %v707 = vperm.slane %v705, 0
  %v708 = vperm.slane %v705, 1
  %v712 = vsel %vm248, %v688, 0
  %v715 = vsel %vm248, %v689, 0
  %v718 = vsel %vm248, %v690, 0
  %v721 = vsel %vm248, %v691, 0
  %v724 = vsel %vm248, %v692, 0
  %v727 = vsel %vm248, %v693, 0
  %v730 = vsel %vm248, %v694, 0
  %v733 = vsel %vm248, %v695, 0
  %735 = vmatpush.msra.mxu0 0.0
  %736 = vmatpush.msra.mxu0 0.0
  %737 = vmatpush.msra.mxu0 0.0
  %738 = vmatpush.msra.mxu0 0.0
  %739 = vmatpush.msra.mxu0 0.0
  %740 = vmatpush.msra.mxu0 0.0
  %741 = vmatpush.msra.mxu0 0.0
  %742 = vmatpush.msra.mxu0 0.0
  %743 = vmatpush.msra.mxu0 0.0
  %744 = vmatpush.msra.mxu0 0.0
  %745 = vmatpush.msra.mxu0 0.0
  %746 = vmatpush.msra.mxu0 0.0
  %747 = vmatpush.msra.mxu0 %v702
  %748 = vmatpush.msra.mxu0 %v700
  %749 = vmatpush.msra.mxu0 %v698
  %750 = vmatpush.msra.mxu0 %v696
  %751 = vmatmul.f32.gmra.mxu0 %v712
  %v752 = vpop.f32.mrf.mxu0
  %v753 = vadd.f32 %v707, %v752
  %754 = vmatmul.f32.gmra.mxu0 %v715
  %v755 = vpop.f32.mrf.mxu0
  %v756 = vadd.f32 %v707, %v755
  %757 = vmatmul.f32.gmra.mxu0 %v718
  %v758 = vpop.f32.mrf.mxu0
  %v759 = vadd.f32 %v707, %v758
  %760 = vmatmul.f32.gmra.mxu0 %v721
  %v761 = vpop.f32.mrf.mxu0
  %v762 = vadd.f32 %v707, %v761
  %763 = vmatmul.f32.gmra.mxu0 %v724
  %v764 = vpop.f32.mrf.mxu0
  %v765 = vadd.f32 %v707, %v764
  %766 = vmatmul.f32.gmra.mxu0 %v727
  %v767 = vpop.f32.mrf.mxu0
  %v768 = vadd.f32 %v707, %v767
  %769 = vmatmul.f32.gmra.mxu0 %v730
  %v770 = vpop.f32.mrf.mxu0
  %v771 = vadd.f32 %v707, %v770
  %772 = vmatmul.f32.gmra.mxu0 %v733
  %v773 = vpop.f32.mrf.mxu0
  %v774 = vadd.f32 %v707, %v773
  %775 = vdwg.mxu0
  %776 = vmatpush.msra.mxu0 0.0
  %777 = vmatpush.msra.mxu0 0.0
  %778 = vmatpush.msra.mxu0 0.0
  %779 = vmatpush.msra.mxu0 0.0
  %780 = vmatpush.msra.mxu0 0.0
  %781 = vmatpush.msra.mxu0 0.0
  %782 = vmatpush.msra.mxu0 0.0
  %783 = vmatpush.msra.mxu0 0.0
  %784 = vmatpush.msra.mxu0 0.0
  %785 = vmatpush.msra.mxu0 0.0
  %786 = vmatpush.msra.mxu0 0.0
  %787 = vmatpush.msra.mxu0 0.0
  %788 = vmatpush.msra.mxu0 %v703
  %789 = vmatpush.msra.mxu0 %v701
  %790 = vmatpush.msra.mxu0 %v699
  %791 = vmatpush.msra.mxu0 %v697
  %792 = vmatmul.f32.gmra.mxu0 %v712
  %v793 = vpop.f32.mrf.mxu0
  %v794 = vadd.f32 %v708, %v793
  %795 = vmatmul.f32.gmra.mxu0 %v715
  %v796 = vpop.f32.mrf.mxu0
  %v797 = vadd.f32 %v708, %v796
  %798 = vmatmul.f32.gmra.mxu0 %v718
  %v799 = vpop.f32.mrf.mxu0
  %v800 = vadd.f32 %v708, %v799
  %801 = vmatmul.f32.gmra.mxu0 %v721
  %v802 = vpop.f32.mrf.mxu0
  %v803 = vadd.f32 %v708, %v802
  %804 = vmatmul.f32.gmra.mxu0 %v724
  %v805 = vpop.f32.mrf.mxu0
  %v806 = vadd.f32 %v708, %v805
  %807 = vmatmul.f32.gmra.mxu0 %v727
  %v808 = vpop.f32.mrf.mxu0
  %v809 = vadd.f32 %v708, %v808
  %810 = vmatmul.f32.gmra.mxu0 %v730
  %v811 = vpop.f32.mrf.mxu0
  %v812 = vadd.f32 %v708, %v811
  %813 = vmatmul.f32.gmra.mxu0 %v733
  %v814 = vpop.f32.mrf.mxu0
  %v815 = vadd.f32 %v708, %v814
  %816 = vdwg.mxu0
  %v817 = vlaneseq
  %v818 = vshrl.u32 %v817, 7
  %v819 = vadd.s32 %v818, 8
  %v820 = vadd.s32 %v818, 16
  %v821 = vadd.s32 %v818, 24
  %v822 = vadd.s32 %v818, 32
  %v823 = vadd.s32 %v818, 40
  %v824 = vadd.s32 %v818, 48
  %v825 = vadd.s32 %v818, 56
  %v826 = vshra.s32 %v818, 5
  %v827 = vshra.s32 %v819, 5
  %v828 = vshra.s32 %v820, 5
  %v829 = vshra.s32 %v821, 5
  %v830 = vshra.s32 %v822, 5
  %v831 = vshra.s32 %v823, 5
  %v832 = vshra.s32 %v824, 5
  %v833 = vshra.s32 %v825, 5
  %v834 = vlaneseq
  %v835 = vand.u32 %v834, 127
  %v836 = vshra.s32 %v835, 5
  %vm837 = vcmp.eq.s32.totalorder %v826, %v836
  %vm838 = vcmp.eq.s32.totalorder %v827, %v836
  %vm839 = vcmp.eq.s32.totalorder %v828, %v836
  %vm840 = vcmp.eq.s32.totalorder %v829, %v836
  %vm841 = vcmp.eq.s32.totalorder %v830, %v836
  %vm842 = vcmp.eq.s32.totalorder %v831, %v836
  %vm843 = vcmp.eq.s32.totalorder %v832, %v836
  %vm844 = vcmp.eq.s32.totalorder %v833, %v836
  %v845 = vsel %vm837, 0.0, -1e+09
  %v846 = vsel %vm838, 0.0, -1e+09
  %v847 = vsel %vm839, 0.0, -1e+09
  %v848 = vsel %vm840, 0.0, -1e+09
  %v849 = vsel %vm841, 0.0, -1e+09
  %v850 = vsel %vm842, 0.0, -1e+09
  %v851 = vsel %vm843, 0.0, -1e+09
  %v852 = vsel %vm844, 0.0, -1e+09
  %v853 = vshra.s32 %v835, 3
  %vm854 = vcmp.eq.s32.totalorder %v826, %v853
  %vm855 = vcmp.eq.s32.totalorder %v827, %v853
  %vm856 = vcmp.eq.s32.totalorder %v828, %v853
  %vm857 = vcmp.eq.s32.totalorder %v829, %v853
  %vm858 = vcmp.eq.s32.totalorder %v830, %v853
  %vm859 = vcmp.eq.s32.totalorder %v831, %v853
  %vm860 = vcmp.eq.s32.totalorder %v832, %v853
  %vm861 = vcmp.eq.s32.totalorder %v833, %v853
  %v862 = vsel %vm854, 0.0, -1e+09
  %v863 = vsel %vm855, 0.0, -1e+09
  %v864 = vsel %vm856, 0.0, -1e+09
  %v865 = vsel %vm857, 0.0, -1e+09
  %v866 = vsel %vm858, 0.0, -1e+09
  %v867 = vsel %vm859, 0.0, -1e+09
  %v868 = vsel %vm860, 0.0, -1e+09
  %v869 = vsel %vm861, 0.0, -1e+09
  %870 = vrot.lane.b32.xlu0 %v14, 38
  %v871 = vpop.permute.xlu0 %870
  %872 = vrot.lane.b32.xlu0 %v15, 38
  %v873 = vpop.permute.xlu0 %872
  %874 = vrot.lane.b32.xlu0 %v16, 38
  %v875 = vpop.permute.xlu0 %874
  %876 = vrot.lane.b32.xlu0 %v17, 38
  %v877 = vpop.permute.xlu0 %876
  %878 = vrot.lane.b32.xlu0 %v18, 38
  %v879 = vpop.permute.xlu0 %878
  %880 = vrot.lane.b32.xlu0 %v19, 38
  %v881 = vpop.permute.xlu0 %880
  %882 = vrot.lane.b32.xlu0 %v20, 38
  %v883 = vpop.permute.xlu0 %882
  %884 = vrot.lane.b32.xlu0 %v21, 38
  %v885 = vpop.permute.xlu0 %884
  %v894 = vadd.f32 %v862, %v871
  %v895 = vadd.f32 %v863, %v873
  %v896 = vadd.f32 %v864, %v875
  %v897 = vadd.f32 %v865, %v877
  %v898 = vadd.f32 %v866, %v879
  %v899 = vadd.f32 %v867, %v881
  %v900 = vadd.f32 %v868, %v883
  %v901 = vadd.f32 %v869, %v885
  %vm902 = vcmp.ge.s32.totalorder %v835, 0
  %vm903 = vcmp.lt.s32.totalorder %v835, 16
  %vm904 = vmand %vm902, %vm903
  %v905 = vsel %vm904, 1, 0
  %v906 = vcvt.s32.f32 %v905
  %vm907 = vcmp.ge.s32.totalorder %v835, 16
  %vm908 = vcmp.lt.s32.totalorder %v835, 32
  %vm909 = vmand %vm907, %vm908
  %v910 = vsel %vm909, 1, 0
  %v911 = vcvt.s32.f32 %v910
  %v912 = vsel %vm248, %v204, 0.0
  %913 = vadd.xlane.f32.xlu0 %v912
  %v914 = vpop.xlane.xlu0 %913
  %v915 = vsel %vm248, %v207, 0.0
  %916 = vadd.xlane.f32.xlu0 %v915
  %v917 = vpop.xlane.xlu0 %916
  %v918 = vsel %vm248, %v210, 0.0
  %919 = vadd.xlane.f32.xlu0 %v918
  %v920 = vpop.xlane.xlu0 %919
  %v921 = vsel %vm248, %v213, 0.0
  %922 = vadd.xlane.f32.xlu0 %v921
  %v923 = vpop.xlane.xlu0 %922
  %v924 = vsel %vm248, %v216, 0.0
  %925 = vadd.xlane.f32.xlu0 %v924
  %v926 = vpop.xlane.xlu0 %925
  %v927 = vsel %vm248, %v219, 0.0
  %928 = vadd.xlane.f32.xlu0 %v927
  %v929 = vpop.xlane.xlu0 %928
  %v930 = vsel %vm248, %v222, 0.0
  %931 = vadd.xlane.f32.xlu0 %v930
  %v932 = vpop.xlane.xlu0 %931
  %v933 = vsel %vm248, %v225, 0.0
  %934 = vadd.xlane.f32.xlu0 %v933
  %v935 = vpop.xlane.xlu0 %934
  %v936 = vrcp.pop 32.0
  %v937 = vmul.f32 32.0, %v936
  %v938 = vsub.f32 1.0, %v937
  %v939 = vmul.f32 %v936, %v938
  %v940 = vadd.f32 %v936, %v939
  %vm941 = vweird.f32 %v936
  %v942 = vsel %vm941, %v936, %v940
  %v943 = vmul.f32 %v914, %v942
  %v944 = vmul.f32 %v917, %v942
  %v945 = vmul.f32 %v920, %v942
  %v946 = vmul.f32 %v923, %v942
  %v947 = vmul.f32 %v926, %v942
  %v948 = vmul.f32 %v929, %v942
  %v949 = vmul.f32 %v932, %v942
  %v950 = vmul.f32 %v935, %v942
  %v951 = vsub.f32 %v204, %v943
  %v952 = vsub.f32 %v207, %v944
  %v953 = vsub.f32 %v210, %v945
  %v954 = vsub.f32 %v213, %v946
  %v955 = vsub.f32 %v216, %v947
  %v956 = vsub.f32 %v219, %v948
  %v957 = vsub.f32 %v222, %v949
  %v958 = vsub.f32 %v225, %v950
  %v959 = vmul.f32 %v951, %v951
  %v960 = vmul.f32 %v952, %v952
  %v961 = vmul.f32 %v953, %v953
  %v962 = vmul.f32 %v954, %v954
  %v963 = vmul.f32 %v955, %v955
  %v964 = vmul.f32 %v956, %v956
  %v965 = vmul.f32 %v957, %v957
  %v966 = vmul.f32 %v958, %v958
  %v967 = vsel %vm248, %v959, 0.0
  %968 = vadd.xlane.f32.xlu0 %v967
  %v969 = vpop.xlane.xlu0 %968
  %v970 = vsel %vm248, %v960, 0.0
  %971 = vadd.xlane.f32.xlu0 %v970
  %v972 = vpop.xlane.xlu0 %971
  %v973 = vsel %vm248, %v961, 0.0
  %974 = vadd.xlane.f32.xlu0 %v973
  %v975 = vpop.xlane.xlu0 %974
  %v976 = vsel %vm248, %v962, 0.0
  %977 = vadd.xlane.f32.xlu0 %v976
  %v978 = vpop.xlane.xlu0 %977
  %v979 = vsel %vm248, %v963, 0.0
  %980 = vadd.xlane.f32.xlu0 %v979
  %v981 = vpop.xlane.xlu0 %980
  %v982 = vsel %vm248, %v964, 0.0
  %983 = vadd.xlane.f32.xlu0 %v982
  %v984 = vpop.xlane.xlu0 %983
  %v985 = vsel %vm248, %v965, 0.0
  %986 = vadd.xlane.f32.xlu0 %v985
  %v987 = vpop.xlane.xlu0 %986
  %v988 = vsel %vm248, %v966, 0.0
  %989 = vadd.xlane.f32.xlu0 %v988
  %v990 = vpop.xlane.xlu0 %989
  %v991 = vmul.f32 %v969, %v942
  %v992 = vmul.f32 %v972, %v942
  %v993 = vmul.f32 %v975, %v942
  %v994 = vmul.f32 %v978, %v942
  %v995 = vmul.f32 %v981, %v942
  %v996 = vmul.f32 %v984, %v942
  %v997 = vmul.f32 %v987, %v942
  %v998 = vmul.f32 %v990, %v942
  %v999 = vadd.f32 %v991, 1e-06
  %v1000 = vadd.f32 %v992, 1e-06
  %v1001 = vadd.f32 %v993, 1e-06
  %v1002 = vadd.f32 %v994, 1e-06
  %v1003 = vadd.f32 %v995, 1e-06
  %v1004 = vadd.f32 %v996, 1e-06
  %v1005 = vadd.f32 %v997, 1e-06
  %v1006 = vadd.f32 %v998, 1e-06
  %v1007 = vrsqrt.pop %v999
  %v1008 = vmul.f32 %v1007, %v999
  %v1009 = vmul.f32 %v1008, %v1007
  %v1010 = vmul.f32 0.5, %v1009
  %v1011 = vsub.f32 1.5, %v1010
  %v1012 = vmul.f32 %v1007, %v1011
  %vm1013 = vweird.f32 %v999
  %vm1014 = vweird.f32 %v1007
  %vm1015 = vmor %vm1013, %vm1014
  %v1016 = vsel %vm1015, %v1007, %v1012
  %v1017 = vrsqrt.pop %v1000
  %v1018 = vmul.f32 %v1017, %v1000
  %v1019 = vmul.f32 %v1018, %v1017
  %v1020 = vmul.f32 0.5, %v1019
  %v1021 = vsub.f32 1.5, %v1020
  %v1022 = vmul.f32 %v1017, %v1021
  %vm1023 = vweird.f32 %v1000
  %vm1024 = vweird.f32 %v1017
  %vm1025 = vmor %vm1023, %vm1024
  %v1026 = vsel %vm1025, %v1017, %v1022
  %v1027 = vrsqrt.pop %v1001
  %v1028 = vmul.f32 %v1027, %v1001
  %v1029 = vmul.f32 %v1028, %v1027
  %v1030 = vmul.f32 0.5, %v1029
  %v1031 = vsub.f32 1.5, %v1030
  %v1032 = vmul.f32 %v1027, %v1031
  %vm1033 = vweird.f32 %v1001
  %vm1034 = vweird.f32 %v1027
  %vm1035 = vmor %vm1033, %vm1034
  %v1036 = vsel %vm1035, %v1027, %v1032
  %v1037 = vrsqrt.pop %v1002
  %v1038 = vmul.f32 %v1037, %v1002
  %v1039 = vmul.f32 %v1038, %v1037
  %v1040 = vmul.f32 0.5, %v1039
  %v1041 = vsub.f32 1.5, %v1040
  %v1042 = vmul.f32 %v1037, %v1041
  %vm1043 = vweird.f32 %v1002
  %vm1044 = vweird.f32 %v1037
  %vm1045 = vmor %vm1043, %vm1044
  %v1046 = vsel %vm1045, %v1037, %v1042
  %v1047 = vrsqrt.pop %v1003
  %v1048 = vmul.f32 %v1047, %v1003
  %v1049 = vmul.f32 %v1048, %v1047
  %v1050 = vmul.f32 0.5, %v1049
  %v1051 = vsub.f32 1.5, %v1050
  %v1052 = vmul.f32 %v1047, %v1051
  %vm1053 = vweird.f32 %v1003
  %vm1054 = vweird.f32 %v1047
  %vm1055 = vmor %vm1053, %vm1054
  %v1056 = vsel %vm1055, %v1047, %v1052
  %v1057 = vrsqrt.pop %v1004
  %v1058 = vmul.f32 %v1057, %v1004
  %v1059 = vmul.f32 %v1058, %v1057
  %v1060 = vmul.f32 0.5, %v1059
  %v1061 = vsub.f32 1.5, %v1060
  %v1062 = vmul.f32 %v1057, %v1061
  %vm1063 = vweird.f32 %v1004
  %vm1064 = vweird.f32 %v1057
  %vm1065 = vmor %vm1063, %vm1064
  %v1066 = vsel %vm1065, %v1057, %v1062
  %v1067 = vrsqrt.pop %v1005
  %v1068 = vmul.f32 %v1067, %v1005
  %v1069 = vmul.f32 %v1068, %v1067
  %v1070 = vmul.f32 0.5, %v1069
  %v1071 = vsub.f32 1.5, %v1070
  %v1072 = vmul.f32 %v1067, %v1071
  %vm1073 = vweird.f32 %v1005
  %vm1074 = vweird.f32 %v1067
  %vm1075 = vmor %vm1073, %vm1074
  %v1076 = vsel %vm1075, %v1067, %v1072
  %v1077 = vrsqrt.pop %v1006
  %v1078 = vmul.f32 %v1077, %v1006
  %v1079 = vmul.f32 %v1078, %v1077
  %v1080 = vmul.f32 0.5, %v1079
  %v1081 = vsub.f32 1.5, %v1080
  %v1082 = vmul.f32 %v1077, %v1081
  %vm1083 = vweird.f32 %v1006
  %vm1084 = vweird.f32 %v1077
  %vm1085 = vmor %vm1083, %vm1084
  %v1086 = vsel %vm1085, %v1077, %v1082
  %v1087 = vmul.f32 %v951, %v1016
  %v1088 = vmul.f32 %v952, %v1026
  %v1089 = vmul.f32 %v953, %v1036
  %v1090 = vmul.f32 %v954, %v1046
  %v1091 = vmul.f32 %v955, %v1056
  %v1092 = vmul.f32 %v956, %v1066
  %v1093 = vmul.f32 %v957, %v1076
  %v1094 = vmul.f32 %v958, %v1086
  %v1095 = vadd.f32 %v753, 1.0
  %v1096 = vadd.f32 %v756, 1.0
  %v1097 = vadd.f32 %v759, 1.0
  %v1098 = vadd.f32 %v762, 1.0
  %v1099 = vadd.f32 %v765, 1.0
  %v1100 = vadd.f32 %v768, 1.0
  %v1101 = vadd.f32 %v771, 1.0
  %v1102 = vadd.f32 %v774, 1.0
  %1111 = vrot.lane.b32.xlu0 %v1095, 96
  %v1112 = vpop.permute.xlu0 %1111
  %1113 = vrot.lane.b32.xlu0 %v1096, 96
  %v1114 = vpop.permute.xlu0 %1113
  %1115 = vrot.lane.b32.xlu0 %v1097, 96
  %v1116 = vpop.permute.xlu0 %1115
  %1117 = vrot.lane.b32.xlu0 %v1098, 96
  %v1118 = vpop.permute.xlu0 %1117
  %1119 = vrot.lane.b32.xlu0 %v1099, 96
  %v1120 = vpop.permute.xlu0 %1119
  %1121 = vrot.lane.b32.xlu0 %v1100, 96
  %v1122 = vpop.permute.xlu0 %1121
  %1123 = vrot.lane.b32.xlu0 %v1101, 96
  %v1124 = vpop.permute.xlu0 %1123
  %1125 = vrot.lane.b32.xlu0 %v1102, 96
  %v1126 = vpop.permute.xlu0 %1125
  %v1135 = vmul.f32 %v1087, %v1112
  %v1136 = vmul.f32 %v1088, %v1114
  %v1137 = vmul.f32 %v1089, %v1116
  %v1138 = vmul.f32 %v1090, %v1118
  %v1139 = vmul.f32 %v1091, %v1120
  %v1140 = vmul.f32 %v1092, %v1122
  %v1141 = vmul.f32 %v1093, %v1124
  %v1142 = vmul.f32 %v1094, %v1126
  %v1143 = vadd.f32 %v1135, %v753
  %v1144 = vadd.f32 %v1136, %v756
  %v1145 = vadd.f32 %v1137, %v759
  %v1146 = vadd.f32 %v1138, %v762
  %v1147 = vadd.f32 %v1139, %v765
  %v1148 = vadd.f32 %v1140, %v768
  %v1149 = vadd.f32 %v1141, %v771
  %v1150 = vadd.f32 %v1142, %v774
  %v1151 = vld [vmem:[%s2 + $0x100] sm:$0xff]
  %v1152 = vld [vmem:[%s2 + $0x110] sm:$0xff]
  %v1153 = vld [vmem:[%s2 + $0x120] sm:$0xff]
  %v1154 = vld [vmem:[%s2 + $0x130] sm:$0xff]
  %v1155 = vld [vmem:[%s2 + $0x3c4] ss:$0 sm:$0xff]
  %v1157 = vsel %vm248, %v1143, 0
  %v1160 = vsel %vm248, %v1144, 0
  %v1163 = vsel %vm248, %v1145, 0
  %v1166 = vsel %vm248, %v1146, 0
  %v1169 = vsel %vm248, %v1147, 0
  %v1172 = vsel %vm248, %v1148, 0
  %v1175 = vsel %vm248, %v1149, 0
  %v1178 = vsel %vm248, %v1150, 0
  %1180 = vmatpush.msra.mxu0 0.0
  %1181 = vmatpush.msra.mxu0 0.0
  %1182 = vmatpush.msra.mxu0 0.0
  %1183 = vmatpush.msra.mxu0 0.0
  %1184 = vmatpush.msra.mxu0 0.0
  %1185 = vmatpush.msra.mxu0 0.0
  %1186 = vmatpush.msra.mxu0 0.0
  %1187 = vmatpush.msra.mxu0 0.0
  %1188 = vmatpush.msra.mxu0 0.0
  %1189 = vmatpush.msra.mxu0 0.0
  %1190 = vmatpush.msra.mxu0 0.0
  %1191 = vmatpush.msra.mxu0 0.0
  %1192 = vmatpush.msra.mxu0 %v1154
  %1193 = vmatpush.msra.mxu0 %v1153
  %1194 = vmatpush.msra.mxu0 %v1152
  %1195 = vmatpush.msra.mxu0 %v1151
  %1196 = vmatmul.f32.gmra.mxu0 %v1157
  %v1197 = vpop.f32.mrf.mxu0
  %v1198 = vadd.f32 %v1155, %v1197
  %1199 = vmatmul.f32.gmra.mxu0 %v1160
  %v1200 = vpop.f32.mrf.mxu0
  %v1201 = vadd.f32 %v1155, %v1200
  %1202 = vmatmul.f32.gmra.mxu0 %v1163
  %v1203 = vpop.f32.mrf.mxu0
  %v1204 = vadd.f32 %v1155, %v1203
  %1205 = vmatmul.f32.gmra.mxu0 %v1166
  %v1206 = vpop.f32.mrf.mxu0
  %v1207 = vadd.f32 %v1155, %v1206
  %1208 = vmatmul.f32.gmra.mxu0 %v1169
  %v1209 = vpop.f32.mrf.mxu0
  %v1210 = vadd.f32 %v1155, %v1209
  %1211 = vmatmul.f32.gmra.mxu0 %v1172
  %v1212 = vpop.f32.mrf.mxu0
  %v1213 = vadd.f32 %v1155, %v1212
  %1214 = vmatmul.f32.gmra.mxu0 %v1175
  %v1215 = vpop.f32.mrf.mxu0
  %v1216 = vadd.f32 %v1155, %v1215
  %1217 = vmatmul.f32.gmra.mxu0 %v1178
  %v1218 = vpop.f32.mrf.mxu0
  %v1219 = vadd.f32 %v1155, %v1218
  %1220 = vdwg.mxu0
  %v1221 = vmul.f32 %v1198, %v906
  %v1222 = vmul.f32 %v1201, %v906
  %v1223 = vmul.f32 %v1204, %v906
  %v1224 = vmul.f32 %v1207, %v906
  %v1225 = vmul.f32 %v1210, %v906
  %v1226 = vmul.f32 %v1213, %v906
  %v1227 = vmul.f32 %v1216, %v906
  %v1228 = vmul.f32 %v1219, %v906
  %1237 = vrot.lane.b32.xlu0 %v1198, 96
  %v1238 = vpop.permute.xlu0 %1237
  %1239 = vrot.lane.b32.xlu0 %v1201, 96
  %v1240 = vpop.permute.xlu0 %1239
  %1241 = vrot.lane.b32.xlu0 %v1204, 96
  %v1242 = vpop.permute.xlu0 %1241
  %1243 = vrot.lane.b32.xlu0 %v1207, 96
  %v1244 = vpop.permute.xlu0 %1243
  %1245 = vrot.lane.b32.xlu0 %v1210, 96
  %v1246 = vpop.permute.xlu0 %1245
  %1247 = vrot.lane.b32.xlu0 %v1213, 96
  %v1248 = vpop.permute.xlu0 %1247
  %1249 = vrot.lane.b32.xlu0 %v1216, 96
  %v1250 = vpop.permute.xlu0 %1249
  %1251 = vrot.lane.b32.xlu0 %v1219, 96
  %v1252 = vpop.permute.xlu0 %1251
  %v1254 = vsel %vm248, %v1221, 0
  %v1257 = vsel %vm248, %v1222, 0
  %v1260 = vsel %vm248, %v1223, 0
  %v1263 = vsel %vm248, %v1224, 0
  %v1266 = vsel %vm248, %v1225, 0
  %v1269 = vsel %vm248, %v1226, 0
  %v1272 = vsel %vm248, %v1227, 0
  %v1275 = vsel %vm248, %v1228, 0
  %v1277 = vsel %vm248, %v1238, 0
  %v1279 = vsel %vm248, %v1240, 0
  %v1281 = vsel %vm248, %v1242, 0
  %v1283 = vsel %vm248, %v1244, 0
  %v1285 = vsel %vm248, %v1246, 0
  %v1287 = vsel %vm248, %v1248, 0
  %v1289 = vsel %vm248, %v1250, 0
  %v1291 = vsel %vm248, %v1252, 0
  %1293 = vmatpush.xpose.msra.mxu0 0.0
  %1294 = vmatpush.xpose.msra.mxu0 0.0
  %1295 = vmatpush.xpose.msra.mxu0 0.0
  %1296 = vmatpush.xpose.msra.mxu0 0.0
  %1297 = vmatpush.xpose.msra.mxu0 0.0
  %1298 = vmatpush.xpose.msra.mxu0 0.0
  %1299 = vmatpush.xpose.msra.mxu0 0.0
  %1300 = vmatpush.xpose.msra.mxu0 0.0
  %1301 = vmatpush.xpose.msra.mxu0 %v1291
  %1302 = vmatpush.xpose.msra.mxu0 %v1289
  %1303 = vmatpush.xpose.msra.mxu0 %v1287
  %1304 = vmatpush.xpose.msra.mxu0 %v1285
  %1305 = vmatpush.xpose.msra.mxu0 %v1283
  %1306 = vmatpush.xpose.msra.mxu0 %v1281
  %1307 = vmatpush.xpose.msra.mxu0 %v1279
  %1308 = vmatpush.xpose.msra.mxu0 %v1277
  %1309 = vmatmul.f32.gmra.mxu0 %v1254
  %v1310 = vpop.f32.mrf.mxu0
  %v1311 = vadd.f32 0.0, %v1310
  %1312 = vmatmul.f32.gmra.mxu0 %v1257
  %v1313 = vpop.f32.mrf.mxu0
  %v1314 = vadd.f32 0.0, %v1313
  %1315 = vmatmul.f32.gmra.mxu0 %v1260
  %v1316 = vpop.f32.mrf.mxu0
  %v1317 = vadd.f32 0.0, %v1316
  %1318 = vmatmul.f32.gmra.mxu0 %v1263
  %v1319 = vpop.f32.mrf.mxu0
  %v1320 = vadd.f32 0.0, %v1319
  %1321 = vmatmul.f32.gmra.mxu0 %v1266
  %v1322 = vpop.f32.mrf.mxu0
  %v1323 = vadd.f32 0.0, %v1322
  %1324 = vmatmul.f32.gmra.mxu0 %v1269
  %v1325 = vpop.f32.mrf.mxu0
  %v1326 = vadd.f32 0.0, %v1325
  %1327 = vmatmul.f32.gmra.mxu0 %v1272
  %v1328 = vpop.f32.mrf.mxu0
  %v1329 = vadd.f32 0.0, %v1328
  %1330 = vmatmul.f32.gmra.mxu0 %v1275
  %v1331 = vpop.f32.mrf.mxu0
  %v1332 = vadd.f32 0.0, %v1331
  %1333 = vdwg.mxu0
  %v1334 = vmul.f32 %v1311, 0.25
  %v1335 = vmul.f32 %v1314, 0.25
  %v1336 = vmul.f32 %v1317, 0.25
  %v1337 = vmul.f32 %v1320, 0.25
  %v1338 = vmul.f32 %v1323, 0.25
  %v1339 = vmul.f32 %v1326, 0.25
  %v1340 = vmul.f32 %v1329, 0.25
  %v1341 = vmul.f32 %v1332, 0.25
  %v1342 = vadd.f32 %v1334, %v845
  %v1343 = vadd.f32 %v1335, %v846
  %v1344 = vadd.f32 %v1336, %v847
  %v1345 = vadd.f32 %v1337, %v848
  %v1346 = vadd.f32 %v1338, %v849
  %v1347 = vadd.f32 %v1339, %v850
  %v1348 = vadd.f32 %v1340, %v851
  %v1349 = vadd.f32 %v1341, %v852
  %vm1350 = vcmask 523264
  %v1351 = vsel %vm1350, %v1342, -inf
  %1352 = vmax.xlane.f32.xlu0 %v1351
  %v1353 = vpop.xlane.xlu0 %1352
  %v1354 = vsel %vm1350, %v1343, -inf
  %1355 = vmax.xlane.f32.xlu0 %v1354
  %v1356 = vpop.xlane.xlu0 %1355
  %v1357 = vsel %vm1350, %v1344, -inf
  %1358 = vmax.xlane.f32.xlu0 %v1357
  %v1359 = vpop.xlane.xlu0 %1358
  %v1360 = vsel %vm1350, %v1345, -inf
  %1361 = vmax.xlane.f32.xlu0 %v1360
  %v1362 = vpop.xlane.xlu0 %1361
  %v1363 = vsel %vm1350, %v1346, -inf
  %1364 = vmax.xlane.f32.xlu0 %v1363
  %v1365 = vpop.xlane.xlu0 %1364
  %v1366 = vsel %vm1350, %v1347, -inf
  %1367 = vmax.xlane.f32.xlu0 %v1366
  %v1368 = vpop.xlane.xlu0 %1367
  %v1369 = vsel %vm1350, %v1348, -inf
  %1370 = vmax.xlane.f32.xlu0 %v1369
  %v1371 = vpop.xlane.xlu0 %1370
  %v1372 = vsel %vm1350, %v1349, -inf
  %1373 = vmax.xlane.f32.xlu0 %v1372
  %v1374 = vpop.xlane.xlu0 %1373
  %v1375 = vsub.f32 %v1342, %v1353
  %v1376 = vsub.f32 %v1343, %v1356
  %v1377 = vsub.f32 %v1344, %v1359
  %v1378 = vsub.f32 %v1345, %v1362
  %v1379 = vsub.f32 %v1346, %v1365
  %v1380 = vsub.f32 %v1347, %v1368
  %v1381 = vsub.f32 %v1348, %v1371
  %v1382 = vsub.f32 %v1349, %v1374
  %v1383 = vmul.f32 %v1375, 1.442695
  %v1384 = vpow.pop %v1383
  %v1385 = vmul.f32 %v1376, 1.442695
  %v1386 = vpow.pop %v1385
  %v1387 = vmul.f32 %v1377, 1.442695
  %v1388 = vpow.pop %v1387
  %v1389 = vmul.f32 %v1378, 1.442695
  %v1390 = vpow.pop %v1389
  %v1391 = vmul.f32 %v1379, 1.442695
  %v1392 = vpow.pop %v1391
  %v1393 = vmul.f32 %v1380, 1.442695
  %v1394 = vpow.pop %v1393
  %v1395 = vmul.f32 %v1381, 1.442695
  %v1396 = vpow.pop %v1395
  %v1397 = vmul.f32 %v1382, 1.442695
  %v1398 = vpow.pop %v1397
  %v1399 = vsel %vm1350, %v1384, 0.0
  %1400 = vadd.xlane.f32.xlu0 %v1399
  %v1401 = vpop.xlane.xlu0 %1400
  %v1402 = vsel %vm1350, %v1386, 0.0
  %1403 = vadd.xlane.f32.xlu0 %v1402
  %v1404 = vpop.xlane.xlu0 %1403
  %v1405 = vsel %vm1350, %v1388, 0.0
  %1406 = vadd.xlane.f32.xlu0 %v1405
  %v1407 = vpop.xlane.xlu0 %1406
  %v1408 = vsel %vm1350, %v1390, 0.0
  %1409 = vadd.xlane.f32.xlu0 %v1408
  %v1410 = vpop.xlane.xlu0 %1409
  %v1411 = vsel %vm1350, %v1392, 0.0
  %1412 = vadd.xlane.f32.xlu0 %v1411
  %v1413 = vpop.xlane.xlu0 %1412
  %v1414 = vsel %vm1350, %v1394, 0.0
  %1415 = vadd.xlane.f32.xlu0 %v1414
  %v1416 = vpop.xlane.xlu0 %1415
  %v1417 = vsel %vm1350, %v1396, 0.0
  %1418 = vadd.xlane.f32.xlu0 %v1417
  %v1419 = vpop.xlane.xlu0 %1418
  %v1420 = vsel %vm1350, %v1398, 0.0
  %1421 = vadd.xlane.f32.xlu0 %v1420
  %v1422 = vpop.xlane.xlu0 %1421
  %v1423 = vrcp.pop %v1401
  %v1424 = vrcp.pop %v1404
  %v1425 = vrcp.pop %v1407
  %v1426 = vrcp.pop %v1410
  %v1427 = vrcp.pop %v1413
  %v1428 = vrcp.pop %v1416
  %v1429 = vrcp.pop %v1419
  %v1430 = vrcp.pop %v1422
  %1432 = vrot.lane.b32.xlu0 %v906, 64
  %v1433 = vpop.permute.xlu0 %1432
  %v1435 = vmul.f32 %v1198, %v1433
  %v1436 = vmul.f32 %v1201, %v1433
  %v1437 = vmul.f32 %v1204, %v1433
  %v1438 = vmul.f32 %v1207, %v1433
  %v1439 = vmul.f32 %v1210, %v1433
  %v1440 = vmul.f32 %v1213, %v1433
  %v1441 = vmul.f32 %v1216, %v1433
  %v1442 = vmul.f32 %v1219, %v1433
  %1451 = vrot.lane.b32.xlu0 %v1435, 64
  %v1452 = vpop.permute.xlu0 %1451
  %1453 = vrot.lane.b32.xlu0 %v1436, 64
  %v1454 = vpop.permute.xlu0 %1453
  %1455 = vrot.lane.b32.xlu0 %v1437, 64
  %v1456 = vpop.permute.xlu0 %1455
  %1457 = vrot.lane.b32.xlu0 %v1438, 64
  %v1458 = vpop.permute.xlu0 %1457
  %1459 = vrot.lane.b32.xlu0 %v1439, 64
  %v1460 = vpop.permute.xlu0 %1459
  %1461 = vrot.lane.b32.xlu0 %v1440, 64
  %v1462 = vpop.permute.xlu0 %1461
  %1463 = vrot.lane.b32.xlu0 %v1441, 64
  %v1464 = vpop.permute.xlu0 %1463
  %1465 = vrot.lane.b32.xlu0 %v1442, 64
  %v1466 = vpop.permute.xlu0 %1465
  %v1476 = vsel %vm1350, %v1384, 0
  %v1479 = vsel %vm1350, %v1386, 0
  %v1482 = vsel %vm1350, %v1388, 0
  %v1485 = vsel %vm1350, %v1390, 0
  %v1488 = vsel %vm1350, %v1392, 0
  %v1491 = vsel %vm1350, %v1394, 0
  %v1494 = vsel %vm1350, %v1396, 0
  %v1497 = vsel %vm1350, %v1398, 0
  %1499 = vmatpush.msra.mxu0 0.0
  %1500 = vmatpush.msra.mxu0 0.0
  %1501 = vmatpush.msra.mxu0 0.0
  %1502 = vmatpush.msra.mxu0 0.0
  %1503 = vmatpush.msra.mxu0 0.0
  %1504 = vmatpush.msra.mxu0 0.0
  %1505 = vmatpush.msra.mxu0 0.0
  %1506 = vmatpush.msra.mxu0 0.0
  %1507 = vmatpush.msra.mxu0 %v1466
  %1508 = vmatpush.msra.mxu0 %v1464
  %1509 = vmatpush.msra.mxu0 %v1462
  %1510 = vmatpush.msra.mxu0 %v1460
  %1511 = vmatpush.msra.mxu0 %v1458
  %1512 = vmatpush.msra.mxu0 %v1456
  %1513 = vmatpush.msra.mxu0 %v1454
  %1514 = vmatpush.msra.mxu0 %v1452
  %1515 = vmatmul.f32.gmra.mxu0 %v1476
  %v1516 = vpop.f32.mrf.mxu0
  %v1517 = vadd.f32 0.0, %v1516
  %1518 = vmatmul.f32.gmra.mxu0 %v1479
  %v1519 = vpop.f32.mrf.mxu0
  %v1520 = vadd.f32 0.0, %v1519
  %1521 = vmatmul.f32.gmra.mxu0 %v1482
  %v1522 = vpop.f32.mrf.mxu0
  %v1523 = vadd.f32 0.0, %v1522
  %1524 = vmatmul.f32.gmra.mxu0 %v1485
  %v1525 = vpop.f32.mrf.mxu0
  %v1526 = vadd.f32 0.0, %v1525
  %1527 = vmatmul.f32.gmra.mxu0 %v1488
  %v1528 = vpop.f32.mrf.mxu0
  %v1529 = vadd.f32 0.0, %v1528
  %1530 = vmatmul.f32.gmra.mxu0 %v1491
  %v1531 = vpop.f32.mrf.mxu0
  %v1532 = vadd.f32 0.0, %v1531
  %1533 = vmatmul.f32.gmra.mxu0 %v1494
  %v1534 = vpop.f32.mrf.mxu0
  %v1535 = vadd.f32 0.0, %v1534
  %1536 = vmatmul.f32.gmra.mxu0 %v1497
  %v1537 = vpop.f32.mrf.mxu0
  %v1538 = vadd.f32 0.0, %v1537
  %1539 = vdwg.mxu0
  %v1540 = vmul.f32 %v1517, %v1423
  %v1541 = vmul.f32 %v1520, %v1424
  %v1542 = vmul.f32 %v1523, %v1425
  %v1543 = vmul.f32 %v1526, %v1426
  %v1544 = vmul.f32 %v1529, %v1427
  %v1545 = vmul.f32 %v1532, %v1428
  %v1546 = vmul.f32 %v1535, %v1429
  %v1547 = vmul.f32 %v1538, %v1430
  %v1548 = vadd.f32 %v1540, 0.0
  %v1549 = vadd.f32 %v1541, 0.0
  %v1550 = vadd.f32 %v1542, 0.0
  %v1551 = vadd.f32 %v1543, 0.0
  %v1552 = vadd.f32 %v1544, 0.0
  %v1553 = vadd.f32 %v1545, 0.0
  %v1554 = vadd.f32 %v1546, 0.0
  %v1555 = vadd.f32 %v1547, 0.0
  %v1556 = vmul.f32 %v1198, %v911
  %v1557 = vmul.f32 %v1201, %v911
  %v1558 = vmul.f32 %v1204, %v911
  %v1559 = vmul.f32 %v1207, %v911
  %v1560 = vmul.f32 %v1210, %v911
  %v1561 = vmul.f32 %v1213, %v911
  %v1562 = vmul.f32 %v1216, %v911
  %v1563 = vmul.f32 %v1219, %v911
  %v1565 = vsel %vm248, %v1556, 0
  %v1568 = vsel %vm248, %v1557, 0
  %v1571 = vsel %vm248, %v1558, 0
  %v1574 = vsel %vm248, %v1559, 0
  %v1577 = vsel %vm248, %v1560, 0
  %v1580 = vsel %vm248, %v1561, 0
  %v1583 = vsel %vm248, %v1562, 0
  %v1586 = vsel %vm248, %v1563, 0
  %1588 = vmatpush.xpose.msra.mxu0 0.0
  %1589 = vmatpush.xpose.msra.mxu0 0.0
  %1590 = vmatpush.xpose.msra.mxu0 0.0
  %1591 = vmatpush.xpose.msra.mxu0 0.0
  %1592 = vmatpush.xpose.msra.mxu0 0.0
  %1593 = vmatpush.xpose.msra.mxu0 0.0
  %1594 = vmatpush.xpose.msra.mxu0 0.0
  %1595 = vmatpush.xpose.msra.mxu0 0.0
  %1596 = vmatpush.xpose.msra.mxu0 %v1291
  %1597 = vmatpush.xpose.msra.mxu0 %v1289
  %1598 = vmatpush.xpose.msra.mxu0 %v1287
  %1599 = vmatpush.xpose.msra.mxu0 %v1285
  %1600 = vmatpush.xpose.msra.mxu0 %v1283
  %1601 = vmatpush.xpose.msra.mxu0 %v1281
  %1602 = vmatpush.xpose.msra.mxu0 %v1279
  %1603 = vmatpush.xpose.msra.mxu0 %v1277
  %1604 = vmatmul.f32.gmra.mxu0 %v1565
  %v1605 = vpop.f32.mrf.mxu0
  %v1606 = vadd.f32 0.0, %v1605
  %1607 = vmatmul.f32.gmra.mxu0 %v1568
  %v1608 = vpop.f32.mrf.mxu0
  %v1609 = vadd.f32 0.0, %v1608
  %1610 = vmatmul.f32.gmra.mxu0 %v1571
  %v1611 = vpop.f32.mrf.mxu0
  %v1612 = vadd.f32 0.0, %v1611
  %1613 = vmatmul.f32.gmra.mxu0 %v1574
  %v1614 = vpop.f32.mrf.mxu0
  %v1615 = vadd.f32 0.0, %v1614
  %1616 = vmatmul.f32.gmra.mxu0 %v1577
  %v1617 = vpop.f32.mrf.mxu0
  %v1618 = vadd.f32 0.0, %v1617
  %1619 = vmatmul.f32.gmra.mxu0 %v1580
  %v1620 = vpop.f32.mrf.mxu0
  %v1621 = vadd.f32 0.0, %v1620
  %1622 = vmatmul.f32.gmra.mxu0 %v1583
  %v1623 = vpop.f32.mrf.mxu0
  %v1624 = vadd.f32 0.0, %v1623
  %1625 = vmatmul.f32.gmra.mxu0 %v1586
  %v1626 = vpop.f32.mrf.mxu0
  %v1627 = vadd.f32 0.0, %v1626
  %1628 = vdwg.mxu0
  %v1629 = vmul.f32 %v1606, 0.25
  %v1630 = vmul.f32 %v1609, 0.25
  %v1631 = vmul.f32 %v1612, 0.25
  %v1632 = vmul.f32 %v1615, 0.25
  %v1633 = vmul.f32 %v1618, 0.25
  %v1634 = vmul.f32 %v1621, 0.25
  %v1635 = vmul.f32 %v1624, 0.25
  %v1636 = vmul.f32 %v1627, 0.25
  %v1637 = vadd.f32 %v1629, %v845
  %v1638 = vadd.f32 %v1630, %v846
  %v1639 = vadd.f32 %v1631, %v847
  %v1640 = vadd.f32 %v1632, %v848
  %v1641 = vadd.f32 %v1633, %v849
  %v1642 = vadd.f32 %v1634, %v850
  %v1643 = vadd.f32 %v1635, %v851
  %v1644 = vadd.f32 %v1636, %v852
  %v1645 = vsel %vm1350, %v1637, -inf
  %1646 = vmax.xlane.f32.xlu0 %v1645
  %v1647 = vpop.xlane.xlu0 %1646
  %v1648 = vsel %vm1350, %v1638, -inf
  %1649 = vmax.xlane.f32.xlu0 %v1648
  %v1650 = vpop.xlane.xlu0 %1649
  %v1651 = vsel %vm1350, %v1639, -inf
  %1652 = vmax.xlane.f32.xlu0 %v1651
  %v1653 = vpop.xlane.xlu0 %1652
  %v1654 = vsel %vm1350, %v1640, -inf
  %1655 = vmax.xlane.f32.xlu0 %v1654
  %v1656 = vpop.xlane.xlu0 %1655
  %v1657 = vsel %vm1350, %v1641, -inf
  %1658 = vmax.xlane.f32.xlu0 %v1657
  %v1659 = vpop.xlane.xlu0 %1658
  %v1660 = vsel %vm1350, %v1642, -inf
  %1661 = vmax.xlane.f32.xlu0 %v1660
  %v1662 = vpop.xlane.xlu0 %1661
  %v1663 = vsel %vm1350, %v1643, -inf
  %1664 = vmax.xlane.f32.xlu0 %v1663
  %v1665 = vpop.xlane.xlu0 %1664
  %v1666 = vsel %vm1350, %v1644, -inf
  %1667 = vmax.xlane.f32.xlu0 %v1666
  %v1668 = vpop.xlane.xlu0 %1667
  %v1669 = vsub.f32 %v1637, %v1647
  %v1670 = vsub.f32 %v1638, %v1650
  %v1671 = vsub.f32 %v1639, %v1653
  %v1672 = vsub.f32 %v1640, %v1656
  %v1673 = vsub.f32 %v1641, %v1659
  %v1674 = vsub.f32 %v1642, %v1662
  %v1675 = vsub.f32 %v1643, %v1665
  %v1676 = vsub.f32 %v1644, %v1668
  %v1677 = vmul.f32 %v1669, 1.442695
  %v1678 = vpow.pop %v1677
  %v1679 = vmul.f32 %v1670, 1.442695
  %v1680 = vpow.pop %v1679
  %v1681 = vmul.f32 %v1671, 1.442695
  %v1682 = vpow.pop %v1681
  %v1683 = vmul.f32 %v1672, 1.442695
  %v1684 = vpow.pop %v1683
  %v1685 = vmul.f32 %v1673, 1.442695
  %v1686 = vpow.pop %v1685
  %v1687 = vmul.f32 %v1674, 1.442695
  %v1688 = vpow.pop %v1687
  %v1689 = vmul.f32 %v1675, 1.442695
  %v1690 = vpow.pop %v1689
  %v1691 = vmul.f32 %v1676, 1.442695
  %v1692 = vpow.pop %v1691
  %v1693 = vsel %vm1350, %v1678, 0.0
  %1694 = vadd.xlane.f32.xlu0 %v1693
  %v1695 = vpop.xlane.xlu0 %1694
  %v1696 = vsel %vm1350, %v1680, 0.0
  %1697 = vadd.xlane.f32.xlu0 %v1696
  %v1698 = vpop.xlane.xlu0 %1697
  %v1699 = vsel %vm1350, %v1682, 0.0
  %1700 = vadd.xlane.f32.xlu0 %v1699
  %v1701 = vpop.xlane.xlu0 %1700
  %v1702 = vsel %vm1350, %v1684, 0.0
  %1703 = vadd.xlane.f32.xlu0 %v1702
  %v1704 = vpop.xlane.xlu0 %1703
  %v1705 = vsel %vm1350, %v1686, 0.0
  %1706 = vadd.xlane.f32.xlu0 %v1705
  %v1707 = vpop.xlane.xlu0 %1706
  %v1708 = vsel %vm1350, %v1688, 0.0
  %1709 = vadd.xlane.f32.xlu0 %v1708
  %v1710 = vpop.xlane.xlu0 %1709
  %v1711 = vsel %vm1350, %v1690, 0.0
  %1712 = vadd.xlane.f32.xlu0 %v1711
  %v1713 = vpop.xlane.xlu0 %1712
  %v1714 = vsel %vm1350, %v1692, 0.0
  %1715 = vadd.xlane.f32.xlu0 %v1714
  %v1716 = vpop.xlane.xlu0 %1715
  %v1717 = vrcp.pop %v1695
  %v1718 = vrcp.pop %v1698
  %v1719 = vrcp.pop %v1701
  %v1720 = vrcp.pop %v1704
  %v1721 = vrcp.pop %v1707
  %v1722 = vrcp.pop %v1710
  %v1723 = vrcp.pop %v1713
  %v1724 = vrcp.pop %v1716
  %1726 = vrot.lane.b32.xlu0 %v911, 64
  %v1727 = vpop.permute.xlu0 %1726
  %v1729 = vmul.f32 %v1198, %v1727
  %v1730 = vmul.f32 %v1201, %v1727
  %v1731 = vmul.f32 %v1204, %v1727
  %v1732 = vmul.f32 %v1207, %v1727
  %v1733 = vmul.f32 %v1210, %v1727
  %v1734 = vmul.f32 %v1213, %v1727
  %v1735 = vmul.f32 %v1216, %v1727
  %v1736 = vmul.f32 %v1219, %v1727
  %1745 = vrot.lane.b32.xlu0 %v1729, 64
  %v1746 = vpop.permute.xlu0 %1745
  %1747 = vrot.lane.b32.xlu0 %v1730, 64
  %v1748 = vpop.permute.xlu0 %1747
  %1749 = vrot.lane.b32.xlu0 %v1731, 64
  %v1750 = vpop.permute.xlu0 %1749
  %1751 = vrot.lane.b32.xlu0 %v1732, 64
  %v1752 = vpop.permute.xlu0 %1751
  %1753 = vrot.lane.b32.xlu0 %v1733, 64
  %v1754 = vpop.permute.xlu0 %1753
  %1755 = vrot.lane.b32.xlu0 %v1734, 64
  %v1756 = vpop.permute.xlu0 %1755
  %1757 = vrot.lane.b32.xlu0 %v1735, 64
  %v1758 = vpop.permute.xlu0 %1757
  %1759 = vrot.lane.b32.xlu0 %v1736, 64
  %v1760 = vpop.permute.xlu0 %1759
  %v1770 = vsel %vm1350, %v1678, 0
  %v1773 = vsel %vm1350, %v1680, 0
  %v1776 = vsel %vm1350, %v1682, 0
  %v1779 = vsel %vm1350, %v1684, 0
  %v1782 = vsel %vm1350, %v1686, 0
  %v1785 = vsel %vm1350, %v1688, 0
  %v1788 = vsel %vm1350, %v1690, 0
  %v1791 = vsel %vm1350, %v1692, 0
  %1793 = vmatpush.msra.mxu0 0.0
  %1794 = vmatpush.msra.mxu0 0.0
  %1795 = vmatpush.msra.mxu0 0.0
  %1796 = vmatpush.msra.mxu0 0.0
  %1797 = vmatpush.msra.mxu0 0.0
  %1798 = vmatpush.msra.mxu0 0.0
  %1799 = vmatpush.msra.mxu0 0.0
  %1800 = vmatpush.msra.mxu0 0.0
  %1801 = vmatpush.msra.mxu0 %v1760
  %1802 = vmatpush.msra.mxu0 %v1758
  %1803 = vmatpush.msra.mxu0 %v1756
  %1804 = vmatpush.msra.mxu0 %v1754
  %1805 = vmatpush.msra.mxu0 %v1752
  %1806 = vmatpush.msra.mxu0 %v1750
  %1807 = vmatpush.msra.mxu0 %v1748
  %1808 = vmatpush.msra.mxu0 %v1746
  %1809 = vmatmul.f32.gmra.mxu0 %v1770
  %v1810 = vpop.f32.mrf.mxu0
  %v1811 = vadd.f32 0.0, %v1810
  %1812 = vmatmul.f32.gmra.mxu0 %v1773
  %v1813 = vpop.f32.mrf.mxu0
  %v1814 = vadd.f32 0.0, %v1813
  %1815 = vmatmul.f32.gmra.mxu0 %v1776
  %v1816 = vpop.f32.mrf.mxu0
  %v1817 = vadd.f32 0.0, %v1816
  %1818 = vmatmul.f32.gmra.mxu0 %v1779
  %v1819 = vpop.f32.mrf.mxu0
  %v1820 = vadd.f32 0.0, %v1819
  %1821 = vmatmul.f32.gmra.mxu0 %v1782
  %v1822 = vpop.f32.mrf.mxu0
  %v1823 = vadd.f32 0.0, %v1822
  %1824 = vmatmul.f32.gmra.mxu0 %v1785
  %v1825 = vpop.f32.mrf.mxu0
  %v1826 = vadd.f32 0.0, %v1825
  %1827 = vmatmul.f32.gmra.mxu0 %v1788
  %v1828 = vpop.f32.mrf.mxu0
  %v1829 = vadd.f32 0.0, %v1828
  %1830 = vmatmul.f32.gmra.mxu0 %v1791
  %v1831 = vpop.f32.mrf.mxu0
  %v1832 = vadd.f32 0.0, %v1831
  %1833 = vdwg.mxu0
  %v1834 = vmul.f32 %v1811, %v1717
  %v1835 = vmul.f32 %v1814, %v1718
  %v1836 = vmul.f32 %v1817, %v1719
  %v1837 = vmul.f32 %v1820, %v1720
  %v1838 = vmul.f32 %v1823, %v1721
  %v1839 = vmul.f32 %v1826, %v1722
  %v1840 = vmul.f32 %v1829, %v1723
  %v1841 = vmul.f32 %v1832, %v1724
  %v1842 = vadd.f32 %v1548, %v1834
  %v1843 = vadd.f32 %v1549, %v1835
  %v1844 = vadd.f32 %v1550, %v1836
  %v1845 = vadd.f32 %v1551, %v1837
  %v1846 = vadd.f32 %v1552, %v1838
  %v1847 = vadd.f32 %v1553, %v1839
  %v1848 = vadd.f32 %v1554, %v1840
  %v1849 = vadd.f32 %v1555, %v1841
  %v1850 = vld [vmem:[%s2 + $0x140] sm:$0xff]
  %v1851 = vld [vmem:[%s2 + $0x150] sm:$0xff]
  %v1852 = vld [vmem:[%s2 + $0x160] sm:$0xff]
  %v1853 = vld [vmem:[%s2 + $0x170] sm:$0xff]
  %v1854 = vld [vmem:[%s2 + $0x3c5] ss:$0 sm:$0xff]
  %v1856 = vsel %vm248, %v1842, 0
  %v1859 = vsel %vm248, %v1843, 0
  %v1862 = vsel %vm248, %v1844, 0
  %v1865 = vsel %vm248, %v1845, 0
  %v1868 = vsel %vm248, %v1846, 0
  %v1871 = vsel %vm248, %v1847, 0
  %v1874 = vsel %vm248, %v1848, 0
  %v1877 = vsel %vm248, %v1849, 0
  %1879 = vmatpush.msra.mxu0 0.0
  %1880 = vmatpush.msra.mxu0 0.0
  %1881 = vmatpush.msra.mxu0 0.0
  %1882 = vmatpush.msra.mxu0 0.0
  %1883 = vmatpush.msra.mxu0 0.0
  %1884 = vmatpush.msra.mxu0 0.0
  %1885 = vmatpush.msra.mxu0 0.0
  %1886 = vmatpush.msra.mxu0 0.0
  %1887 = vmatpush.msra.mxu0 0.0
  %1888 = vmatpush.msra.mxu0 0.0
  %1889 = vmatpush.msra.mxu0 0.0
  %1890 = vmatpush.msra.mxu0 0.0
  %1891 = vmatpush.msra.mxu0 %v1853
  %1892 = vmatpush.msra.mxu0 %v1852
  %1893 = vmatpush.msra.mxu0 %v1851
  %1894 = vmatpush.msra.mxu0 %v1850
  %1895 = vmatmul.f32.gmra.mxu0 %v1856
  %v1896 = vpop.f32.mrf.mxu0
  %v1897 = vadd.f32 %v1854, %v1896
  %1898 = vmatmul.f32.gmra.mxu0 %v1859
  %v1899 = vpop.f32.mrf.mxu0
  %v1900 = vadd.f32 %v1854, %v1899
  %1901 = vmatmul.f32.gmra.mxu0 %v1862
  %v1902 = vpop.f32.mrf.mxu0
  %v1903 = vadd.f32 %v1854, %v1902
  %1904 = vmatmul.f32.gmra.mxu0 %v1865
  %v1905 = vpop.f32.mrf.mxu0
  %v1906 = vadd.f32 %v1854, %v1905
  %1907 = vmatmul.f32.gmra.mxu0 %v1868
  %v1908 = vpop.f32.mrf.mxu0
  %v1909 = vadd.f32 %v1854, %v1908
  %1910 = vmatmul.f32.gmra.mxu0 %v1871
  %v1911 = vpop.f32.mrf.mxu0
  %v1912 = vadd.f32 %v1854, %v1911
  %1913 = vmatmul.f32.gmra.mxu0 %v1874
  %v1914 = vpop.f32.mrf.mxu0
  %v1915 = vadd.f32 %v1854, %v1914
  %1916 = vmatmul.f32.gmra.mxu0 %v1877
  %v1917 = vpop.f32.mrf.mxu0
  %v1918 = vadd.f32 %v1854, %v1917
  %1919 = vdwg.mxu0
  %1928 = vrot.lane.b32.xlu0 %v1897, 64
  %v1929 = vpop.permute.xlu0 %1928
  %1930 = vrot.lane.b32.xlu0 %v1900, 64
  %v1931 = vpop.permute.xlu0 %1930
  %1932 = vrot.lane.b32.xlu0 %v1903, 64
  %v1933 = vpop.permute.xlu0 %1932
  %1934 = vrot.lane.b32.xlu0 %v1906, 64
  %v1935 = vpop.permute.xlu0 %1934
  %1936 = vrot.lane.b32.xlu0 %v1909, 64
  %v1937 = vpop.permute.xlu0 %1936
  %1938 = vrot.lane.b32.xlu0 %v1912, 64
  %v1939 = vpop.permute.xlu0 %1938
  %1940 = vrot.lane.b32.xlu0 %v1915, 64
  %v1941 = vpop.permute.xlu0 %1940
  %1942 = vrot.lane.b32.xlu0 %v1918, 64
  %v1943 = vpop.permute.xlu0 %1942
  %v1952 = vmul.f32 %v753, %v1929
  %v1953 = vmul.f32 %v756, %v1931
  %v1954 = vmul.f32 %v759, %v1933
  %v1955 = vmul.f32 %v762, %v1935
  %v1956 = vmul.f32 %v765, %v1937
  %v1957 = vmul.f32 %v768, %v1939
  %v1958 = vmul.f32 %v771, %v1941
  %v1959 = vmul.f32 %v774, %v1943
  %1968 = vrot.lane.b32.xlu0 %v1952, 64
  %v1969 = vpop.permute.xlu0 %1968
  %1970 = vrot.lane.b32.xlu0 %v1953, 64
  %v1971 = vpop.permute.xlu0 %1970
  %1972 = vrot.lane.b32.xlu0 %v1954, 64
  %v1973 = vpop.permute.xlu0 %1972
  %1974 = vrot.lane.b32.xlu0 %v1955, 64
  %v1975 = vpop.permute.xlu0 %1974
  %1976 = vrot.lane.b32.xlu0 %v1956, 64
  %v1977 = vpop.permute.xlu0 %1976
  %1978 = vrot.lane.b32.xlu0 %v1957, 64
  %v1979 = vpop.permute.xlu0 %1978
  %1980 = vrot.lane.b32.xlu0 %v1958, 64
  %v1981 = vpop.permute.xlu0 %1980
  %1982 = vrot.lane.b32.xlu0 %v1959, 64
  %v1983 = vpop.permute.xlu0 %1982
  %v1992 = vadd.f32 %v204, %v1969
  %v1993 = vadd.f32 %v207, %v1971
  %v1994 = vadd.f32 %v210, %v1973
  %v1995 = vadd.f32 %v213, %v1975
  %v1996 = vadd.f32 %v216, %v1977
  %v1997 = vadd.f32 %v219, %v1979
  %v1998 = vadd.f32 %v222, %v1981
  %v1999 = vadd.f32 %v225, %v1983
  %v2000 = vsel %vm248, %v1992, 0.0
  %2001 = vadd.xlane.f32.xlu0 %v2000
  %v2002 = vpop.xlane.xlu0 %2001
  %v2003 = vsel %vm248, %v1993, 0.0
  %2004 = vadd.xlane.f32.xlu0 %v2003
  %v2005 = vpop.xlane.xlu0 %2004
  %v2006 = vsel %vm248, %v1994, 0.0
  %2007 = vadd.xlane.f32.xlu0 %v2006
  %v2008 = vpop.xlane.xlu0 %2007
  %v2009 = vsel %vm248, %v1995, 0.0
  %2010 = vadd.xlane.f32.xlu0 %v2009
  %v2011 = vpop.xlane.xlu0 %2010
  %v2012 = vsel %vm248, %v1996, 0.0
  %2013 = vadd.xlane.f32.xlu0 %v2012
  %v2014 = vpop.xlane.xlu0 %2013
  %v2015 = vsel %vm248, %v1997, 0.0
  %2016 = vadd.xlane.f32.xlu0 %v2015
  %v2017 = vpop.xlane.xlu0 %2016
  %v2018 = vsel %vm248, %v1998, 0.0
  %2019 = vadd.xlane.f32.xlu0 %v2018
  %v2020 = vpop.xlane.xlu0 %2019
  %v2021 = vsel %vm248, %v1999, 0.0
  %2022 = vadd.xlane.f32.xlu0 %v2021
  %v2023 = vpop.xlane.xlu0 %2022
  %v2024 = vmul.f32 %v2002, %v942
  %v2025 = vmul.f32 %v2005, %v942
  %v2026 = vmul.f32 %v2008, %v942
  %v2027 = vmul.f32 %v2011, %v942
  %v2028 = vmul.f32 %v2014, %v942
  %v2029 = vmul.f32 %v2017, %v942
  %v2030 = vmul.f32 %v2020, %v942
  %v2031 = vmul.f32 %v2023, %v942
  %v2032 = vsub.f32 %v1992, %v2024
  %v2033 = vsub.f32 %v1993, %v2025
  %v2034 = vsub.f32 %v1994, %v2026
  %v2035 = vsub.f32 %v1995, %v2027
  %v2036 = vsub.f32 %v1996, %v2028
  %v2037 = vsub.f32 %v1997, %v2029
  %v2038 = vsub.f32 %v1998, %v2030
  %v2039 = vsub.f32 %v1999, %v2031
  %v2040 = vmul.f32 %v2032, %v2032
  %v2041 = vmul.f32 %v2033, %v2033
  %v2042 = vmul.f32 %v2034, %v2034
  %v2043 = vmul.f32 %v2035, %v2035
  %v2044 = vmul.f32 %v2036, %v2036
  %v2045 = vmul.f32 %v2037, %v2037
  %v2046 = vmul.f32 %v2038, %v2038
  %v2047 = vmul.f32 %v2039, %v2039
  %v2048 = vsel %vm248, %v2040, 0.0
  %2049 = vadd.xlane.f32.xlu0 %v2048
  %v2050 = vpop.xlane.xlu0 %2049
  %v2051 = vsel %vm248, %v2041, 0.0
  %2052 = vadd.xlane.f32.xlu0 %v2051
  %v2053 = vpop.xlane.xlu0 %2052
  %v2054 = vsel %vm248, %v2042, 0.0
  %2055 = vadd.xlane.f32.xlu0 %v2054
  %v2056 = vpop.xlane.xlu0 %2055
  %v2057 = vsel %vm248, %v2043, 0.0
  %2058 = vadd.xlane.f32.xlu0 %v2057
  %v2059 = vpop.xlane.xlu0 %2058
  %v2060 = vsel %vm248, %v2044, 0.0
  %2061 = vadd.xlane.f32.xlu0 %v2060
  %v2062 = vpop.xlane.xlu0 %2061
  %v2063 = vsel %vm248, %v2045, 0.0
  %2064 = vadd.xlane.f32.xlu0 %v2063
  %v2065 = vpop.xlane.xlu0 %2064
  %v2066 = vsel %vm248, %v2046, 0.0
  %2067 = vadd.xlane.f32.xlu0 %v2066
  %v2068 = vpop.xlane.xlu0 %2067
  %v2069 = vsel %vm248, %v2047, 0.0
  %2070 = vadd.xlane.f32.xlu0 %v2069
  %v2071 = vpop.xlane.xlu0 %2070
  %v2072 = vmul.f32 %v2050, %v942
  %v2073 = vmul.f32 %v2053, %v942
  %v2074 = vmul.f32 %v2056, %v942
  %v2075 = vmul.f32 %v2059, %v942
  %v2076 = vmul.f32 %v2062, %v942
  %v2077 = vmul.f32 %v2065, %v942
  %v2078 = vmul.f32 %v2068, %v942
  %v2079 = vmul.f32 %v2071, %v942
  %v2080 = vadd.f32 %v2072, 1e-06
  %v2081 = vadd.f32 %v2073, 1e-06
  %v2082 = vadd.f32 %v2074, 1e-06
  %v2083 = vadd.f32 %v2075, 1e-06
  %v2084 = vadd.f32 %v2076, 1e-06
  %v2085 = vadd.f32 %v2077, 1e-06
  %v2086 = vadd.f32 %v2078, 1e-06
  %v2087 = vadd.f32 %v2079, 1e-06
  %v2088 = vrsqrt.pop %v2080
  %v2089 = vmul.f32 %v2088, %v2080
  %v2090 = vmul.f32 %v2089, %v2088
  %v2091 = vmul.f32 0.5, %v2090
  %v2092 = vsub.f32 1.5, %v2091
  %v2093 = vmul.f32 %v2088, %v2092
  %vm2094 = vweird.f32 %v2080
  %vm2095 = vweird.f32 %v2088
  %vm2096 = vmor %vm2094, %vm2095
  %v2097 = vsel %vm2096, %v2088, %v2093
  %v2098 = vrsqrt.pop %v2081
  %v2099 = vmul.f32 %v2098, %v2081
  %v2100 = vmul.f32 %v2099, %v2098
  %v2101 = vmul.f32 0.5, %v2100
  %v2102 = vsub.f32 1.5, %v2101
  %v2103 = vmul.f32 %v2098, %v2102
  %vm2104 = vweird.f32 %v2081
  %vm2105 = vweird.f32 %v2098
  %vm2106 = vmor %vm2104, %vm2105
  %v2107 = vsel %vm2106, %v2098, %v2103
  %v2108 = vrsqrt.pop %v2082
  %v2109 = vmul.f32 %v2108, %v2082
  %v2110 = vmul.f32 %v2109, %v2108
  %v2111 = vmul.f32 0.5, %v2110
  %v2112 = vsub.f32 1.5, %v2111
  %v2113 = vmul.f32 %v2108, %v2112
  %vm2114 = vweird.f32 %v2082
  %vm2115 = vweird.f32 %v2108
  %vm2116 = vmor %vm2114, %vm2115
  %v2117 = vsel %vm2116, %v2108, %v2113
  %v2118 = vrsqrt.pop %v2083
  %v2119 = vmul.f32 %v2118, %v2083
  %v2120 = vmul.f32 %v2119, %v2118
  %v2121 = vmul.f32 0.5, %v2120
  %v2122 = vsub.f32 1.5, %v2121
  %v2123 = vmul.f32 %v2118, %v2122
  %vm2124 = vweird.f32 %v2083
  %vm2125 = vweird.f32 %v2118
  %vm2126 = vmor %vm2124, %vm2125
  %v2127 = vsel %vm2126, %v2118, %v2123
  %v2128 = vrsqrt.pop %v2084
  %v2129 = vmul.f32 %v2128, %v2084
  %v2130 = vmul.f32 %v2129, %v2128
  %v2131 = vmul.f32 0.5, %v2130
  %v2132 = vsub.f32 1.5, %v2131
  %v2133 = vmul.f32 %v2128, %v2132
  %vm2134 = vweird.f32 %v2084
  %vm2135 = vweird.f32 %v2128
  %vm2136 = vmor %vm2134, %vm2135
  %v2137 = vsel %vm2136, %v2128, %v2133
  %v2138 = vrsqrt.pop %v2085
  %v2139 = vmul.f32 %v2138, %v2085
  %v2140 = vmul.f32 %v2139, %v2138
  %v2141 = vmul.f32 0.5, %v2140
  %v2142 = vsub.f32 1.5, %v2141
  %v2143 = vmul.f32 %v2138, %v2142
  %vm2144 = vweird.f32 %v2085
  %vm2145 = vweird.f32 %v2138
  %vm2146 = vmor %vm2144, %vm2145
  %v2147 = vsel %vm2146, %v2138, %v2143
  %v2148 = vrsqrt.pop %v2086
  %v2149 = vmul.f32 %v2148, %v2086
  %v2150 = vmul.f32 %v2149, %v2148
  %v2151 = vmul.f32 0.5, %v2150
  %v2152 = vsub.f32 1.5, %v2151
  %v2153 = vmul.f32 %v2148, %v2152
  %vm2154 = vweird.f32 %v2086
  %vm2155 = vweird.f32 %v2148
  %vm2156 = vmor %vm2154, %vm2155
  %v2157 = vsel %vm2156, %v2148, %v2153
  %v2158 = vrsqrt.pop %v2087
  %v2159 = vmul.f32 %v2158, %v2087
  %v2160 = vmul.f32 %v2159, %v2158
  %v2161 = vmul.f32 0.5, %v2160
  %v2162 = vsub.f32 1.5, %v2161
  %v2163 = vmul.f32 %v2158, %v2162
  %vm2164 = vweird.f32 %v2087
  %vm2165 = vweird.f32 %v2158
  %vm2166 = vmor %vm2164, %vm2165
  %v2167 = vsel %vm2166, %v2158, %v2163
  %v2168 = vmul.f32 %v2032, %v2097
  %v2169 = vmul.f32 %v2033, %v2107
  %v2170 = vmul.f32 %v2034, %v2117
  %v2171 = vmul.f32 %v2035, %v2127
  %v2172 = vmul.f32 %v2036, %v2137
  %v2173 = vmul.f32 %v2037, %v2147
  %v2174 = vmul.f32 %v2038, %v2157
  %v2175 = vmul.f32 %v2039, %v2167
  %v2176 = vld [vmem:[%s2 + $0x180] sm:$0xff]
  %v2177 = vld [vmem:[%s2 + $0x190] sm:$0xff]
  %v2178 = vld [vmem:[%s2 + $0x1a0] sm:$0xff]
  %v2179 = vld [vmem:[%s2 + $0x1b0] sm:$0xff]
  %v2180 = vld [vmem:[%s2 + $0x3c6] ss:$0 sm:$0xff]
  %v2182 = vsel %vm248, %v2168, 0
  %v2185 = vsel %vm248, %v2169, 0
  %v2188 = vsel %vm248, %v2170, 0
  %v2191 = vsel %vm248, %v2171, 0
  %v2194 = vsel %vm248, %v2172, 0
  %v2197 = vsel %vm248, %v2173, 0
  %v2200 = vsel %vm248, %v2174, 0
  %v2203 = vsel %vm248, %v2175, 0
  %2205 = vmatpush.msra.mxu0 0.0
  %2206 = vmatpush.msra.mxu0 0.0
  %2207 = vmatpush.msra.mxu0 0.0
  %2208 = vmatpush.msra.mxu0 0.0
  %2209 = vmatpush.msra.mxu0 0.0
  %2210 = vmatpush.msra.mxu0 0.0
  %2211 = vmatpush.msra.mxu0 0.0
  %2212 = vmatpush.msra.mxu0 0.0
  %2213 = vmatpush.msra.mxu0 0.0
  %2214 = vmatpush.msra.mxu0 0.0
  %2215 = vmatpush.msra.mxu0 0.0
  %2216 = vmatpush.msra.mxu0 0.0
  %2217 = vmatpush.msra.mxu0 %v2179
  %2218 = vmatpush.msra.mxu0 %v2178
  %2219 = vmatpush.msra.mxu0 %v2177
  %2220 = vmatpush.msra.mxu0 %v2176
  %2221 = vmatmul.f32.gmra.mxu0 %v2182
  %v2222 = vpop.f32.mrf.mxu0
  %v2223 = vadd.f32 %v2180, %v2222
  %2224 = vmatmul.f32.gmra.mxu0 %v2185
  %v2225 = vpop.f32.mrf.mxu0
  %v2226 = vadd.f32 %v2180, %v2225
  %2227 = vmatmul.f32.gmra.mxu0 %v2188
  %v2228 = vpop.f32.mrf.mxu0
  %v2229 = vadd.f32 %v2180, %v2228
  %2230 = vmatmul.f32.gmra.mxu0 %v2191
  %v2231 = vpop.f32.mrf.mxu0
  %v2232 = vadd.f32 %v2180, %v2231
  %2233 = vmatmul.f32.gmra.mxu0 %v2194
  %v2234 = vpop.f32.mrf.mxu0
  %v2235 = vadd.f32 %v2180, %v2234
  %2236 = vmatmul.f32.gmra.mxu0 %v2197
  %v2237 = vpop.f32.mrf.mxu0
  %v2238 = vadd.f32 %v2180, %v2237
  %2239 = vmatmul.f32.gmra.mxu0 %v2200
  %v2240 = vpop.f32.mrf.mxu0
  %v2241 = vadd.f32 %v2180, %v2240
  %2242 = vmatmul.f32.gmra.mxu0 %v2203
  %v2243 = vpop.f32.mrf.mxu0
  %v2244 = vadd.f32 %v2180, %v2243
  %2245 = vdwg.mxu0
  %v2246 = vld [vmem:[%s2 + $0x1c0] sm:$0xff]
  %v2247 = vld [vmem:[%s2 + $0x1d0] sm:$0xff]
  %v2248 = vld [vmem:[%s2 + $0x1e0] sm:$0xff]
  %v2249 = vld [vmem:[%s2 + $0x1f0] sm:$0xff]
  %v2250 = vld [vmem:[%s2 + $0x3c7] ss:$0 sm:$0xff]
  %v2252 = vsel %vm248, %v22, 0
  %v2255 = vsel %vm248, %v23, 0
  %2257 = vmatpush.msra.mxu0 0.0
  %2258 = vmatpush.msra.mxu0 0.0
  %2259 = vmatpush.msra.mxu0 0.0
  %2260 = vmatpush.msra.mxu0 0.0
  %2261 = vmatpush.msra.mxu0 0.0
  %2262 = vmatpush.msra.mxu0 0.0
  %2263 = vmatpush.msra.mxu0 0.0
  %2264 = vmatpush.msra.mxu0 0.0
  %2265 = vmatpush.msra.mxu0 0.0
  %2266 = vmatpush.msra.mxu0 0.0
  %2267 = vmatpush.msra.mxu0 0.0
  %2268 = vmatpush.msra.mxu0 0.0
  %2269 = vmatpush.msra.mxu0 %v2249
  %2270 = vmatpush.msra.mxu0 %v2248
  %2271 = vmatpush.msra.mxu0 %v2247
  %2272 = vmatpush.msra.mxu0 %v2246
  %2273 = vmatmul.f32.gmra.mxu0 %v2252
  %v2274 = vpop.f32.mrf.mxu0
  %v2275 = vadd.f32 %v2250, %v2274
  %2276 = vmatmul.f32.gmra.mxu0 %v2255
  %v2277 = vpop.f32.mrf.mxu0
  %v2278 = vadd.f32 %v2250, %v2277
  %2279 = vdwg.mxu0
  %v2280 = vmul.f32 %v2223, %v906
  %v2281 = vmul.f32 %v2226, %v906
  %v2282 = vmul.f32 %v2229, %v906
  %v2283 = vmul.f32 %v2232, %v906
  %v2284 = vmul.f32 %v2235, %v906
  %v2285 = vmul.f32 %v2238, %v906
  %v2286 = vmul.f32 %v2241, %v906
  %v2287 = vmul.f32 %v2244, %v906
  %v2289 = vsel %vm248, %v2280, 0
  %v2292 = vsel %vm248, %v2281, 0
  %v2295 = vsel %vm248, %v2282, 0
  %v2298 = vsel %vm248, %v2283, 0
  %v2301 = vsel %vm248, %v2284, 0
  %v2304 = vsel %vm248, %v2285, 0
  %v2307 = vsel %vm248, %v2286, 0
  %v2310 = vsel %vm248, %v2287, 0
  %v2313 = vsel %vm248, %v2275, 0
  %v2316 = vsel %vm248, %v2278, 0
  %2318 = vmatpush.xpose.msra.mxu0 0.0
  %2319 = vmatpush.xpose.msra.mxu0 0.0
  %2320 = vmatpush.xpose.msra.mxu0 0.0
  %2321 = vmatpush.xpose.msra.mxu0 0.0
  %2322 = vmatpush.xpose.msra.mxu0 0.0
  %2323 = vmatpush.xpose.msra.mxu0 0.0
  %2324 = vmatpush.xpose.msra.mxu0 0.0
  %2325 = vmatpush.xpose.msra.mxu0 0.0
  %2326 = vmatpush.xpose.msra.mxu0 0.0
  %2327 = vmatpush.xpose.msra.mxu0 0.0
  %2328 = vmatpush.xpose.msra.mxu0 0.0
  %2329 = vmatpush.xpose.msra.mxu0 0.0
  %2330 = vmatpush.xpose.msra.mxu0 0.0
  %2331 = vmatpush.xpose.msra.mxu0 0.0
  %2332 = vmatpush.xpose.msra.mxu0 %v2316
  %2333 = vmatpush.xpose.msra.mxu0 %v2313
  %2334 = vmatmul.f32.gmra.mxu0 %v2289
  %v2335 = vpop.f32.mrf.mxu0
  %v2336 = vadd.f32 0.0, %v2335
  %2337 = vmatmul.f32.gmra.mxu0 %v2292
  %v2338 = vpop.f32.mrf.mxu0
  %v2339 = vadd.f32 0.0, %v2338
  %2340 = vmatmul.f32.gmra.mxu0 %v2295
  %v2341 = vpop.f32.mrf.mxu0
  %v2342 = vadd.f32 0.0, %v2341
  %2343 = vmatmul.f32.gmra.mxu0 %v2298
  %v2344 = vpop.f32.mrf.mxu0
  %v2345 = vadd.f32 0.0, %v2344
  %2346 = vmatmul.f32.gmra.mxu0 %v2301
  %v2347 = vpop.f32.mrf.mxu0
  %v2348 = vadd.f32 0.0, %v2347
  %2349 = vmatmul.f32.gmra.mxu0 %v2304
  %v2350 = vpop.f32.mrf.mxu0
  %v2351 = vadd.f32 0.0, %v2350
  %2352 = vmatmul.f32.gmra.mxu0 %v2307
  %v2353 = vpop.f32.mrf.mxu0
  %v2354 = vadd.f32 0.0, %v2353
  %2355 = vmatmul.f32.gmra.mxu0 %v2310
  %v2356 = vpop.f32.mrf.mxu0
  %v2357 = vadd.f32 0.0, %v2356
  %2358 = vdwg.mxu0
  %v2359 = vmul.f32 %v2336, 0.25
  %v2360 = vmul.f32 %v2339, 0.25
  %v2361 = vmul.f32 %v2342, 0.25
  %v2362 = vmul.f32 %v2345, 0.25
  %v2363 = vmul.f32 %v2348, 0.25
  %v2364 = vmul.f32 %v2351, 0.25
  %v2365 = vmul.f32 %v2354, 0.25
  %v2366 = vmul.f32 %v2357, 0.25
  %v2367 = vadd.f32 %v2359, %v894
  %v2368 = vadd.f32 %v2360, %v895
  %v2369 = vadd.f32 %v2361, %v896
  %v2370 = vadd.f32 %v2362, %v897
  %v2371 = vadd.f32 %v2363, %v898
  %v2372 = vadd.f32 %v2364, %v899
  %v2373 = vadd.f32 %v2365, %v900
  %v2374 = vadd.f32 %v2366, %v901
  %vm2375 = vcmask 130048
  %v2376 = vsel %vm2375, %v2367, -inf
  %2377 = vmax.xlane.f32.xlu0 %v2376
  %v2378 = vpop.xlane.xlu0 %2377
  %v2379 = vsel %vm2375, %v2368, -inf
  %2380 = vmax.xlane.f32.xlu0 %v2379
  %v2381 = vpop.xlane.xlu0 %2380
  %v2382 = vsel %vm2375, %v2369, -inf
  %2383 = vmax.xlane.f32.xlu0 %v2382
  %v2384 = vpop.xlane.xlu0 %2383
  %v2385 = vsel %vm2375, %v2370, -inf
  %2386 = vmax.xlane.f32.xlu0 %v2385
  %v2387 = vpop.xlane.xlu0 %2386
  %v2388 = vsel %vm2375, %v2371, -inf
  %2389 = vmax.xlane.f32.xlu0 %v2388
  %v2390 = vpop.xlane.xlu0 %2389
  %v2391 = vsel %vm2375, %v2372, -inf
  %2392 = vmax.xlane.f32.xlu0 %v2391
  %v2393 = vpop.xlane.xlu0 %2392
  %v2394 = vsel %vm2375, %v2373, -inf
  %2395 = vmax.xlane.f32.xlu0 %v2394
  %v2396 = vpop.xlane.xlu0 %2395
  %v2397 = vsel %vm2375, %v2374, -inf
  %2398 = vmax.xlane.f32.xlu0 %v2397
  %v2399 = vpop.xlane.xlu0 %2398
  %v2400 = vsub.f32 %v2367, %v2378
  %v2401 = vsub.f32 %v2368, %v2381
  %v2402 = vsub.f32 %v2369, %v2384
  %v2403 = vsub.f32 %v2370, %v2387
  %v2404 = vsub.f32 %v2371, %v2390
  %v2405 = vsub.f32 %v2372, %v2393
  %v2406 = vsub.f32 %v2373, %v2396
  %v2407 = vsub.f32 %v2374, %v2399
  %v2408 = vmul.f32 %v2400, 1.442695
  %v2409 = vpow.pop %v2408
  %v2410 = vmul.f32 %v2401, 1.442695
  %v2411 = vpow.pop %v2410
  %v2412 = vmul.f32 %v2402, 1.442695
  %v2413 = vpow.pop %v2412
  %v2414 = vmul.f32 %v2403, 1.442695
  %v2415 = vpow.pop %v2414
  %v2416 = vmul.f32 %v2404, 1.442695
  %v2417 = vpow.pop %v2416
  %v2418 = vmul.f32 %v2405, 1.442695
  %v2419 = vpow.pop %v2418
  %v2420 = vmul.f32 %v2406, 1.442695
  %v2421 = vpow.pop %v2420
  %v2422 = vmul.f32 %v2407, 1.442695
  %v2423 = vpow.pop %v2422
  %v2424 = vsel %vm2375, %v2409, 0.0
  %2425 = vadd.xlane.f32.xlu0 %v2424
  %v2426 = vpop.xlane.xlu0 %2425
  %v2427 = vsel %vm2375, %v2411, 0.0
  %2428 = vadd.xlane.f32.xlu0 %v2427
  %v2429 = vpop.xlane.xlu0 %2428
  %v2430 = vsel %vm2375, %v2413, 0.0
  %2431 = vadd.xlane.f32.xlu0 %v2430
  %v2432 = vpop.xlane.xlu0 %2431
  %v2433 = vsel %vm2375, %v2415, 0.0
  %2434 = vadd.xlane.f32.xlu0 %v2433
  %v2435 = vpop.xlane.xlu0 %2434
  %v2436 = vsel %vm2375, %v2417, 0.0
  %2437 = vadd.xlane.f32.xlu0 %v2436
  %v2438 = vpop.xlane.xlu0 %2437
  %v2439 = vsel %vm2375, %v2419, 0.0
  %2440 = vadd.xlane.f32.xlu0 %v2439
  %v2441 = vpop.xlane.xlu0 %2440
  %v2442 = vsel %vm2375, %v2421, 0.0
  %2443 = vadd.xlane.f32.xlu0 %v2442
  %v2444 = vpop.xlane.xlu0 %2443
  %v2445 = vsel %vm2375, %v2423, 0.0
  %2446 = vadd.xlane.f32.xlu0 %v2445
  %v2447 = vpop.xlane.xlu0 %2446
  %v2448 = vrcp.pop %v2426
  %v2449 = vrcp.pop %v2429
  %v2450 = vrcp.pop %v2432
  %v2451 = vrcp.pop %v2435
  %v2452 = vrcp.pop %v2438
  %v2453 = vrcp.pop %v2441
  %v2454 = vrcp.pop %v2444
  %v2455 = vrcp.pop %v2447
  %2456 = vrot.lane.b32.xlu0 %v906, 32
  %v2457 = vpop.permute.xlu0 %2456
  %v2459 = vmul.f32 %v2275, %v2457
  %v2460 = vmul.f32 %v2278, %v2457
  %2463 = vrot.lane.b32.xlu0 %v2459, 96
  %v2464 = vpop.permute.xlu0 %2463
  %2465 = vrot.lane.b32.xlu0 %v2460, 96
  %v2466 = vpop.permute.xlu0 %2465
  %v2470 = vsel %vm2375, %v2409, 0
  %v2473 = vsel %vm2375, %v2411, 0
  %v2476 = vsel %vm2375, %v2413, 0
  %v2479 = vsel %vm2375, %v2415, 0
  %v2482 = vsel %vm2375, %v2417, 0
  %v2485 = vsel %vm2375, %v2419, 0
  %v2488 = vsel %vm2375, %v2421, 0
  %v2491 = vsel %vm2375, %v2423, 0
  %2493 = vmatpush.msra.mxu0 0.0
  %2494 = vmatpush.msra.mxu0 0.0
  %2495 = vmatpush.msra.mxu0 0.0
  %2496 = vmatpush.msra.mxu0 0.0
  %2497 = vmatpush.msra.mxu0 0.0
  %2498 = vmatpush.msra.mxu0 0.0
  %2499 = vmatpush.msra.mxu0 0.0
  %2500 = vmatpush.msra.mxu0 0.0
  %2501 = vmatpush.msra.mxu0 0.0
  %2502 = vmatpush.msra.mxu0 0.0
  %2503 = vmatpush.msra.mxu0 0.0
  %2504 = vmatpush.msra.mxu0 0.0
  %2505 = vmatpush.msra.mxu0 0.0
  %2506 = vmatpush.msra.mxu0 0.0
  %2507 = vmatpush.msra.mxu0 %v2466
  %2508 = vmatpush.msra.mxu0 %v2464
  %2509 = vmatmul.f32.gmra.mxu0 %v2470
  %v2510 = vpop.f32.mrf.mxu0
  %v2511 = vadd.f32 0.0, %v2510
  %2512 = vmatmul.f32.gmra.mxu0 %v2473
  %v2513 = vpop.f32.mrf.mxu0
  %v2514 = vadd.f32 0.0, %v2513
  %2515 = vmatmul.f32.gmra.mxu0 %v2476
  %v2516 = vpop.f32.mrf.mxu0
  %v2517 = vadd.f32 0.0, %v2516
  %2518 = vmatmul.f32.gmra.mxu0 %v2479
  %v2519 = vpop.f32.mrf.mxu0
  %v2520 = vadd.f32 0.0, %v2519
  %2521 = vmatmul.f32.gmra.mxu0 %v2482
  %v2522 = vpop.f32.mrf.mxu0
  %v2523 = vadd.f32 0.0, %v2522
  %2524 = vmatmul.f32.gmra.mxu0 %v2485
  %v2525 = vpop.f32.mrf.mxu0
  %v2526 = vadd.f32 0.0, %v2525
  %2527 = vmatmul.f32.gmra.mxu0 %v2488
  %v2528 = vpop.f32.mrf.mxu0
  %v2529 = vadd.f32 0.0, %v2528
  %2530 = vmatmul.f32.gmra.mxu0 %v2491
  %v2531 = vpop.f32.mrf.mxu0
  %v2532 = vadd.f32 0.0, %v2531
  %2533 = vdwg.mxu0
  %v2534 = vmul.f32 %v2511, %v2448
  %v2535 = vmul.f32 %v2514, %v2449
  %v2536 = vmul.f32 %v2517, %v2450
  %v2537 = vmul.f32 %v2520, %v2451
  %v2538 = vmul.f32 %v2523, %v2452
  %v2539 = vmul.f32 %v2526, %v2453
  %v2540 = vmul.f32 %v2529, %v2454
  %v2541 = vmul.f32 %v2532, %v2455
  %v2542 = vadd.f32 %v2534, 0.0
  %v2543 = vadd.f32 %v2535, 0.0
  %v2544 = vadd.f32 %v2536, 0.0
  %v2545 = vadd.f32 %v2537, 0.0
  %v2546 = vadd.f32 %v2538, 0.0
  %v2547 = vadd.f32 %v2539, 0.0
  %v2548 = vadd.f32 %v2540, 0.0
  %v2549 = vadd.f32 %v2541, 0.0
  %v2550 = vmul.f32 %v2223, %v911
  %v2551 = vmul.f32 %v2226, %v911
  %v2552 = vmul.f32 %v2229, %v911
  %v2553 = vmul.f32 %v2232, %v911
  %v2554 = vmul.f32 %v2235, %v911
  %v2555 = vmul.f32 %v2238, %v911
  %v2556 = vmul.f32 %v2241, %v911
  %v2557 = vmul.f32 %v2244, %v911
  %v2559 = vsel %vm248, %v2550, 0
  %v2562 = vsel %vm248, %v2551, 0
  %v2565 = vsel %vm248, %v2552, 0
  %v2568 = vsel %vm248, %v2553, 0
  %v2571 = vsel %vm248, %v2554, 0
  %v2574 = vsel %vm248, %v2555, 0
  %v2577 = vsel %vm248, %v2556, 0
  %v2580 = vsel %vm248, %v2557, 0
  %2582 = vmatpush.xpose.msra.mxu0 0.0
  %2583 = vmatpush.xpose.msra.mxu0 0.0
  %2584 = vmatpush.xpose.msra.mxu0 0.0
  %2585 = vmatpush.xpose.msra.mxu0 0.0
  %2586 = vmatpush.xpose.msra.mxu0 0.0
  %2587 = vmatpush.xpose.msra.mxu0 0.0
  %2588 = vmatpush.xpose.msra.mxu0 0.0
  %2589 = vmatpush.xpose.msra.mxu0 0.0
  %2590 = vmatpush.xpose.msra.mxu0 0.0
  %2591 = vmatpush.xpose.msra.mxu0 0.0
  %2592 = vmatpush.xpose.msra.mxu0 0.0
  %2593 = vmatpush.xpose.msra.mxu0 0.0
  %2594 = vmatpush.xpose.msra.mxu0 0.0
  %2595 = vmatpush.xpose.msra.mxu0 0.0
  %2596 = vmatpush.xpose.msra.mxu0 %v2316
  %2597 = vmatpush.xpose.msra.mxu0 %v2313
  %2598 = vmatmul.f32.gmra.mxu0 %v2559
  %v2599 = vpop.f32.mrf.mxu0
  %v2600 = vadd.f32 0.0, %v2599
  %2601 = vmatmul.f32.gmra.mxu0 %v2562
  %v2602 = vpop.f32.mrf.mxu0
  %v2603 = vadd.f32 0.0, %v2602
  %2604 = vmatmul.f32.gmra.mxu0 %v2565
  %v2605 = vpop.f32.mrf.mxu0
  %v2606 = vadd.f32 0.0, %v2605
  %2607 = vmatmul.f32.gmra.mxu0 %v2568
  %v2608 = vpop.f32.mrf.mxu0
  %v2609 = vadd.f32 0.0, %v2608
  %2610 = vmatmul.f32.gmra.mxu0 %v2571
  %v2611 = vpop.f32.mrf.mxu0
  %v2612 = vadd.f32 0.0, %v2611
  %2613 = vmatmul.f32.gmra.mxu0 %v2574
  %v2614 = vpop.f32.mrf.mxu0
  %v2615 = vadd.f32 0.0, %v2614
  %2616 = vmatmul.f32.gmra.mxu0 %v2577
  %v2617 = vpop.f32.mrf.mxu0
  %v2618 = vadd.f32 0.0, %v2617
  %2619 = vmatmul.f32.gmra.mxu0 %v2580
  %v2620 = vpop.f32.mrf.mxu0
  %v2621 = vadd.f32 0.0, %v2620
  %2622 = vdwg.mxu0
  %v2623 = vmul.f32 %v2600, 0.25
  %v2624 = vmul.f32 %v2603, 0.25
  %v2625 = vmul.f32 %v2606, 0.25
  %v2626 = vmul.f32 %v2609, 0.25
  %v2627 = vmul.f32 %v2612, 0.25
  %v2628 = vmul.f32 %v2615, 0.25
  %v2629 = vmul.f32 %v2618, 0.25
  %v2630 = vmul.f32 %v2621, 0.25
  %v2631 = vadd.f32 %v2623, %v894
  %v2632 = vadd.f32 %v2624, %v895
  %v2633 = vadd.f32 %v2625, %v896
  %v2634 = vadd.f32 %v2626, %v897
  %v2635 = vadd.f32 %v2627, %v898
  %v2636 = vadd.f32 %v2628, %v899
  %v2637 = vadd.f32 %v2629, %v900
  %v2638 = vadd.f32 %v2630, %v901
  %v2639 = vsel %vm2375, %v2631, -inf
  %2640 = vmax.xlane.f32.xlu0 %v2639
  %v2641 = vpop.xlane.xlu0 %2640
  %v2642 = vsel %vm2375, %v2632, -inf
  %2643 = vmax.xlane.f32.xlu0 %v2642
  %v2644 = vpop.xlane.xlu0 %2643
  %v2645 = vsel %vm2375, %v2633, -inf
  %2646 = vmax.xlane.f32.xlu0 %v2645
  %v2647 = vpop.xlane.xlu0 %2646
  %v2648 = vsel %vm2375, %v2634, -inf
  %2649 = vmax.xlane.f32.xlu0 %v2648
  %v2650 = vpop.xlane.xlu0 %2649
  %v2651 = vsel %vm2375, %v2635, -inf
  %2652 = vmax.xlane.f32.xlu0 %v2651
  %v2653 = vpop.xlane.xlu0 %2652
  %v2654 = vsel %vm2375, %v2636, -inf
  %2655 = vmax.xlane.f32.xlu0 %v2654
  %v2656 = vpop.xlane.xlu0 %2655
  %v2657 = vsel %vm2375, %v2637, -inf
  %2658 = vmax.xlane.f32.xlu0 %v2657
  %v2659 = vpop.xlane.xlu0 %2658
  %v2660 = vsel %vm2375, %v2638, -inf
  %2661 = vmax.xlane.f32.xlu0 %v2660
  %v2662 = vpop.xlane.xlu0 %2661
  %v2663 = vsub.f32 %v2631, %v2641
  %v2664 = vsub.f32 %v2632, %v2644
  %v2665 = vsub.f32 %v2633, %v2647
  %v2666 = vsub.f32 %v2634, %v2650
  %v2667 = vsub.f32 %v2635, %v2653
  %v2668 = vsub.f32 %v2636, %v2656
  %v2669 = vsub.f32 %v2637, %v2659
  %v2670 = vsub.f32 %v2638, %v2662
  %v2671 = vmul.f32 %v2663, 1.442695
  %v2672 = vpow.pop %v2671
  %v2673 = vmul.f32 %v2664, 1.442695
  %v2674 = vpow.pop %v2673
  %v2675 = vmul.f32 %v2665, 1.442695
  %v2676 = vpow.pop %v2675
  %v2677 = vmul.f32 %v2666, 1.442695
  %v2678 = vpow.pop %v2677
  %v2679 = vmul.f32 %v2667, 1.442695
  %v2680 = vpow.pop %v2679
  %v2681 = vmul.f32 %v2668, 1.442695
  %v2682 = vpow.pop %v2681
  %v2683 = vmul.f32 %v2669, 1.442695
  %v2684 = vpow.pop %v2683
  %v2685 = vmul.f32 %v2670, 1.442695
  %v2686 = vpow.pop %v2685
  %v2687 = vsel %vm2375, %v2672, 0.0
  %2688 = vadd.xlane.f32.xlu0 %v2687
  %v2689 = vpop.xlane.xlu0 %2688
  %v2690 = vsel %vm2375, %v2674, 0.0
  %2691 = vadd.xlane.f32.xlu0 %v2690
  %v2692 = vpop.xlane.xlu0 %2691
  %v2693 = vsel %vm2375, %v2676, 0.0
  %2694 = vadd.xlane.f32.xlu0 %v2693
  %v2695 = vpop.xlane.xlu0 %2694
  %v2696 = vsel %vm2375, %v2678, 0.0
  %2697 = vadd.xlane.f32.xlu0 %v2696
  %v2698 = vpop.xlane.xlu0 %2697
  %v2699 = vsel %vm2375, %v2680, 0.0
  %2700 = vadd.xlane.f32.xlu0 %v2699
  %v2701 = vpop.xlane.xlu0 %2700
  %v2702 = vsel %vm2375, %v2682, 0.0
  %2703 = vadd.xlane.f32.xlu0 %v2702
  %v2704 = vpop.xlane.xlu0 %2703
  %v2705 = vsel %vm2375, %v2684, 0.0
  %2706 = vadd.xlane.f32.xlu0 %v2705
  %v2707 = vpop.xlane.xlu0 %2706
  %v2708 = vsel %vm2375, %v2686, 0.0
  %2709 = vadd.xlane.f32.xlu0 %v2708
  %v2710 = vpop.xlane.xlu0 %2709
  %v2711 = vrcp.pop %v2689
  %v2712 = vrcp.pop %v2692
  %v2713 = vrcp.pop %v2695
  %v2714 = vrcp.pop %v2698
  %v2715 = vrcp.pop %v2701
  %v2716 = vrcp.pop %v2704
  %v2717 = vrcp.pop %v2707
  %v2718 = vrcp.pop %v2710
  %2719 = vrot.lane.b32.xlu0 %v911, 32
  %v2720 = vpop.permute.xlu0 %2719
  %v2722 = vmul.f32 %v2275, %v2720
  %v2723 = vmul.f32 %v2278, %v2720
  %2726 = vrot.lane.b32.xlu0 %v2722, 96
  %v2727 = vpop.permute.xlu0 %2726
  %2728 = vrot.lane.b32.xlu0 %v2723, 96
  %v2729 = vpop.permute.xlu0 %2728
  %v2733 = vsel %vm2375, %v2672, 0
  %v2736 = vsel %vm2375, %v2674, 0
  %v2739 = vsel %vm2375, %v2676, 0
  %v2742 = vsel %vm2375, %v2678, 0
  %v2745 = vsel %vm2375, %v2680, 0
  %v2748 = vsel %vm2375, %v2682, 0
  %v2751 = vsel %vm2375, %v2684, 0
  %v2754 = vsel %vm2375, %v2686, 0
  %2756 = vmatpush.msra.mxu0 0.0
  %2757 = vmatpush.msra.mxu0 0.0
  %2758 = vmatpush.msra.mxu0 0.0
  %2759 = vmatpush.msra.mxu0 0.0
  %2760 = vmatpush.msra.mxu0 0.0
  %2761 = vmatpush.msra.mxu0 0.0
  %2762 = vmatpush.msra.mxu0 0.0
  %2763 = vmatpush.msra.mxu0 0.0
  %2764 = vmatpush.msra.mxu0 0.0
  %2765 = vmatpush.msra.mxu0 0.0
  %2766 = vmatpush.msra.mxu0 0.0
  %2767 = vmatpush.msra.mxu0 0.0
  %2768 = vmatpush.msra.mxu0 0.0
  %2769 = vmatpush.msra.mxu0 0.0
  %2770 = vmatpush.msra.mxu0 %v2729
  %2771 = vmatpush.msra.mxu0 %v2727
  %2772 = vmatmul.f32.gmra.mxu0 %v2733
  %v2773 = vpop.f32.mrf.mxu0
  %v2774 = vadd.f32 0.0, %v2773
  %2775 = vmatmul.f32.gmra.mxu0 %v2736
  %v2776 = vpop.f32.mrf.mxu0
  %v2777 = vadd.f32 0.0, %v2776
  %2778 = vmatmul.f32.gmra.mxu0 %v2739
  %v2779 = vpop.f32.mrf.mxu0
  %v2780 = vadd.f32 0.0, %v2779
  %2781 = vmatmul.f32.gmra.mxu0 %v2742
  %v2782 = vpop.f32.mrf.mxu0
  %v2783 = vadd.f32 0.0, %v2782
  %2784 = vmatmul.f32.gmra.mxu0 %v2745
  %v2785 = vpop.f32.mrf.mxu0
  %v2786 = vadd.f32 0.0, %v2785
  %2787 = vmatmul.f32.gmra.mxu0 %v2748
  %v2788 = vpop.f32.mrf.mxu0
  %v2789 = vadd.f32 0.0, %v2788
  %2790 = vmatmul.f32.gmra.mxu0 %v2751
  %v2791 = vpop.f32.mrf.mxu0
  %v2792 = vadd.f32 0.0, %v2791
  %2793 = vmatmul.f32.gmra.mxu0 %v2754
  %v2794 = vpop.f32.mrf.mxu0
  %v2795 = vadd.f32 0.0, %v2794
  %2796 = vdwg.mxu0
  %v2797 = vmul.f32 %v2774, %v2711
  %v2798 = vmul.f32 %v2777, %v2712
  %v2799 = vmul.f32 %v2780, %v2713
  %v2800 = vmul.f32 %v2783, %v2714
  %v2801 = vmul.f32 %v2786, %v2715
  %v2802 = vmul.f32 %v2789, %v2716
  %v2803 = vmul.f32 %v2792, %v2717
  %v2804 = vmul.f32 %v2795, %v2718
  %v2805 = vadd.f32 %v2542, %v2797
  %v2806 = vadd.f32 %v2543, %v2798
  %v2807 = vadd.f32 %v2544, %v2799
  %v2808 = vadd.f32 %v2545, %v2800
  %v2809 = vadd.f32 %v2546, %v2801
  %v2810 = vadd.f32 %v2547, %v2802
  %v2811 = vadd.f32 %v2548, %v2803
  %v2812 = vadd.f32 %v2549, %v2804
  %v2813 = vld [vmem:[%s2 + $0x200] sm:$0xff]
  %v2814 = vld [vmem:[%s2 + $0x210] sm:$0xff]
  %v2815 = vld [vmem:[%s2 + $0x220] sm:$0xff]
  %v2816 = vld [vmem:[%s2 + $0x230] sm:$0xff]
  %v2818 = vsel %vm248, %v2805, 0
  %v2821 = vsel %vm248, %v2806, 0
  %v2824 = vsel %vm248, %v2807, 0
  %v2827 = vsel %vm248, %v2808, 0
  %v2830 = vsel %vm248, %v2809, 0
  %v2833 = vsel %vm248, %v2810, 0
  %v2836 = vsel %vm248, %v2811, 0
  %v2839 = vsel %vm248, %v2812, 0
  %2841 = vmatpush.msra.mxu0 0.0
  %2842 = vmatpush.msra.mxu0 0.0
  %2843 = vmatpush.msra.mxu0 0.0
  %2844 = vmatpush.msra.mxu0 0.0
  %2845 = vmatpush.msra.mxu0 0.0
  %2846 = vmatpush.msra.mxu0 0.0
  %2847 = vmatpush.msra.mxu0 0.0
  %2848 = vmatpush.msra.mxu0 0.0
  %2849 = vmatpush.msra.mxu0 0.0
  %2850 = vmatpush.msra.mxu0 0.0
  %2851 = vmatpush.msra.mxu0 0.0
  %2852 = vmatpush.msra.mxu0 0.0
  %2853 = vmatpush.msra.mxu0 %v2816
  %2854 = vmatpush.msra.mxu0 %v2815
  %2855 = vmatpush.msra.mxu0 %v2814
  %2856 = vmatpush.msra.mxu0 %v2813
  %2857 = vmatmul.f32.gmra.mxu0 %v2818
  %v2858 = vpop.f32.mrf.mxu0
  %v2859 = vadd.f32 0.0, %v2858
  %2860 = vmatmul.f32.gmra.mxu0 %v2821
  %v2861 = vpop.f32.mrf.mxu0
  %v2862 = vadd.f32 0.0, %v2861
  %2863 = vmatmul.f32.gmra.mxu0 %v2824
  %v2864 = vpop.f32.mrf.mxu0
  %v2865 = vadd.f32 0.0, %v2864
  %2866 = vmatmul.f32.gmra.mxu0 %v2827
  %v2867 = vpop.f32.mrf.mxu0
  %v2868 = vadd.f32 0.0, %v2867
  %2869 = vmatmul.f32.gmra.mxu0 %v2830
  %v2870 = vpop.f32.mrf.mxu0
  %v2871 = vadd.f32 0.0, %v2870
  %2872 = vmatmul.f32.gmra.mxu0 %v2833
  %v2873 = vpop.f32.mrf.mxu0
  %v2874 = vadd.f32 0.0, %v2873
  %2875 = vmatmul.f32.gmra.mxu0 %v2836
  %v2876 = vpop.f32.mrf.mxu0
  %v2877 = vadd.f32 0.0, %v2876
  %2878 = vmatmul.f32.gmra.mxu0 %v2839
  %v2879 = vpop.f32.mrf.mxu0
  %v2880 = vadd.f32 0.0, %v2879
  %2881 = vdwg.mxu0
  %v2882 = vadd.f32 %v1992, %v2859
  %v2883 = vadd.f32 %v1993, %v2862
  %v2884 = vadd.f32 %v1994, %v2865
  %v2885 = vadd.f32 %v1995, %v2868
  %v2886 = vadd.f32 %v1996, %v2871
  %v2887 = vadd.f32 %v1997, %v2874
  %v2888 = vadd.f32 %v1998, %v2877
  %v2889 = vadd.f32 %v1999, %v2880
  %v2890 = vld [vmem:[%s2 + $0x3d0] ss:$0 sm:$0xff]
  %v2891 = vadd.f32 %v2882, %v2890
  %v2892 = vadd.f32 %v2883, %v2890
  %v2893 = vadd.f32 %v2884, %v2890
  %v2894 = vadd.f32 %v2885, %v2890
  %v2895 = vadd.f32 %v2886, %v2890
  %v2896 = vadd.f32 %v2887, %v2890
  %v2897 = vadd.f32 %v2888, %v2890
  %v2898 = vadd.f32 %v2889, %v2890
  %v2899 = vsel %vm248, %v2891, 0.0
  %2900 = vadd.xlane.f32.xlu0 %v2899
  %v2901 = vpop.xlane.xlu0 %2900
  %v2902 = vsel %vm248, %v2892, 0.0
  %2903 = vadd.xlane.f32.xlu0 %v2902
  %v2904 = vpop.xlane.xlu0 %2903
  %v2905 = vsel %vm248, %v2893, 0.0
  %2906 = vadd.xlane.f32.xlu0 %v2905
  %v2907 = vpop.xlane.xlu0 %2906
  %v2908 = vsel %vm248, %v2894, 0.0
  %2909 = vadd.xlane.f32.xlu0 %v2908
  %v2910 = vpop.xlane.xlu0 %2909
  %v2911 = vsel %vm248, %v2895, 0.0
  %2912 = vadd.xlane.f32.xlu0 %v2911
  %v2913 = vpop.xlane.xlu0 %2912
  %v2914 = vsel %vm248, %v2896, 0.0
  %2915 = vadd.xlane.f32.xlu0 %v2914
  %v2916 = vpop.xlane.xlu0 %2915
  %v2917 = vsel %vm248, %v2897, 0.0
  %2918 = vadd.xlane.f32.xlu0 %v2917
  %v2919 = vpop.xlane.xlu0 %2918
  %v2920 = vsel %vm248, %v2898, 0.0
  %2921 = vadd.xlane.f32.xlu0 %v2920
  %v2922 = vpop.xlane.xlu0 %2921
  %v2923 = vmul.f32 %v2901, %v942
  %v2924 = vmul.f32 %v2904, %v942
  %v2925 = vmul.f32 %v2907, %v942
  %v2926 = vmul.f32 %v2910, %v942
  %v2927 = vmul.f32 %v2913, %v942
  %v2928 = vmul.f32 %v2916, %v942
  %v2929 = vmul.f32 %v2919, %v942
  %v2930 = vmul.f32 %v2922, %v942
  %v2931 = vsub.f32 %v2891, %v2923
  %v2932 = vsub.f32 %v2892, %v2924
  %v2933 = vsub.f32 %v2893, %v2925
  %v2934 = vsub.f32 %v2894, %v2926
  %v2935 = vsub.f32 %v2895, %v2927
  %v2936 = vsub.f32 %v2896, %v2928
  %v2937 = vsub.f32 %v2897, %v2929
  %v2938 = vsub.f32 %v2898, %v2930
  %v2939 = vmul.f32 %v2931, %v2931
  %v2940 = vmul.f32 %v2932, %v2932
  %v2941 = vmul.f32 %v2933, %v2933
  %v2942 = vmul.f32 %v2934, %v2934
  %v2943 = vmul.f32 %v2935, %v2935
  %v2944 = vmul.f32 %v2936, %v2936
  %v2945 = vmul.f32 %v2937, %v2937
  %v2946 = vmul.f32 %v2938, %v2938
  %v2947 = vsel %vm248, %v2939, 0.0
  %2948 = vadd.xlane.f32.xlu0 %v2947
  %v2949 = vpop.xlane.xlu0 %2948
  %v2950 = vsel %vm248, %v2940, 0.0
  %2951 = vadd.xlane.f32.xlu0 %v2950
  %v2952 = vpop.xlane.xlu0 %2951
  %v2953 = vsel %vm248, %v2941, 0.0
  %2954 = vadd.xlane.f32.xlu0 %v2953
  %v2955 = vpop.xlane.xlu0 %2954
  %v2956 = vsel %vm248, %v2942, 0.0
  %2957 = vadd.xlane.f32.xlu0 %v2956
  %v2958 = vpop.xlane.xlu0 %2957
  %v2959 = vsel %vm248, %v2943, 0.0
  %2960 = vadd.xlane.f32.xlu0 %v2959
  %v2961 = vpop.xlane.xlu0 %2960
  %v2962 = vsel %vm248, %v2944, 0.0
  %2963 = vadd.xlane.f32.xlu0 %v2962
  %v2964 = vpop.xlane.xlu0 %2963
  %v2965 = vsel %vm248, %v2945, 0.0
  %2966 = vadd.xlane.f32.xlu0 %v2965
  %v2967 = vpop.xlane.xlu0 %2966
  %v2968 = vsel %vm248, %v2946, 0.0
  %2969 = vadd.xlane.f32.xlu0 %v2968
  %v2970 = vpop.xlane.xlu0 %2969
  %v2971 = vmul.f32 %v2949, %v942
  %v2972 = vmul.f32 %v2952, %v942
  %v2973 = vmul.f32 %v2955, %v942
  %v2974 = vmul.f32 %v2958, %v942
  %v2975 = vmul.f32 %v2961, %v942
  %v2976 = vmul.f32 %v2964, %v942
  %v2977 = vmul.f32 %v2967, %v942
  %v2978 = vmul.f32 %v2970, %v942
  %v2979 = vadd.f32 %v2971, 1e-06
  %v2980 = vadd.f32 %v2972, 1e-06
  %v2981 = vadd.f32 %v2973, 1e-06
  %v2982 = vadd.f32 %v2974, 1e-06
  %v2983 = vadd.f32 %v2975, 1e-06
  %v2984 = vadd.f32 %v2976, 1e-06
  %v2985 = vadd.f32 %v2977, 1e-06
  %v2986 = vadd.f32 %v2978, 1e-06
  %v2987 = vrsqrt.pop %v2979
  %v2988 = vmul.f32 %v2987, %v2979
  %v2989 = vmul.f32 %v2988, %v2987
  %v2990 = vmul.f32 0.5, %v2989
  %v2991 = vsub.f32 1.5, %v2990
  %v2992 = vmul.f32 %v2987, %v2991
  %vm2993 = vweird.f32 %v2979
  %vm2994 = vweird.f32 %v2987
  %vm2995 = vmor %vm2993, %vm2994
  %v2996 = vsel %vm2995, %v2987, %v2992
  %v2997 = vrsqrt.pop %v2980
  %v2998 = vmul.f32 %v2997, %v2980
  %v2999 = vmul.f32 %v2998, %v2997
  %v3000 = vmul.f32 0.5, %v2999
  %v3001 = vsub.f32 1.5, %v3000
  %v3002 = vmul.f32 %v2997, %v3001
  %vm3003 = vweird.f32 %v2980
  %vm3004 = vweird.f32 %v2997
  %vm3005 = vmor %vm3003, %vm3004
  %v3006 = vsel %vm3005, %v2997, %v3002
  %v3007 = vrsqrt.pop %v2981
  %v3008 = vmul.f32 %v3007, %v2981
  %v3009 = vmul.f32 %v3008, %v3007
  %v3010 = vmul.f32 0.5, %v3009
  %v3011 = vsub.f32 1.5, %v3010
  %v3012 = vmul.f32 %v3007, %v3011
  %vm3013 = vweird.f32 %v2981
  %vm3014 = vweird.f32 %v3007
  %vm3015 = vmor %vm3013, %vm3014
  %v3016 = vsel %vm3015, %v3007, %v3012
  %v3017 = vrsqrt.pop %v2982
  %v3018 = vmul.f32 %v3017, %v2982
  %v3019 = vmul.f32 %v3018, %v3017
  %v3020 = vmul.f32 0.5, %v3019
  %v3021 = vsub.f32 1.5, %v3020
  %v3022 = vmul.f32 %v3017, %v3021
  %vm3023 = vweird.f32 %v2982
  %vm3024 = vweird.f32 %v3017
  %vm3025 = vmor %vm3023, %vm3024
  %v3026 = vsel %vm3025, %v3017, %v3022
  %v3027 = vrsqrt.pop %v2983
  %v3028 = vmul.f32 %v3027, %v2983
  %v3029 = vmul.f32 %v3028, %v3027
  %v3030 = vmul.f32 0.5, %v3029
  %v3031 = vsub.f32 1.5, %v3030
  %v3032 = vmul.f32 %v3027, %v3031
  %vm3033 = vweird.f32 %v2983
  %vm3034 = vweird.f32 %v3027
  %vm3035 = vmor %vm3033, %vm3034
  %v3036 = vsel %vm3035, %v3027, %v3032
  %v3037 = vrsqrt.pop %v2984
  %v3038 = vmul.f32 %v3037, %v2984
  %v3039 = vmul.f32 %v3038, %v3037
  %v3040 = vmul.f32 0.5, %v3039
  %v3041 = vsub.f32 1.5, %v3040
  %v3042 = vmul.f32 %v3037, %v3041
  %vm3043 = vweird.f32 %v2984
  %vm3044 = vweird.f32 %v3037
  %vm3045 = vmor %vm3043, %vm3044
  %v3046 = vsel %vm3045, %v3037, %v3042
  %v3047 = vrsqrt.pop %v2985
  %v3048 = vmul.f32 %v3047, %v2985
  %v3049 = vmul.f32 %v3048, %v3047
  %v3050 = vmul.f32 0.5, %v3049
  %v3051 = vsub.f32 1.5, %v3050
  %v3052 = vmul.f32 %v3047, %v3051
  %vm3053 = vweird.f32 %v2985
  %vm3054 = vweird.f32 %v3047
  %vm3055 = vmor %vm3053, %vm3054
  %v3056 = vsel %vm3055, %v3047, %v3052
  %v3057 = vrsqrt.pop %v2986
  %v3058 = vmul.f32 %v3057, %v2986
  %v3059 = vmul.f32 %v3058, %v3057
  %v3060 = vmul.f32 0.5, %v3059
  %v3061 = vsub.f32 1.5, %v3060
  %v3062 = vmul.f32 %v3057, %v3061
  %vm3063 = vweird.f32 %v2986
  %vm3064 = vweird.f32 %v3057
  %vm3065 = vmor %vm3063, %vm3064
  %v3066 = vsel %vm3065, %v3057, %v3062
  %v3067 = vmul.f32 %v2931, %v2996
  %v3068 = vmul.f32 %v2932, %v3006
  %v3069 = vmul.f32 %v2933, %v3016
  %v3070 = vmul.f32 %v2934, %v3026
  %v3071 = vmul.f32 %v2935, %v3036
  %v3072 = vmul.f32 %v2936, %v3046
  %v3073 = vmul.f32 %v2937, %v3056
  %v3074 = vmul.f32 %v2938, %v3066
  %v3075 = vadd.f32 %v794, 1.0
  %v3076 = vadd.f32 %v797, 1.0
  %v3077 = vadd.f32 %v800, 1.0
  %v3078 = vadd.f32 %v803, 1.0
  %v3079 = vadd.f32 %v806, 1.0
  %v3080 = vadd.f32 %v809, 1.0
  %v3081 = vadd.f32 %v812, 1.0
  %v3082 = vadd.f32 %v815, 1.0
  %v3083 = vmul.f32 %v3067, %v3075
  %v3084 = vmul.f32 %v3068, %v3076
  %v3085 = vmul.f32 %v3069, %v3077
  %v3086 = vmul.f32 %v3070, %v3078
  %v3087 = vmul.f32 %v3071, %v3079
  %v3088 = vmul.f32 %v3072, %v3080
  %v3089 = vmul.f32 %v3073, %v3081
  %v3090 = vmul.f32 %v3074, %v3082
  %3099 = vrot.lane.b32.xlu0 %v753, 32
  %v3100 = vpop.permute.xlu0 %3099
  %3101 = vrot.lane.b32.xlu0 %v756, 32
  %v3102 = vpop.permute.xlu0 %3101
  %3103 = vrot.lane.b32.xlu0 %v759, 32
  %v3104 = vpop.permute.xlu0 %3103
  %3105 = vrot.lane.b32.xlu0 %v762, 32
  %v3106 = vpop.permute.xlu0 %3105
  %3107 = vrot.lane.b32.xlu0 %v765, 32
  %v3108 = vpop.permute.xlu0 %3107
  %3109 = vrot.lane.b32.xlu0 %v768, 32
  %v3110 = vpop.permute.xlu0 %3109
  %3111 = vrot.lane.b32.xlu0 %v771, 32
  %v3112 = vpop.permute.xlu0 %3111
  %3113 = vrot.lane.b32.xlu0 %v774, 32
  %v3114 = vpop.permute.xlu0 %3113
  %v3123 = vadd.f32 %v3083, %v3100
  %v3124 = vadd.f32 %v3084, %v3102
  %v3125 = vadd.f32 %v3085, %v3104
  %v3126 = vadd.f32 %v3086, %v3106
  %v3127 = vadd.f32 %v3087, %v3108
  %v3128 = vadd.f32 %v3088, %v3110
  %v3129 = vadd.f32 %v3089, %v3112
  %v3130 = vadd.f32 %v3090, %v3114
  %v3131 = vld [vmem:[%s2 + $0x240] sm:$0xff]
  %v3132 = vld [vmem:[%s2 + $0x250] sm:$0xff]
  %v3133 = vld [vmem:[%s2 + $0x260] sm:$0xff]
  %v3134 = vld [vmem:[%s2 + $0x270] sm:$0xff]
  %v3135 = vld [vmem:[%s2 + $0x3d1] ss:$0 sm:$0xff]
  %v3137 = vsel %vm248, %v3123, 0
  %v3140 = vsel %vm248, %v3124, 0
  %v3143 = vsel %vm248, %v3125, 0
  %v3146 = vsel %vm248, %v3126, 0
  %v3149 = vsel %vm248, %v3127, 0
  %v3152 = vsel %vm248, %v3128, 0
  %v3155 = vsel %vm248, %v3129, 0
  %v3158 = vsel %vm248, %v3130, 0
  %3160 = vmatpush.msra.mxu0 0.0
  %3161 = vmatpush.msra.mxu0 0.0
  %3162 = vmatpush.msra.mxu0 0.0
  %3163 = vmatpush.msra.mxu0 0.0
  %3164 = vmatpush.msra.mxu0 0.0
  %3165 = vmatpush.msra.mxu0 0.0
  %3166 = vmatpush.msra.mxu0 0.0
  %3167 = vmatpush.msra.mxu0 0.0
  %3168 = vmatpush.msra.mxu0 0.0
  %3169 = vmatpush.msra.mxu0 0.0
  %3170 = vmatpush.msra.mxu0 0.0
  %3171 = vmatpush.msra.mxu0 0.0
  %3172 = vmatpush.msra.mxu0 %v3134
  %3173 = vmatpush.msra.mxu0 %v3133
  %3174 = vmatpush.msra.mxu0 %v3132
  %3175 = vmatpush.msra.mxu0 %v3131
  %3176 = vmatmul.f32.gmra.mxu0 %v3137
  %v3177 = vpop.f32.mrf.mxu0
  %v3178 = vadd.f32 %v3135, %v3177
  %3179 = vmatmul.f32.gmra.mxu0 %v3140
  %v3180 = vpop.f32.mrf.mxu0
  %v3181 = vadd.f32 %v3135, %v3180
  %3182 = vmatmul.f32.gmra.mxu0 %v3143
  %v3183 = vpop.f32.mrf.mxu0
  %v3184 = vadd.f32 %v3135, %v3183
  %3185 = vmatmul.f32.gmra.mxu0 %v3146
  %v3186 = vpop.f32.mrf.mxu0
  %v3187 = vadd.f32 %v3135, %v3186
  %3188 = vmatmul.f32.gmra.mxu0 %v3149
  %v3189 = vpop.f32.mrf.mxu0
  %v3190 = vadd.f32 %v3135, %v3189
  %3191 = vmatmul.f32.gmra.mxu0 %v3152
  %v3192 = vpop.f32.mrf.mxu0
  %v3193 = vadd.f32 %v3135, %v3192
  %3194 = vmatmul.f32.gmra.mxu0 %v3155
  %v3195 = vpop.f32.mrf.mxu0
  %v3196 = vadd.f32 %v3135, %v3195
  %3197 = vmatmul.f32.gmra.mxu0 %v3158
  %v3198 = vpop.f32.mrf.mxu0
  %v3199 = vadd.f32 %v3135, %v3198
  %3200 = vdwg.mxu0
  %v3201 = vmul.f32 %v3178, %v3178
  %v3202 = vmul.f32 %v3181, %v3181
  %v3203 = vmul.f32 %v3184, %v3184
  %v3204 = vmul.f32 %v3187, %v3187
  %v3205 = vmul.f32 %v3190, %v3190
  %v3206 = vmul.f32 %v3193, %v3193
  %v3207 = vmul.f32 %v3196, %v3196
  %v3208 = vmul.f32 %v3199, %v3199
  %v3209 = vmul.f32 %v3178, %v3201
  %v3210 = vmul.f32 %v3181, %v3202
  %v3211 = vmul.f32 %v3184, %v3203
  %v3212 = vmul.f32 %v3187, %v3204
  %v3213 = vmul.f32 %v3190, %v3205
  %v3214 = vmul.f32 %v3193, %v3206
  %v3215 = vmul.f32 %v3196, %v3207
  %v3216 = vmul.f32 %v3199, %v3208
  %v3217 = vmul.f32 %v3209, 0.044715
  %v3218 = vmul.f32 %v3210, 0.044715
  %v3219 = vmul.f32 %v3211, 0.044715
  %v3220 = vmul.f32 %v3212, 0.044715
  %v3221 = vmul.f32 %v3213, 0.044715
  %v3222 = vmul.f32 %v3214, 0.044715
  %v3223 = vmul.f32 %v3215, 0.044715
  %v3224 = vmul.f32 %v3216, 0.044715
  %v3225 = vadd.f32 %v3178, %v3217
  %v3226 = vadd.f32 %v3181, %v3218
  %v3227 = vadd.f32 %v3184, %v3219
  %v3228 = vadd.f32 %v3187, %v3220
  %v3229 = vadd.f32 %v3190, %v3221
  %v3230 = vadd.f32 %v3193, %v3222
  %v3231 = vadd.f32 %v3196, %v3223
  %v3232 = vadd.f32 %v3199, %v3224
  %v3233 = vmul.f32 %v3225, 0.7978846
  %v3234 = vmul.f32 %v3226, 0.7978846
  %v3235 = vmul.f32 %v3227, 0.7978846
  %v3236 = vmul.f32 %v3228, 0.7978846
  %v3237 = vmul.f32 %v3229, 0.7978846
  %v3238 = vmul.f32 %v3230, 0.7978846
  %v3239 = vmul.f32 %v3231, 0.7978846
  %v3240 = vmul.f32 %v3232, 0.7978846
  %v3241 = vtanh.pop %v3233
  %v3242 = vtanh.pop %v3234
  %v3243 = vtanh.pop %v3235
  %v3244 = vtanh.pop %v3236
  %v3245 = vtanh.pop %v3237
  %v3246 = vtanh.pop %v3238
  %v3247 = vtanh.pop %v3239
  %v3248 = vtanh.pop %v3240
  %v3249 = vadd.f32 %v3241, 1.0
  %v3250 = vadd.f32 %v3242, 1.0
  %v3251 = vadd.f32 %v3243, 1.0
  %v3252 = vadd.f32 %v3244, 1.0
  %v3253 = vadd.f32 %v3245, 1.0
  %v3254 = vadd.f32 %v3246, 1.0
  %v3255 = vadd.f32 %v3247, 1.0
  %v3256 = vadd.f32 %v3248, 1.0
  %v3257 = vmul.f32 %v3249, 0.5
  %v3258 = vmul.f32 %v3250, 0.5
  %v3259 = vmul.f32 %v3251, 0.5
  %v3260 = vmul.f32 %v3252, 0.5
  %v3261 = vmul.f32 %v3253, 0.5
  %v3262 = vmul.f32 %v3254, 0.5
  %v3263 = vmul.f32 %v3255, 0.5
  %v3264 = vmul.f32 %v3256, 0.5
  %v3265 = vmul.f32 %v3178, %v3257
  %v3266 = vmul.f32 %v3181, %v3258
  %v3267 = vmul.f32 %v3184, %v3259
  %v3268 = vmul.f32 %v3187, %v3260
  %v3269 = vmul.f32 %v3190, %v3261
  %v3270 = vmul.f32 %v3193, %v3262
  %v3271 = vmul.f32 %v3196, %v3263
  %v3272 = vmul.f32 %v3199, %v3264
  %v3273 = vld [vmem:[%s2 + $0x280] sm:$0xff]
  %v3274 = vld [vmem:[%s2 + $0x290] sm:$0xff]
  %v3275 = vld [vmem:[%s2 + $0x2a0] sm:$0xff]
  %v3276 = vld [vmem:[%s2 + $0x2b0] sm:$0xff]
  %v3277 = vld [vmem:[%s2 + $0x2c0] sm:$0xff]
  %v3278 = vld [vmem:[%s2 + $0x2d0] sm:$0xff]
  %v3279 = vld [vmem:[%s2 + $0x2e0] sm:$0xff]
  %v3280 = vld [vmem:[%s2 + $0x2f0] sm:$0xff]
  %v3281 = vld [vmem:[%s2 + $0x300] sm:$0xff]
  %v3282 = vld [vmem:[%s2 + $0x310] sm:$0xff]
  %v3283 = vld [vmem:[%s2 + $0x320] sm:$0xff]
  %v3284 = vld [vmem:[%s2 + $0x330] sm:$0xff]
  %v3285 = vld [vmem:[%s2 + $0x340] sm:$0xff]
  %v3286 = vld [vmem:[%s2 + $0x350] sm:$0xff]
  %v3287 = vld [vmem:[%s2 + $0x360] sm:$0xff]
  %v3288 = vld [vmem:[%s2 + $0x370] sm:$0xff]
  %v3289 = vld [vmem:[%s2 + $0x3d2] ss:$0 sm:$0xff]
  %3290 = vmatpush.msra.mxu0 %v3288
  %3291 = vmatpush.msra.mxu0 %v3287
  %3292 = vmatpush.msra.mxu0 %v3286
  %3293 = vmatpush.msra.mxu0 %v3285
  %3294 = vmatpush.msra.mxu0 %v3284
  %3295 = vmatpush.msra.mxu0 %v3283
  %3296 = vmatpush.msra.mxu0 %v3282
  %3297 = vmatpush.msra.mxu0 %v3281
  %3298 = vmatpush.msra.mxu0 %v3280
  %3299 = vmatpush.msra.mxu0 %v3279
  %3300 = vmatpush.msra.mxu0 %v3278
  %3301 = vmatpush.msra.mxu0 %v3277
  %3302 = vmatpush.msra.mxu0 %v3276
  %3303 = vmatpush.msra.mxu0 %v3275
  %3304 = vmatpush.msra.mxu0 %v3274
  %3305 = vmatpush.msra.mxu0 %v3273
  %3306 = vmatmul.f32.gmra.mxu0 %v3265
  %v3307 = vpop.f32.mrf.mxu0
  %v3308 = vadd.f32 %v3289, %v3307
  %3309 = vmatmul.f32.gmra.mxu0 %v3266
  %v3310 = vpop.f32.mrf.mxu0
  %v3311 = vadd.f32 %v3289, %v3310
  %3312 = vmatmul.f32.gmra.mxu0 %v3267
  %v3313 = vpop.f32.mrf.mxu0
  %v3314 = vadd.f32 %v3289, %v3313
  %3315 = vmatmul.f32.gmra.mxu0 %v3268
  %v3316 = vpop.f32.mrf.mxu0
  %v3317 = vadd.f32 %v3289, %v3316
  %3318 = vmatmul.f32.gmra.mxu0 %v3269
  %v3319 = vpop.f32.mrf.mxu0
  %v3320 = vadd.f32 %v3289, %v3319
  %3321 = vmatmul.f32.gmra.mxu0 %v3270
  %v3322 = vpop.f32.mrf.mxu0
  %v3323 = vadd.f32 %v3289, %v3322
  %3324 = vmatmul.f32.gmra.mxu0 %v3271
  %v3325 = vpop.f32.mrf.mxu0
  %v3326 = vadd.f32 %v3289, %v3325
  %3327 = vmatmul.f32.gmra.mxu0 %v3272
  %v3328 = vpop.f32.mrf.mxu0
  %v3329 = vadd.f32 %v3289, %v3328
  %3330 = vdwg.mxu0
  %3339 = vrot.lane.b32.xlu0 %v3308, 32
  %v3340 = vpop.permute.xlu0 %3339
  %3341 = vrot.lane.b32.xlu0 %v3311, 32
  %v3342 = vpop.permute.xlu0 %3341
  %3343 = vrot.lane.b32.xlu0 %v3314, 32
  %v3344 = vpop.permute.xlu0 %3343
  %3345 = vrot.lane.b32.xlu0 %v3317, 32
  %v3346 = vpop.permute.xlu0 %3345
  %3347 = vrot.lane.b32.xlu0 %v3320, 32
  %v3348 = vpop.permute.xlu0 %3347
  %3349 = vrot.lane.b32.xlu0 %v3323, 32
  %v3350 = vpop.permute.xlu0 %3349
  %3351 = vrot.lane.b32.xlu0 %v3326, 32
  %v3352 = vpop.permute.xlu0 %3351
  %3353 = vrot.lane.b32.xlu0 %v3329, 32
  %v3354 = vpop.permute.xlu0 %3353
  %v3363 = vmul.f32 %v794, %v3340
  %v3364 = vmul.f32 %v797, %v3342
  %v3365 = vmul.f32 %v800, %v3344
  %v3366 = vmul.f32 %v803, %v3346
  %v3367 = vmul.f32 %v806, %v3348
  %v3368 = vmul.f32 %v809, %v3350
  %v3369 = vmul.f32 %v812, %v3352
  %v3370 = vmul.f32 %v815, %v3354
  %3379 = vrot.lane.b32.xlu0 %v3363, 96
  %v3380 = vpop.permute.xlu0 %3379
  %3381 = vrot.lane.b32.xlu0 %v3364, 96
  %v3382 = vpop.permute.xlu0 %3381
  %3383 = vrot.lane.b32.xlu0 %v3365, 96
  %v3384 = vpop.permute.xlu0 %3383
  %3385 = vrot.lane.b32.xlu0 %v3366, 96
  %v3386 = vpop.permute.xlu0 %3385
  %3387 = vrot.lane.b32.xlu0 %v3367, 96
  %v3388 = vpop.permute.xlu0 %3387
  %3389 = vrot.lane.b32.xlu0 %v3368, 96
  %v3390 = vpop.permute.xlu0 %3389
  %3391 = vrot.lane.b32.xlu0 %v3369, 96
  %v3392 = vpop.permute.xlu0 %3391
  %3393 = vrot.lane.b32.xlu0 %v3370, 96
  %v3394 = vpop.permute.xlu0 %3393
  %v3403 = vadd.f32 %v2891, %v3380
  %v3404 = vadd.f32 %v2892, %v3382
  %v3405 = vadd.f32 %v2893, %v3384
  %v3406 = vadd.f32 %v2894, %v3386
  %v3407 = vadd.f32 %v2895, %v3388
  %v3408 = vadd.f32 %v2896, %v3390
  %v3409 = vadd.f32 %v2897, %v3392
  %v3410 = vadd.f32 %v2898, %v3394
  %v3411 = vsel %vm248, %v3403, 0.0
  %3412 = vadd.xlane.f32.xlu0 %v3411
  %v3413 = vpop.xlane.xlu0 %3412
  %v3414 = vsel %vm248, %v3404, 0.0
  %3415 = vadd.xlane.f32.xlu0 %v3414
  %v3416 = vpop.xlane.xlu0 %3415
  %v3417 = vsel %vm248, %v3405, 0.0
  %3418 = vadd.xlane.f32.xlu0 %v3417
  %v3419 = vpop.xlane.xlu0 %3418
  %v3420 = vsel %vm248, %v3406, 0.0
  %3421 = vadd.xlane.f32.xlu0 %v3420
  %v3422 = vpop.xlane.xlu0 %3421
  %v3423 = vsel %vm248, %v3407, 0.0
  %3424 = vadd.xlane.f32.xlu0 %v3423
  %v3425 = vpop.xlane.xlu0 %3424
  %v3426 = vsel %vm248, %v3408, 0.0
  %3427 = vadd.xlane.f32.xlu0 %v3426
  %v3428 = vpop.xlane.xlu0 %3427
  %v3429 = vsel %vm248, %v3409, 0.0
  %3430 = vadd.xlane.f32.xlu0 %v3429
  %v3431 = vpop.xlane.xlu0 %3430
  %v3432 = vsel %vm248, %v3410, 0.0
  %3433 = vadd.xlane.f32.xlu0 %v3432
  %v3434 = vpop.xlane.xlu0 %3433
  %v3435 = vmul.f32 %v3413, %v942
  %v3436 = vmul.f32 %v3416, %v942
  %v3437 = vmul.f32 %v3419, %v942
  %v3438 = vmul.f32 %v3422, %v942
  %v3439 = vmul.f32 %v3425, %v942
  %v3440 = vmul.f32 %v3428, %v942
  %v3441 = vmul.f32 %v3431, %v942
  %v3442 = vmul.f32 %v3434, %v942
  %v3443 = vsub.f32 %v3403, %v3435
  %v3444 = vsub.f32 %v3404, %v3436
  %v3445 = vsub.f32 %v3405, %v3437
  %v3446 = vsub.f32 %v3406, %v3438
  %v3447 = vsub.f32 %v3407, %v3439
  %v3448 = vsub.f32 %v3408, %v3440
  %v3449 = vsub.f32 %v3409, %v3441
  %v3450 = vsub.f32 %v3410, %v3442
  %v3451 = vmul.f32 %v3443, %v3443
  %v3452 = vmul.f32 %v3444, %v3444
  %v3453 = vmul.f32 %v3445, %v3445
  %v3454 = vmul.f32 %v3446, %v3446
  %v3455 = vmul.f32 %v3447, %v3447
  %v3456 = vmul.f32 %v3448, %v3448
  %v3457 = vmul.f32 %v3449, %v3449
  %v3458 = vmul.f32 %v3450, %v3450
  %v3459 = vsel %vm248, %v3451, 0.0
  %3460 = vadd.xlane.f32.xlu0 %v3459
  %v3461 = vpop.xlane.xlu0 %3460
  %v3462 = vsel %vm248, %v3452, 0.0
  %3463 = vadd.xlane.f32.xlu0 %v3462
  %v3464 = vpop.xlane.xlu0 %3463
  %v3465 = vsel %vm248, %v3453, 0.0
  %3466 = vadd.xlane.f32.xlu0 %v3465
  %v3467 = vpop.xlane.xlu0 %3466
  %v3468 = vsel %vm248, %v3454, 0.0
  %3469 = vadd.xlane.f32.xlu0 %v3468
  %v3470 = vpop.xlane.xlu0 %3469
  %v3471 = vsel %vm248, %v3455, 0.0
  %3472 = vadd.xlane.f32.xlu0 %v3471
  %v3473 = vpop.xlane.xlu0 %3472
  %v3474 = vsel %vm248, %v3456, 0.0
  %3475 = vadd.xlane.f32.xlu0 %v3474
  %v3476 = vpop.xlane.xlu0 %3475
  %v3477 = vsel %vm248, %v3457, 0.0
  %3478 = vadd.xlane.f32.xlu0 %v3477
  %v3479 = vpop.xlane.xlu0 %3478
  %v3480 = vsel %vm248, %v3458, 0.0
  %3481 = vadd.xlane.f32.xlu0 %v3480
  %v3482 = vpop.xlane.xlu0 %3481
  %v3483 = vmul.f32 %v3461, %v942
  %v3484 = vmul.f32 %v3464, %v942
  %v3485 = vmul.f32 %v3467, %v942
  %v3486 = vmul.f32 %v3470, %v942
  %v3487 = vmul.f32 %v3473, %v942
  %v3488 = vmul.f32 %v3476, %v942
  %v3489 = vmul.f32 %v3479, %v942
  %v3490 = vmul.f32 %v3482, %v942
  %v3491 = vadd.f32 %v3483, 1e-06
  %v3492 = vadd.f32 %v3484, 1e-06
  %v3493 = vadd.f32 %v3485, 1e-06
  %v3494 = vadd.f32 %v3486, 1e-06
  %v3495 = vadd.f32 %v3487, 1e-06
  %v3496 = vadd.f32 %v3488, 1e-06
  %v3497 = vadd.f32 %v3489, 1e-06
  %v3498 = vadd.f32 %v3490, 1e-06
  %v3499 = vrsqrt.pop %v3491
  %v3500 = vmul.f32 %v3499, %v3491
  %v3501 = vmul.f32 %v3500, %v3499
  %v3502 = vmul.f32 0.5, %v3501
  %v3503 = vsub.f32 1.5, %v3502
  %v3504 = vmul.f32 %v3499, %v3503
  %vm3505 = vweird.f32 %v3491
  %vm3506 = vweird.f32 %v3499
  %vm3507 = vmor %vm3505, %vm3506
  %v3508 = vsel %vm3507, %v3499, %v3504
  %v3509 = vrsqrt.pop %v3492
  %v3510 = vmul.f32 %v3509, %v3492
  %v3511 = vmul.f32 %v3510, %v3509
  %v3512 = vmul.f32 0.5, %v3511
  %v3513 = vsub.f32 1.5, %v3512
  %v3514 = vmul.f32 %v3509, %v3513
  %vm3515 = vweird.f32 %v3492
  %vm3516 = vweird.f32 %v3509
  %vm3517 = vmor %vm3515, %vm3516
  %v3518 = vsel %vm3517, %v3509, %v3514
  %v3519 = vrsqrt.pop %v3493
  %v3520 = vmul.f32 %v3519, %v3493
  %v3521 = vmul.f32 %v3520, %v3519
  %v3522 = vmul.f32 0.5, %v3521
  %v3523 = vsub.f32 1.5, %v3522
  %v3524 = vmul.f32 %v3519, %v3523
  %vm3525 = vweird.f32 %v3493
  %vm3526 = vweird.f32 %v3519
  %vm3527 = vmor %vm3525, %vm3526
  %v3528 = vsel %vm3527, %v3519, %v3524
  %v3529 = vrsqrt.pop %v3494
  %v3530 = vmul.f32 %v3529, %v3494
  %v3531 = vmul.f32 %v3530, %v3529
  %v3532 = vmul.f32 0.5, %v3531
  %v3533 = vsub.f32 1.5, %v3532
  %v3534 = vmul.f32 %v3529, %v3533
  %vm3535 = vweird.f32 %v3494
  %vm3536 = vweird.f32 %v3529
  %vm3537 = vmor %vm3535, %vm3536
  %v3538 = vsel %vm3537, %v3529, %v3534
  %v3539 = vrsqrt.pop %v3495
  %v3540 = vmul.f32 %v3539, %v3495
  %v3541 = vmul.f32 %v3540, %v3539
  %v3542 = vmul.f32 0.5, %v3541
  %v3543 = vsub.f32 1.5, %v3542
  %v3544 = vmul.f32 %v3539, %v3543
  %vm3545 = vweird.f32 %v3495
  %vm3546 = vweird.f32 %v3539
  %vm3547 = vmor %vm3545, %vm3546
  %v3548 = vsel %vm3547, %v3539, %v3544
  %v3549 = vrsqrt.pop %v3496
  %v3550 = vmul.f32 %v3549, %v3496
  %v3551 = vmul.f32 %v3550, %v3549
  %v3552 = vmul.f32 0.5, %v3551
  %v3553 = vsub.f32 1.5, %v3552
  %v3554 = vmul.f32 %v3549, %v3553
  %vm3555 = vweird.f32 %v3496
  %vm3556 = vweird.f32 %v3549
  %vm3557 = vmor %vm3555, %vm3556
  %v3558 = vsel %vm3557, %v3549, %v3554
  %v3559 = vrsqrt.pop %v3497
  %v3560 = vmul.f32 %v3559, %v3497
  %v3561 = vmul.f32 %v3560, %v3559
  %v3562 = vmul.f32 0.5, %v3561
  %v3563 = vsub.f32 1.5, %v3562
  %v3564 = vmul.f32 %v3559, %v3563
  %vm3565 = vweird.f32 %v3497
  %vm3566 = vweird.f32 %v3559
  %vm3567 = vmor %vm3565, %vm3566
  %v3568 = vsel %vm3567, %v3559, %v3564
  %v3569 = vrsqrt.pop %v3498
  %v3570 = vmul.f32 %v3569, %v3498
  %v3571 = vmul.f32 %v3570, %v3569
  %v3572 = vmul.f32 0.5, %v3571
  %v3573 = vsub.f32 1.5, %v3572
  %v3574 = vmul.f32 %v3569, %v3573
  %vm3575 = vweird.f32 %v3498
  %vm3576 = vweird.f32 %v3569
  %vm3577 = vmor %vm3575, %vm3576
  %v3578 = vsel %vm3577, %v3569, %v3574
  %v3579 = vmul.f32 %v3443, %v3508
  %v3580 = vmul.f32 %v3444, %v3518
  %v3581 = vmul.f32 %v3445, %v3528
  %v3582 = vmul.f32 %v3446, %v3538
  %v3583 = vmul.f32 %v3447, %v3548
  %v3584 = vmul.f32 %v3448, %v3558
  %v3585 = vmul.f32 %v3449, %v3568
  %v3586 = vmul.f32 %v3450, %v3578
  %v3587 = vld [vmem:[%s2 + $0x3d5] ss:$0 sm:$0xff]
  %v3588 = vadd.f32 %v3587, %v513
  %v3589 = vadd.f32 %v3587, %v516
  %v3590 = vadd.f32 %v3587, %v519
  %v3591 = vadd.f32 %v3587, %v522
  %v3592 = vadd.f32 %v3587, %v525
  %v3593 = vadd.f32 %v3587, %v528
  %v3594 = vadd.f32 %v3587, %v531
  %v3595 = vadd.f32 %v3587, %v534
  %v3596 = vadd.f32 %v3588, 1.0
  %v3597 = vadd.f32 %v3589, 1.0
  %v3598 = vadd.f32 %v3590, 1.0
  %v3599 = vadd.f32 %v3591, 1.0
  %v3600 = vadd.f32 %v3592, 1.0
  %v3601 = vadd.f32 %v3593, 1.0
  %v3602 = vadd.f32 %v3594, 1.0
  %v3603 = vadd.f32 %v3595, 1.0
  %v3604 = vmul.f32 %v3579, %v3596
  %v3605 = vmul.f32 %v3580, %v3597
  %v3606 = vmul.f32 %v3581, %v3598
  %v3607 = vmul.f32 %v3582, %v3599
  %v3608 = vmul.f32 %v3583, %v3600
  %v3609 = vmul.f32 %v3584, %v3601
  %v3610 = vmul.f32 %v3585, %v3602
  %v3611 = vmul.f32 %v3586, %v3603
  %v3612 = vld [vmem:[%s2 + $0x3d4] ss:$0 sm:$0xff]
  %v3613 = vadd.f32 %v3612, %v513
  %v3614 = vadd.f32 %v3612, %v516
  %v3615 = vadd.f32 %v3612, %v519
  %v3616 = vadd.f32 %v3612, %v522
  %v3617 = vadd.f32 %v3612, %v525
  %v3618 = vadd.f32 %v3612, %v528
  %v3619 = vadd.f32 %v3612, %v531
  %v3620 = vadd.f32 %v3612, %v534
  %v3621 = vadd.f32 %v3604, %v3613
  %v3622 = vadd.f32 %v3605, %v3614
  %v3623 = vadd.f32 %v3606, %v3615
  %v3624 = vadd.f32 %v3607, %v3616
  %v3625 = vadd.f32 %v3608, %v3617
  %v3626 = vadd.f32 %v3609, %v3618
  %v3627 = vadd.f32 %v3610, %v3619
  %v3628 = vadd.f32 %v3611, %v3620
  %v3629 = vld [vmem:[%s2 + $0x380] sm:$0xff]
  %v3630 = vld [vmem:[%s2 + $0x390] sm:$0xff]
  %v3631 = vld [vmem:[%s2 + $0x3a0] sm:$0xff]
  %v3632 = vld [vmem:[%s2 + $0x3b0] sm:$0xff]
  %v3633 = vld [vmem:[%s2 + $0x3d3] ss:$0 sm:$0xff]
  %v3635 = vsel %vm248, %v3621, 0
  %v3638 = vsel %vm248, %v3622, 0
  %v3641 = vsel %vm248, %v3623, 0
  %v3644 = vsel %vm248, %v3624, 0
  %v3647 = vsel %vm248, %v3625, 0
  %v3650 = vsel %vm248, %v3626, 0
  %v3653 = vsel %vm248, %v3627, 0
  %v3656 = vsel %vm248, %v3628, 0
  %3658 = vmatpush.msra.mxu0 0.0
  %3659 = vmatpush.msra.mxu0 0.0
  %3660 = vmatpush.msra.mxu0 0.0
  %3661 = vmatpush.msra.mxu0 0.0
  %3662 = vmatpush.msra.mxu0 0.0
  %3663 = vmatpush.msra.mxu0 0.0
  %3664 = vmatpush.msra.mxu0 0.0
  %3665 = vmatpush.msra.mxu0 0.0
  %3666 = vmatpush.msra.mxu0 0.0
  %3667 = vmatpush.msra.mxu0 0.0
  %3668 = vmatpush.msra.mxu0 0.0
  %3669 = vmatpush.msra.mxu0 0.0
  %3670 = vmatpush.msra.mxu0 %v3632
  %3671 = vmatpush.msra.mxu0 %v3631
  %3672 = vmatpush.msra.mxu0 %v3630
  %3673 = vmatpush.msra.mxu0 %v3629
  %3674 = vmatmul.f32.gmra.mxu0 %v3635
  %v3675 = vpop.f32.mrf.mxu0
  %v3676 = vadd.f32 %v3633, %v3675
  %3677 = vmatmul.f32.gmra.mxu0 %v3638
  %v3678 = vpop.f32.mrf.mxu0
  %v3679 = vadd.f32 %v3633, %v3678
  %3680 = vmatmul.f32.gmra.mxu0 %v3641
  %v3681 = vpop.f32.mrf.mxu0
  %v3682 = vadd.f32 %v3633, %v3681
  %3683 = vmatmul.f32.gmra.mxu0 %v3644
  %v3684 = vpop.f32.mrf.mxu0
  %v3685 = vadd.f32 %v3633, %v3684
  %3686 = vmatmul.f32.gmra.mxu0 %v3647
  %v3687 = vpop.f32.mrf.mxu0
  %v3688 = vadd.f32 %v3633, %v3687
  %3689 = vmatmul.f32.gmra.mxu0 %v3650
  %v3690 = vpop.f32.mrf.mxu0
  %v3691 = vadd.f32 %v3633, %v3690
  %3692 = vmatmul.f32.gmra.mxu0 %v3653
  %v3693 = vpop.f32.mrf.mxu0
  %v3694 = vadd.f32 %v3633, %v3693
  %3695 = vmatmul.f32.gmra.mxu0 %v3656
  %v3696 = vpop.f32.mrf.mxu0
  %v3697 = vadd.f32 %v3633, %v3696
  %3698 = vdwg.mxu0
  %vm3699 = vcmask 31744
  %3700 = vst.msk [vmem:[%s3] sm:$0xff] %vm3699, %v3676
  %3701 = vst.msk [vmem:[%s3 + $0x8] sm:$0xff] %vm3699, %v3679
  %3702 = vst.msk [vmem:[%s3 + $0x10] sm:$0xff] %vm3699, %v3682
  %3703 = vst.msk [vmem:[%s3 + $0x18] sm:$0xff] %vm3699, %v3685
  %3704 = vst.msk [vmem:[%s3 + $0x20] sm:$0xff] %vm3699, %v3688
  %3705 = vst.msk [vmem:[%s3 + $0x28] sm:$0xff] %vm3699, %v3691
  %3706 = vst.msk [vmem:[%s3 + $0x30] sm:$0xff] %vm3699, %v3694
  %3707 = vst.msk [vmem:[%s3 + $0x38] sm:$0xff] %vm3699, %v3697
  // Predicated region
  $region14: #{ltxv_wrapper_forward.1} parent=0 // pred_check
    _
  $region15: #{ltxv_wrapper_forward.1} parent=0 // pred_check_branch
    %3709 = sbr.rel (0) target = $region17
  $region16: #{ltxv_wrapper_forward.1} parent=0 // pred_region
    _
  $region17: #{ltxv_wrapper_forward.1} parent=0 // pred_fallthru
    _
  // Predicated region
  $region18: #{ltxv_wrapper_forward.1} parent=0 // pred_check
    _
  $region19: #{ltxv_wrapper_forward.1} parent=0 // pred_check_branch
    %3711 = sbr.rel (0) target = $region21
  $region20: #{ltxv_wrapper_forward.1} parent=0 // pred_region
    _
  $region21: #{ltxv_wrapper_forward.1} parent=0 // pred_fallthru
    _

</llo_original>
